<compile_context>
chip_gen: v5e
topology: v5e:2x2
jax: 0.10.0
libtpu: 0.0.40
codegen_flags: <defaults>
</compile_context>

<pallas_src>
import functools

import jax
import jax.numpy as jnp
from jax.experimental import pallas as pl
from jax.experimental.pallas import tpu as pltpu


# ----------------------------------------------------------------------------
# Block-size helpers (lane axis = last dim, sublane axis = second-to-last).
# ----------------------------------------------------------------------------
def _lane_block(n, cap=2048):
    """Multiple of 128 dividing n; prefers >=2 tiles (v7x megacore) and caps the
    tile so production-size inputs stay inside the scoped VMEM limit."""
    if n % 256 == 0:
        b = n // 2
        while b > cap and b % 2 == 0 and (b // 2) % 128 == 0:
            b //= 2
        if b % 128 == 0:
            return b
    return n  # fall back: single full-width block (always legal)


def _sublane_block(n, cap=256):
    """Multiple of 8 dividing n, at most cap; else the full dim (always legal)."""
    if n % 8 != 0 or n <= cap:
        return n
    b = cap
    while n % b != 0:
        b -= 8
    return b


# ----------------------------------------------------------------------------
# Elementwise GELU kernel (exact, erf-based, matching torch.nn.GELU default).
# erf via Abramowitz & Stegun 7.1.26 (|err| <= 1.5e-7); the divide is pushed to
# the EUP slot with pl.reciprocal(approx=True), exp already runs on the EUP.
# ----------------------------------------------------------------------------
def _erf(x):
    p = 0.3275911
    a1, a2, a3, a4, a5 = (0.254829592, -0.284496736, 1.421413741,
                          -1.453152027, 1.061405429)
    sgn = jnp.where(x >= 0.0, 1.0, -1.0)
    ax = jnp.abs(x)
    t = pl.reciprocal(1.0 + p * ax, approx=True)
    poly = ((((a5 * t + a4) * t + a3) * t + a2) * t + a1) * t
    return sgn * (1.0 - poly * jnp.exp(-ax * ax))


def _gelu_kernel(x_ref, o_ref):
    x = x_ref[...]
    o_ref[...] = 0.5 * x * (1.0 + _erf(x * 0.7071067811865476))


def gelu_pallas(x):
    """Exact GELU over a (C, B, H, W) tensor; tiled parallel grid."""
    c, b, h, w = x.shape
    rows, cols = c * b, h * w
    x2d = x.reshape(rows, cols)
    br = _sublane_block(rows)
    bc = _lane_block(cols)
    out = pl.pallas_call(
        _gelu_kernel,
        out_shape=jax.ShapeDtypeStruct((rows, cols), x.dtype),
        grid=(rows // br, cols // bc),
        in_specs=[pl.BlockSpec((br, bc), lambda i, j: (i, j))],
        out_specs=pl.BlockSpec((br, bc), lambda i, j: (i, j)),
        compiler_params=pltpu.CompilerParams(
            dimension_semantics=("parallel", "parallel")),
    )(x2d)
    return out.reshape(c, b, h, w)


# ----------------------------------------------------------------------------
# Spectral (Fourier-mode) multiply kernel: complex einsum 'bixy,ioxy->boxy'
# as a statically-unrolled real/imag channel contraction on the VPU.
# Lane axis = Co * 2*modes1*modes2 (= 256 here) so every store is a full vst;
# low- and high-frequency mode blocks are handled in the same call.
# ----------------------------------------------------------------------------
def _specmul_kernel(xr_ref, xi_ref, wr_ref, wi_ref, or_ref, oi_ref):
    ci = xr_ref.shape[0]
    acc_r = jnp.zeros(or_ref.shape, jnp.float32)
    acc_i = jnp.zeros(oi_ref.shape, jnp.float32)
    for i in range(ci):                   # static unroll; Ci <= 8
        xr, xi = xr_ref[i], xi_ref[i]     # (B, Co*2*MM)
        wr, wi = wr_ref[i], wi_ref[i]     # (1, Co*2*MM) -> sublane-broadcast over B
        acc_r = acc_r + xr * wr - xi * wi
        acc_i = acc_i + xr * wi + xi * wr
    or_ref[...] = acc_r
    oi_ref[...] = acc_i


def spectral_conv2d(x, w1, w2, modes1, modes2):
    """SpectralConv2d.forward on a (Ci, B, H, W) input -> (Co, B, H, W) output."""
    ci, b, h, w = x.shape
    co = w1.shape[1]
    wf = w // 2 + 1
    mm = modes1 * modes2
    lanes = co * 2 * mm
    # TODO(synk): FFT has no Pallas TPU equivalent; rfft2/irfft2 stay in XLA.
    x_ft = jnp.fft.rfft2(x)                                    # (Ci, B, H, Wf) c64
    x_lo = x_ft[:, :, :modes1, :modes2].reshape(ci, b, mm)
    x_hi = x_ft[:, :, h - modes1:, :modes2].reshape(ci, b, mm)
    xcat = jnp.concatenate([x_lo, x_hi], axis=-1)              # (Ci, B, 2*mm)
    # Tile the modes across Co so the kernel's lane axis is Co*2*mm (lane-dense).
    xr = jnp.tile(jnp.real(xcat), (1, 1, co))                  # (Ci, B, Co*2*mm)
    xi = jnp.tile(jnp.imag(xcat), (1, 1, co))
    # Weights: low|high concatenated on the mode axis, flattened lane-major (o, m).
    wr = jnp.concatenate([w1[..., 0].reshape(ci, co, mm),
                          w2[..., 0].reshape(ci, co, mm)], axis=-1).reshape(ci, 1, lanes)
    wi = jnp.concatenate([w1[..., 1].reshape(ci, co, mm),
                          w2[..., 1].reshape(ci, co, mm)], axis=-1).reshape(ci, 1, lanes)
    out_r, out_i = pl.pallas_call(
        _specmul_kernel,
        out_shape=(jax.ShapeDtypeStruct((b, lanes), jnp.float32),
                   jax.ShapeDtypeStruct((b, lanes), jnp.float32)),
        in_specs=[pl.BlockSpec(memory_space=pltpu.MemorySpace.VMEM)] * 4,
        out_specs=(pl.BlockSpec(memory_space=pltpu.MemorySpace.VMEM),
                   pl.BlockSpec(memory_space=pltpu.MemorySpace.VMEM)),
    )(xr, xi, wr, wi)
    out_c = (out_r + 1j * out_i).reshape(b, co, 2, modes1, modes2)
    out_c = jnp.transpose(out_c, (1, 0, 2, 3, 4))              # (Co, B, 2, m1, m2)
    out_ft = jnp.zeros((co, b, h, wf), dtype=jnp.complex64)
    # Low/high windows don't overlap for H >= 2*modes1 (true here); if they ever
    # did, the overwrite order below matches PyTorch.
    out_ft = out_ft.at[:, :, :modes1, :modes2].set(out_c[:, :, 0])
    out_ft = out_ft.at[:, :, h - modes1:, :modes2].set(out_c[:, :, 1])
    return jnp.fft.irfft2(out_ft, s=(h, w))                    # (Co, B, H, W)


# ----------------------------------------------------------------------------
# Residual-stage kernel: one fused 1x1-conv matmul (channels on the MXU) plus
# the pre-biased spectral term.  Grid = parallel lane tiles; weights resident.
# ----------------------------------------------------------------------------
def _conv1x1_add_kernel(h_ref, w_ref, sb_ref, o_ref):
    o_ref[...] = (jnp.dot(w_ref[...], h_ref[...],
                          preferred_element_type=jnp.float32) + sb_ref[...])


def conv1x1_add(h_kn, w, spec_bias):
    """(Co, K) x (K, N) + spec_bias(Co, N), N = B*H*W on the lane axis."""
    k, n = h_kn.shape
    co = w.shape[0]
    bn = _lane_block(n)
    return pl.pallas_call(
        _conv1x1_add_kernel,
        out_shape=jax.ShapeDtypeStruct((co, n), jnp.float32),
        grid=(n // bn,),
        in_specs=[
            pl.BlockSpec((k, bn), lambda j: (0, j)),
            pl.BlockSpec((co, k), lambda j: (0, 0)),   # weights resident across tiles
            pl.BlockSpec((co, bn), lambda j: (0, j)),
        ],
        out_specs=pl.BlockSpec((co, bn), lambda j: (0, j)),
        compiler_params=pltpu.CompilerParams(dimension_semantics=("parallel",)),
    )(h_kn, w, spec_bias)


# ----------------------------------------------------------------------------
# FourierDownBlock forward (has_attn=False -> attn = Identity, norm=False ->
# norm1/norm2 = Identity).
# ----------------------------------------------------------------------------
@functools.partial(jax.jit, static_argnames=("modes1", "modes2"))
def fourier_down_block(x, p, modes1, modes2):
    b, ci, hh, ww = x.shape
    co = p["conv1_w"].shape[0]
    n = b * hh * ww
    # Internal layout (C, B, H, W): one transpose in, one transpose out.
    xT = jnp.transpose(x, (1, 0, 2, 3))                         # (Ci, B, H, W)

    # ---- stage 1: fourier1(h) + conv1(h), h = gelu(norm1(x)) ----
    h = gelu_pallas(xT)
    spec1 = spectral_conv2d(h, p["f1_w1"], p["f1_w2"], modes1, modes2)  # (Co,B,H,W)
    sb1 = spec1.reshape(co, n) + p["conv1_b"][:, None]          # fold conv1 bias
    out1 = conv1x1_add(h.reshape(ci, n), p["conv1_w"], sb1).reshape(co, b, hh, ww)

    # ---- stage 2: fourier2(h2) + conv2(h2) + shortcut(x), h2 = gelu(out1) ----
    h2 = gelu_pallas(out1)
    spec2 = spectral_conv2d(h2, p["f2_w1"], p["f2_w2"], modes1, modes2)
    sb2 = spec2.reshape(co, n) + (p["conv2_b"] + p["sc_b"])[:, None]
    stacked = jnp.concatenate([h2.reshape(co, n), xT.reshape(ci, n)], axis=0)
    w_cat = jnp.concatenate([p["conv2_w"], p["sc_w"]], axis=1)  # (Co, Co+Ci)
    out2 = conv1x1_add(stacked, w_cat, sb2).reshape(co, b, hh, ww)

    # self.attn = nn.Identity(); restore NCHW.
    return jnp.transpose(out2, (1, 0, 2, 3))


def init_params(key, cin, cout, m1, m2):
    ks = jax.random.split(key, 10)
    s1 = 1.0 / (cin * cout)
    s2 = 1.0 / (cout * cout)
    return {
        "f1_w1": s1 * jax.random.uniform(ks[0], (cin, cout, m1, m2, 2), jnp.float32),
        "f1_w2": s1 * jax.random.uniform(ks[1], (cin, cout, m1, m2, 2), jnp.float32),
        "conv1_w": 0.1 * jax.random.normal(ks[2], (cout, cin), jnp.float32),
        "conv1_b": 0.1 * jax.random.normal(ks[3], (cout,), jnp.float32),
        "f2_w1": s2 * jax.random.uniform(ks[4], (cout, cout, m1, m2, 2), jnp.float32),
        "f2_w2": s2 * jax.random.uniform(ks[5], (cout, cout, m1, m2, 2), jnp.float32),
        "conv2_w": 0.1 * jax.random.normal(ks[6], (cout, cout), jnp.float32),
        "conv2_b": 0.1 * jax.random.normal(ks[7], (cout,), jnp.float32),
        "sc_w": 0.1 * jax.random.normal(ks[8], (cout, cin), jnp.float32),
        "sc_b": 0.1 * jax.random.normal(ks[9], (cout,), jnp.float32),
    }


# Pure-JAX reference (mirrors the PyTorch forward) for a numerical sanity check.
def reference(x, p, modes1, modes2):
    hp = jax.lax.Precision.HIGHEST

    def gelu(v):
        return jax.nn.gelu(v, approximate=False)

    def spec(v, w1, w2, co):
        b, _, h, w = v.shape
        wf = w // 2 + 1
        vft = jnp.fft.rfft2(v)
        w1c = w1[..., 0] + 1j * w1[..., 1]
        w2c = w2[..., 0] + 1j * w2[..., 1]
        out = jnp.zeros((b, co, h, wf), jnp.complex64)
        out = out.at[:, :, :modes1, :modes2].set(
            jnp.einsum("bixy,ioxy->boxy", vft[:, :, :modes1, :modes2], w1c,
                       precision=hp))
        out = out.at[:, :, h - modes1:, :modes2].set(
            jnp.einsum("bixy,ioxy->boxy", vft[:, :, h - modes1:, :modes2], w2c,
                       precision=hp))
        return jnp.fft.irfft2(out, s=(h, w))

    def conv(v, w, bias):
        return jnp.einsum("oc,bchw->bohw", w, v, precision=hp) + bias[None, :, None, None]

    co = p["conv1_w"].shape[0]
    h = gelu(x)
    out1 = spec(h, p["f1_w1"], p["f1_w2"], co) + conv(h, p["conv1_w"], p["conv1_b"])
    h2 = gelu(out1)
    out2 = (spec(h2, p["f2_w1"], p["f2_w2"], co) + conv(h2, p["conv2_w"], p["conv2_b"])
            + conv(x, p["sc_w"], p["sc_b"]))
    return out2


if __name__ == "__main__":
    key = jax.random.PRNGKey(0)
    kx, kp = jax.random.split(key)
    B, Cin, Cout, H, W = 2, 4, 8, 16, 16
    modes1 = modes2 = 4

    x = jax.random.normal(kx, (B, Cin, H, W), jnp.float32)
    params = init_params(kp, Cin, Cout, modes1, modes2)

    out = fourier_down_block(x, params, modes1, modes2)
    out = jax.block_until_ready(out)
    assert out.shape == (B, Cout, H, W), out.shape

    ref = reference(x, params, modes1, modes2)
    max_err = float(jnp.max(jnp.abs(out - ref)))
    assert max_err < 1e-2, f"max abs error vs reference: {max_err}"

    print("KERNEL_OK")
</pallas_src>

<mosaic_0001>
module attributes {stable_mosaic.version = 11 : i64} {
  func.func @_gelu_kernel(%arg0: i32, %arg1: i32, %arg2: memref<8x128xf32, #tpu.memory_space<vmem>>, %arg3: memref<8x128xf32, #tpu.memory_space<vmem>>) attributes {dimension_semantics = [#tpu.dimension_semantics<parallel>, #tpu.dimension_semantics<parallel>], iteration_bounds = array<i64: 1, 2>, scalar_prefetch = 0 : i64, scratch_operands = 0 : i64, tpu.core_type = #tpu.core_type<tc>, window_params = [{transform_indices = @transform_0, window_bounds = array<i64: 8, 128>}, {transform_indices = @transform_1, window_bounds = array<i64: 8, 128>}]} {
    %c0 = arith.constant 0 : index
    %c0_0 = arith.constant 0 : index
    %0 = vector.load %arg2[%c0, %c0_0] : memref<8x128xf32, #tpu.memory_space<vmem>>, vector<8x128xf32>
    %cst = arith.constant 5.000000e-01 : f32
    %1 = vector.broadcast %cst : f32 to vector<8x128xf32>
    %2 = arith.mulf %1, %0 : vector<8x128xf32>
    %cst_1 = arith.constant 0.707106769 : f32
    %3 = vector.broadcast %cst_1 : f32 to vector<8x128xf32>
    %4 = arith.mulf %0, %3 : vector<8x128xf32>
    %cst_2 = arith.constant 0.000000e+00 : f32
    %5 = vector.broadcast %cst_2 : f32 to vector<8x128xf32>
    %6 = arith.cmpf oge, %4, %5 : vector<8x128xf32>
    %cst_3 = arith.constant 1.000000e+00 : f32
    %cst_4 = arith.constant -1.000000e+00 : f32
    %7 = vector.broadcast %cst_3 : f32 to vector<8x128xf32>
    %8 = vector.broadcast %cst_4 : f32 to vector<8x128xf32>
    %9 = arith.select %6, %7, %8 : vector<8x128xi1>, vector<8x128xf32>
    %10 = math.absf %4 : vector<8x128xf32>
    %cst_5 = arith.constant 0.327591091 : f32
    %11 = vector.broadcast %cst_5 : f32 to vector<8x128xf32>
    %12 = arith.mulf %11, %10 : vector<8x128xf32>
    %cst_6 = arith.constant 1.000000e+00 : f32
    %13 = vector.broadcast %cst_6 : f32 to vector<8x128xf32>
    %14 = arith.addf %13, %12 : vector<8x128xf32>
    %15 = tpu.reciprocal %14 {approx = true} : vector<8x128xf32> -> vector<8x128xf32>
    %cst_7 = arith.constant 1.06140542 : f32
    %16 = vector.broadcast %cst_7 : f32 to vector<8x128xf32>
    %17 = arith.mulf %16, %15 : vector<8x128xf32>
    %cst_8 = arith.constant -1.45315206 : f32
    %18 = vector.broadcast %cst_8 : f32 to vector<8x128xf32>
    %19 = arith.addf %17, %18 : vector<8x128xf32>
    %20 = arith.mulf %19, %15 : vector<8x128xf32>
    %cst_9 = arith.constant 1.42141378 : f32
    %21 = vector.broadcast %cst_9 : f32 to vector<8x128xf32>
    %22 = arith.addf %20, %21 : vector<8x128xf32>
    %23 = arith.mulf %22, %15 : vector<8x128xf32>
    %cst_10 = arith.constant -0.284496725 : f32
    %24 = vector.broadcast %cst_10 : f32 to vector<8x128xf32>
    %25 = arith.addf %23, %24 : vector<8x128xf32>
    %26 = arith.mulf %25, %15 : vector<8x128xf32>
    %cst_11 = arith.constant 0.254829586 : f32
    %27 = vector.broadcast %cst_11 : f32 to vector<8x128xf32>
    %28 = arith.addf %26, %27 : vector<8x128xf32>
    %29 = arith.mulf %28, %15 : vector<8x128xf32>
    %cst_12 = arith.constant 0.000000e+00 : f32
    %30 = vector.broadcast %cst_12 : f32 to vector<8x128xf32>
    %31 = arith.subf %30, %10 : vector<8x128xf32>
    %32 = arith.mulf %31, %10 : vector<8x128xf32>
    %33 = math.exp %32 : vector<8x128xf32>
    %34 = arith.mulf %29, %33 : vector<8x128xf32>
    %cst_13 = arith.constant 1.000000e+00 : f32
    %35 = vector.broadcast %cst_13 : f32 to vector<8x128xf32>
    %36 = arith.subf %35, %34 : vector<8x128xf32>
    %37 = arith.mulf %9, %36 : vector<8x128xf32>
    %cst_14 = arith.constant 1.000000e+00 : f32
    %38 = vector.broadcast %cst_14 : f32 to vector<8x128xf32>
    %39 = arith.addf %38, %37 : vector<8x128xf32>
    %40 = arith.mulf %2, %39 : vector<8x128xf32>
    %c0_15 = arith.constant 0 : index
    %c0_16 = arith.constant 0 : index
    %41 = vector.load %arg3[%c0_15, %c0_16] : memref<8x128xf32, #tpu.memory_space<vmem>>, vector<8x128xf32>
    tpu.vector_store %arg3[%c0_15, %c0_16], %40 {strides = array<i32>} : memref<8x128xf32, #tpu.memory_space<vmem>>, vector<8x128xf32>,
    return
  }
  func.func @transform_0(%arg0: i32, %arg1: i32) -> (i32, i32) {
    %c0_i32 = arith.constant 0 : i32
    return %arg0, %arg1 : i32, i32
  }
  func.func @transform_1(%arg0: i32, %arg1: i32) -> (i32, i32) {
    %c0_i32 = arith.constant 0 : i32
    return %arg0, %arg1 : i32, i32
  }
}

module attributes {stable_mosaic.version = 11 : i64} {
  func.func @_specmul_kernel(%arg0: memref<4x2x256xf32, #tpu.memory_space<vmem>>, %arg1: memref<4x2x256xf32, #tpu.memory_space<vmem>>, %arg2: memref<4x1x256xf32, #tpu.memory_space<vmem>>, %arg3: memref<4x1x256xf32, #tpu.memory_space<vmem>>, %arg4: memref<2x256xf32, #tpu.memory_space<vmem>>, %arg5: memref<2x256xf32, #tpu.memory_space<vmem>>) attributes {dimension_semantics = [], scalar_prefetch = 0 : i64, scratch_operands = 0 : i64, tpu.core_type = #tpu.core_type<tc>} {
    %cst = arith.constant 0.000000e+00 : f32
    %0 = vector.broadcast %cst : f32 to vector<2x256xf32>
    %cst_0 = arith.constant 0.000000e+00 : f32
    %1 = vector.broadcast %cst_0 : f32 to vector<2x256xf32>
    %c0 = arith.constant 0 : index
    %c0_1 = arith.constant 0 : index
    %c0_2 = arith.constant 0 : index
    %2 = vector.load %arg0[%c0, %c0_1, %c0_2] : memref<4x2x256xf32, #tpu.memory_space<vmem>>, vector<1x2x256xf32>
    %3 = vector.shape_cast %2 : vector<1x2x256xf32> to vector<2x256xf32>
    %c0_3 = arith.constant 0 : index
    %c0_4 = arith.constant 0 : index
    %c0_5 = arith.constant 0 : index
    %4 = vector.load %arg1[%c0_3, %c0_4, %c0_5] : memref<4x2x256xf32, #tpu.memory_space<vmem>>, vector<1x2x256xf32>
    %5 = vector.shape_cast %4 : vector<1x2x256xf32> to vector<2x256xf32>
    %c0_6 = arith.constant 0 : index
    %c0_7 = arith.constant 0 : index
    %c0_8 = arith.constant 0 : index
    %6 = vector.load %arg2[%c0_6, %c0_7, %c0_8] : memref<4x1x256xf32, #tpu.memory_space<vmem>>, vector<1x1x256xf32>
    %7 = vector.shape_cast %6 : vector<1x1x256xf32> to vector<1x256xf32>
    %c0_9 = arith.constant 0 : index
    %c0_10 = arith.constant 0 : index
    %c0_11 = arith.constant 0 : index
    %8 = vector.load %arg3[%c0_9, %c0_10, %c0_11] : memref<4x1x256xf32, #tpu.memory_space<vmem>>, vector<1x1x256xf32>
    %9 = vector.shape_cast %8 : vector<1x1x256xf32> to vector<1x256xf32>
    %10 = vector.broadcast %7 : vector<1x256xf32> to vector<2x256xf32>
    %11 = arith.mulf %3, %10 : vector<2x256xf32>
    %12 = arith.addf %0, %11 : vector<2x256xf32>
    %13 = vector.broadcast %9 : vector<1x256xf32> to vector<2x256xf32>
    %14 = arith.mulf %5, %13 : vector<2x256xf32>
    %15 = arith.subf %12, %14 : vector<2x256xf32>
    %16 = vector.broadcast %9 : vector<1x256xf32> to vector<2x256xf32>
    %17 = arith.mulf %3, %16 : vector<2x256xf32>
    %18 = arith.addf %1, %17 : vector<2x256xf32>
    %19 = vector.broadcast %7 : vector<1x256xf32> to vector<2x256xf32>
    %20 = arith.mulf %5, %19 : vector<2x256xf32>
    %21 = arith.addf %18, %20 : vector<2x256xf32>
    %c1 = arith.constant 1 : index
    %c0_12 = arith.constant 0 : index
    %c0_13 = arith.constant 0 : index
    %22 = vector.load %arg0[%c1, %c0_12, %c0_13] : memref<4x2x256xf32, #tpu.memory_space<vmem>>, vector<1x2x256xf32>
    %23 = vector.shape_cast %22 : vector<1x2x256xf32> to vector<2x256xf32>
    %c1_14 = arith.constant 1 : index
    %c0_15 = arith.constant 0 : index
    %c0_16 = arith.constant 0 : index
    %24 = vector.load %arg1[%c1_14, %c0_15, %c0_16] : memref<4x2x256xf32, #tpu.memory_space<vmem>>, vector<1x2x256xf32>
    %25 = vector.shape_cast %24 : vector<1x2x256xf32> to vector<2x256xf32>
    %c1_17 = arith.constant 1 : index
    %c0_18 = arith.constant 0 : index
    %c0_19 = arith.constant 0 : index
    %26 = vector.load %arg2[%c1_17, %c0_18, %c0_19] : memref<4x1x256xf32, #tpu.memory_space<vmem>>, vector<1x1x256xf32>
    %27 = vector.shape_cast %26 : vector<1x1x256xf32> to vector<1x256xf32>
    %c1_20 = arith.constant 1 : index
    %c0_21 = arith.constant 0 : index
    %c0_22 = arith.constant 0 : index
    %28 = vector.load %arg3[%c1_20, %c0_21, %c0_22] : memref<4x1x256xf32, #tpu.memory_space<vmem>>, vector<1x1x256xf32>
    %29 = vector.shape_cast %28 : vector<1x1x256xf32> to vector<1x256xf32>
    %30 = vector.broadcast %27 : vector<1x256xf32> to vector<2x256xf32>
    %31 = arith.mulf %23, %30 : vector<2x256xf32>
    %32 = arith.addf %15, %31 : vector<2x256xf32>
    %33 = vector.broadcast %29 : vector<1x256xf32> to vector<2x256xf32>
    %34 = arith.mulf %25, %33 : vector<2x256xf32>
    %35 = arith.subf %32, %34 : vector<2x256xf32>
    %36 = vector.broadcast %29 : vector<1x256xf32> to vector<2x256xf32>
    %37 = arith.mulf %23, %36 : vector<2x256xf32>
    %38 = arith.addf %21, %37 : vector<2x256xf32>
    %39 = vector.broadcast %27 : vector<1x256xf32> to vector<2x256xf32>
    %40 = arith.mulf %25, %39 : vector<2x256xf32>
    %41 = arith.addf %38, %40 : vector<2x256xf32>
    %c2 = arith.constant 2 : index
    %c0_23 = arith.constant 0 : index
    %c0_24 = arith.constant 0 : index
    %42 = vector.load %arg0[%c2, %c0_23, %c0_24] : memref<4x2x256xf32, #tpu.memory_space<vmem>>, vector<1x2x256xf32>
    %43 = vector.shape_cast %42 : vector<1x2x256xf32> to vector<2x256xf32>
    %c2_25 = arith.constant 2 : index
    %c0_26 = arith.constant 0 : index
    %c0_27 = arith.constant 0 : index
    %44 = vector.load %arg1[%c2_25, %c0_26, %c0_27] : memref<4x2x256xf32, #tpu.memory_space<vmem>>, vector<1x2x256xf32>
    %45 = vector.shape_cast %44 : vector<1x2x256xf32> to vector<2x256xf32>
    %c2_28 = arith.constant 2 : index
    %c0_29 = arith.constant 0 : index
    %c0_30 = arith.constant 0 : index
    %46 = vector.load %arg2[%c2_28, %c0_29, %c0_30] : memref<4x1x256xf32, #tpu.memory_space<vmem>>, vector<1x1x256xf32>
    %47 = vector.shape_cast %46 : vector<1x1x256xf32> to vector<1x256xf32>
    %c2_31 = arith.constant 2 : index
    %c0_32 = arith.constant 0 : index
    %c0_33 = arith.constant 0 : index
    %48 = vector.load %arg3[%c2_31, %c0_32, %c0_33] : memref<4x1x256xf32, #tpu.memory_space<vmem>>, vector<1x1x256xf32>
    %49 = vector.shape_cast %48 : vector<1x1x256xf32> to vector<1x256xf32>
    %50 = vector.broadcast %47 : vector<1x256xf32> to vector<2x256xf32>
    %51 = arith.mulf %43, %50 : vector<2x256xf32>
    %52 = arith.addf %35, %51 : vector<2x256xf32>
    %53 = vector.broadcast %49 : vector<1x256xf32> to vector<2x256xf32>
    %54 = arith.mulf %45, %53 : vector<2x256xf32>
    %55 = arith.subf %52, %54 : vector<2x256xf32>
    %56 = vector.broadcast %49 : vector<1x256xf32> to vector<2x256xf32>
    %57 = arith.mulf %43, %56 : vector<2x256xf32>
    %58 = arith.addf %41, %57 : vector<2x256xf32>
    %59 = vector.broadcast %47 : vector<1x256xf32> to vector<2x256xf32>
    %60 = arith.mulf %45, %59 : vector<2x256xf32>
    %61 = arith.addf %58, %60 : vector<2x256xf32>
    %c3 = arith.constant 3 : index
    %c0_34 = arith.constant 0 : index
    %c0_35 = arith.constant 0 : index
    %62 = vector.load %arg0[%c3, %c0_34, %c0_35] : memref<4x2x256xf32, #tpu.memory_space<vmem>>, vector<1x2x256xf32>
    %63 = vector.shape_cast %62 : vector<1x2x256xf32> to vector<2x256xf32>
    %c3_36 = arith.constant 3 : index
    %c0_37 = arith.constant 0 : index
    %c0_38 = arith.constant 0 : index
    %64 = vector.load %arg1[%c3_36, %c0_37, %c0_38] : memref<4x2x256xf32, #tpu.memory_space<vmem>>, vector<1x2x256xf32>
    %65 = vector.shape_cast %64 : vector<1x2x256xf32> to vector<2x256xf32>
    %c3_39 = arith.constant 3 : index
    %c0_40 = arith.constant 0 : index
    %c0_41 = arith.constant 0 : index
    %66 = vector.load %arg2[%c3_39, %c0_40, %c0_41] : memref<4x1x256xf32, #tpu.memory_space<vmem>>, vector<1x1x256xf32>
    %67 = vector.shape_cast %66 : vector<1x1x256xf32> to vector<1x256xf32>
    %c3_42 = arith.constant 3 : index
    %c0_43 = arith.constant 0 : index
    %c0_44 = arith.constant 0 : index
    %68 = vector.load %arg3[%c3_42, %c0_43, %c0_44] : memref<4x1x256xf32, #tpu.memory_space<vmem>>, vector<1x1x256xf32>
    %69 = vector.shape_cast %68 : vector<1x1x256xf32> to vector<1x256xf32>
    %70 = vector.broadcast %67 : vector<1x256xf32> to vector<2x256xf32>
    %71 = arith.mulf %63, %70 : vector<2x256xf32>
    %72 = arith.addf %55, %71 : vector<2x256xf32>
    %73 = vector.broadcast %69 : vector<1x256xf32> to vector<2x256xf32>
    %74 = arith.mulf %65, %73 : vector<2x256xf32>
    %75 = arith.subf %72, %74 : vector<2x256xf32>
    %76 = vector.broadcast %69 : vector<1x256xf32> to vector<2x256xf32>
    %77 = arith.mulf %63, %76 : vector<2x256xf32>
    %78 = arith.addf %61, %77 : vector<2x256xf32>
    %79 = vector.broadcast %67 : vector<1x256xf32> to vector<2x256xf32>
    %80 = arith.mulf %65, %79 : vector<2x256xf32>
    %81 = arith.addf %78, %80 : vector<2x256xf32>
    %c0_45 = arith.constant 0 : index
    %c0_46 = arith.constant 0 : index
    %82 = vector.load %arg4[%c0_45, %c0_46] : memref<2x256xf32, #tpu.memory_space<vmem>>, vector<2x256xf32>
    tpu.vector_store %arg4[%c0_45, %c0_46], %75 {strides = array<i32>} : memref<2x256xf32, #tpu.memory_space<vmem>>, vector<2x256xf32>,
    %c0_47 = arith.constant 0 : index
    %c0_48 = arith.constant 0 : index
    %83 = vector.load %arg5[%c0_47, %c0_48] : memref<2x256xf32, #tpu.memory_space<vmem>>, vector<2x256xf32>
    tpu.vector_store %arg5[%c0_47, %c0_48], %81 {strides = array<i32>} : memref<2x256xf32, #tpu.memory_space<vmem>>, vector<2x256xf32>,
    return
  }
}

module attributes {stable_mosaic.version = 11 : i64} {
  func.func @_conv1x1_add_kernel(%arg0: i32, %arg1: memref<4x256xf32, #tpu.memory_space<vmem>>, %arg2: memref<8x4xf32, #tpu.memory_space<vmem>>, %arg3: memref<8x256xf32, #tpu.memory_space<vmem>>, %arg4: memref<8x256xf32, #tpu.memory_space<vmem>>) attributes {dimension_semantics = [#tpu.dimension_semantics<parallel>], iteration_bounds = array<i64: 2>, scalar_prefetch = 0 : i64, scratch_operands = 0 : i64, tpu.core_type = #tpu.core_type<tc>, window_params = [{transform_indices = @transform_0, window_bounds = array<i64: 4, 256>}, {pipeline_mode = #tpu.pipeline_mode<synchronous>, transform_indices = @transform_1, window_bounds = array<i64: 8, 4>}, {transform_indices = @transform_2, window_bounds = array<i64: 8, 256>}, {transform_indices = @transform_3, window_bounds = array<i64: 8, 256>}]} {
    %c0 = arith.constant 0 : index
    %c0_0 = arith.constant 0 : index
    %0 = vector.load %arg2[%c0, %c0_0] : memref<8x4xf32, #tpu.memory_space<vmem>>, vector<8x4xf32>
    %c0_1 = arith.constant 0 : index
    %c0_2 = arith.constant 0 : index
    %1 = vector.load %arg1[%c0_1, %c0_2] : memref<4x256xf32, #tpu.memory_space<vmem>>, vector<4x256xf32>
    %cst = arith.constant dense<0.000000e+00> : vector<8x256xf32>
    %2 = tpu.matmul %0, %1, %cst {dimension_numbers = #tpu.dot_dimension_numbers<[1], [0], [0], [1], [0, 0, 1, 1], [], []>} : vector<8x4xf32>, vector<4x256xf32>, vector<8x256xf32> -> vector<8x256xf32>
    %c0_3 = arith.constant 0 : index
    %c0_4 = arith.constant 0 : index
    %3 = vector.load %arg3[%c0_3, %c0_4] : memref<8x256xf32, #tpu.memory_space<vmem>>, vector<8x256xf32>
    %4 = arith.addf %2, %3 : vector<8x256xf32>
    %c0_5 = arith.constant 0 : index
    %c0_6 = arith.constant 0 : index
    %5 = vector.load %arg4[%c0_5, %c0_6] : memref<8x256xf32, #tpu.memory_space<vmem>>, vector<8x256xf32>
    tpu.vector_store %arg4[%c0_5, %c0_6], %4 {strides = array<i32>} : memref<8x256xf32, #tpu.memory_space<vmem>>, vector<8x256xf32>,
    return
  }
  func.func @transform_0(%arg0: i32) -> (i32, i32) {
    %c0_i32 = arith.constant 0 : i32
    %c0_i32_0 = arith.constant 0 : i32
    return %c0_i32, %arg0 : i32, i32
  }
  func.func @transform_1(%arg0: i32) -> (i32, i32) {
    %c0_i32 = arith.constant 0 : i32
    %c0_i32_0 = arith.constant 0 : i32
    %c0_i32_1 = arith.constant 0 : i32
    return %c0_i32, %c0_i32_0 : i32, i32
  }
  func.func @transform_2(%arg0: i32) -> (i32, i32) {
    %c0_i32 = arith.constant 0 : i32
    %c0_i32_0 = arith.constant 0 : i32
    return %c0_i32, %arg0 : i32, i32
  }
  func.func @transform_3(%arg0: i32) -> (i32, i32) {
    %c0_i32 = arith.constant 0 : i32
    %c0_i32_0 = arith.constant 0 : i32
    return %c0_i32, %arg0 : i32, i32
  }
}

module attributes {stable_mosaic.version = 11 : i64} {
  func.func @_gelu_kernel(%arg0: i32, %arg1: i32, %arg2: memref<16x128xf32, #tpu.memory_space<vmem>>, %arg3: memref<16x128xf32, #tpu.memory_space<vmem>>) attributes {dimension_semantics = [#tpu.dimension_semantics<parallel>, #tpu.dimension_semantics<parallel>], iteration_bounds = array<i64: 1, 2>, scalar_prefetch = 0 : i64, scratch_operands = 0 : i64, tpu.core_type = #tpu.core_type<tc>, window_params = [{transform_indices = @transform_0, window_bounds = array<i64: 16, 128>}, {transform_indices = @transform_1, window_bounds = array<i64: 16, 128>}]} {
    %c0 = arith.constant 0 : index
    %c0_0 = arith.constant 0 : index
    %0 = vector.load %arg2[%c0, %c0_0] : memref<16x128xf32, #tpu.memory_space<vmem>>, vector<16x128xf32>
    %cst = arith.constant 5.000000e-01 : f32
    %1 = vector.broadcast %cst : f32 to vector<16x128xf32>
    %2 = arith.mulf %1, %0 : vector<16x128xf32>
    %cst_1 = arith.constant 0.707106769 : f32
    %3 = vector.broadcast %cst_1 : f32 to vector<16x128xf32>
    %4 = arith.mulf %0, %3 : vector<16x128xf32>
    %cst_2 = arith.constant 0.000000e+00 : f32
    %5 = vector.broadcast %cst_2 : f32 to vector<16x128xf32>
    %6 = arith.cmpf oge, %4, %5 : vector<16x128xf32>
    %cst_3 = arith.constant 1.000000e+00 : f32
    %cst_4 = arith.constant -1.000000e+00 : f32
    %7 = vector.broadcast %cst_3 : f32 to vector<16x128xf32>
    %8 = vector.broadcast %cst_4 : f32 to vector<16x128xf32>
    %9 = arith.select %6, %7, %8 : vector<16x128xi1>, vector<16x128xf32>
    %10 = math.absf %4 : vector<16x128xf32>
    %cst_5 = arith.constant 0.327591091 : f32
    %11 = vector.broadcast %cst_5 : f32 to vector<16x128xf32>
    %12 = arith.mulf %11, %10 : vector<16x128xf32>
    %cst_6 = arith.constant 1.000000e+00 : f32
    %13 = vector.broadcast %cst_6 : f32 to vector<16x128xf32>
    %14 = arith.addf %13, %12 : vector<16x128xf32>
    %15 = tpu.reciprocal %14 {approx = true} : vector<16x128xf32> -> vector<16x128xf32>
    %cst_7 = arith.constant 1.06140542 : f32
    %16 = vector.broadcast %cst_7 : f32 to vector<16x128xf32>
    %17 = arith.mulf %16, %15 : vector<16x128xf32>
    %cst_8 = arith.constant -1.45315206 : f32
    %18 = vector.broadcast %cst_8 : f32 to vector<16x128xf32>
    %19 = arith.addf %17, %18 : vector<16x128xf32>
    %20 = arith.mulf %19, %15 : vector<16x128xf32>
    %cst_9 = arith.constant 1.42141378 : f32
    %21 = vector.broadcast %cst_9 : f32 to vector<16x128xf32>
    %22 = arith.addf %20, %21 : vector<16x128xf32>
    %23 = arith.mulf %22, %15 : vector<16x128xf32>
    %cst_10 = arith.constant -0.284496725 : f32
    %24 = vector.broadcast %cst_10 : f32 to vector<16x128xf32>
    %25 = arith.addf %23, %24 : vector<16x128xf32>
    %26 = arith.mulf %25, %15 : vector<16x128xf32>
    %cst_11 = arith.constant 0.254829586 : f32
    %27 = vector.broadcast %cst_11 : f32 to vector<16x128xf32>
    %28 = arith.addf %26, %27 : vector<16x128xf32>
    %29 = arith.mulf %28, %15 : vector<16x128xf32>
    %cst_12 = arith.constant 0.000000e+00 : f32
    %30 = vector.broadcast %cst_12 : f32 to vector<16x128xf32>
    %31 = arith.subf %30, %10 : vector<16x128xf32>
    %32 = arith.mulf %31, %10 : vector<16x128xf32>
    %33 = math.exp %32 : vector<16x128xf32>
    %34 = arith.mulf %29, %33 : vector<16x128xf32>
    %cst_13 = arith.constant 1.000000e+00 : f32
    %35 = vector.broadcast %cst_13 : f32 to vector<16x128xf32>
    %36 = arith.subf %35, %34 : vector<16x128xf32>
    %37 = arith.mulf %9, %36 : vector<16x128xf32>
    %cst_14 = arith.constant 1.000000e+00 : f32
    %38 = vector.broadcast %cst_14 : f32 to vector<16x128xf32>
    %39 = arith.addf %38, %37 : vector<16x128xf32>
    %40 = arith.mulf %2, %39 : vector<16x128xf32>
    %c0_15 = arith.constant 0 : index
    %c0_16 = arith.constant 0 : index
    %41 = vector.load %arg3[%c0_15, %c0_16] : memref<16x128xf32, #tpu.memory_space<vmem>>, vector<16x128xf32>
    tpu.vector_store %arg3[%c0_15, %c0_16], %40 {strides = array<i32>} : memref<16x128xf32, #tpu.memory_space<vmem>>, vector<16x128xf32>,
    return
  }
  func.func @transform_0(%arg0: i32, %arg1: i32) -> (i32, i32) {
    %c0_i32 = arith.constant 0 : i32
    return %arg0, %arg1 : i32, i32
  }
  func.func @transform_1(%arg0: i32, %arg1: i32) -> (i32, i32) {
    %c0_i32 = arith.constant 0 : i32
    return %arg0, %arg1 : i32, i32
  }
}

module attributes {stable_mosaic.version = 11 : i64} {
  func.func @_conv1x1_add_kernel(%arg0: i32, %arg1: memref<12x256xf32, #tpu.memory_space<vmem>>, %arg2: memref<8x12xf32, #tpu.memory_space<vmem>>, %arg3: memref<8x256xf32, #tpu.memory_space<vmem>>, %arg4: memref<8x256xf32, #tpu.memory_space<vmem>>) attributes {dimension_semantics = [#tpu.dimension_semantics<parallel>], iteration_bounds = array<i64: 2>, scalar_prefetch = 0 : i64, scratch_operands = 0 : i64, tpu.core_type = #tpu.core_type<tc>, window_params = [{transform_indices = @transform_0, window_bounds = array<i64: 12, 256>}, {pipeline_mode = #tpu.pipeline_mode<synchronous>, transform_indices = @transform_1, window_bounds = array<i64: 8, 12>}, {transform_indices = @transform_2, window_bounds = array<i64: 8, 256>}, {transform_indices = @transform_3, window_bounds = array<i64: 8, 256>}]} {
    %c0 = arith.constant 0 : index
    %c0_0 = arith.constant 0 : index
    %0 = vector.load %arg2[%c0, %c0_0] : memref<8x12xf32, #tpu.memory_space<vmem>>, vector<8x12xf32>
    %c0_1 = arith.constant 0 : index
    %c0_2 = arith.constant 0 : index
    %1 = vector.load %arg1[%c0_1, %c0_2] : memref<12x256xf32, #tpu.memory_space<vmem>>, vector<12x256xf32>
    %cst = arith.constant dense<0.000000e+00> : vector<8x256xf32>
    %2 = tpu.matmul %0, %1, %cst {dimension_numbers = #tpu.dot_dimension_numbers<[1], [0], [0], [1], [0, 0, 1, 1], [], []>} : vector<8x12xf32>, vector<12x256xf32>, vector<8x256xf32> -> vector<8x256xf32>
    %c0_3 = arith.constant 0 : index
    %c0_4 = arith.constant 0 : index
    %3 = vector.load %arg3[%c0_3, %c0_4] : memref<8x256xf32, #tpu.memory_space<vmem>>, vector<8x256xf32>
    %4 = arith.addf %2, %3 : vector<8x256xf32>
    %c0_5 = arith.constant 0 : index
    %c0_6 = arith.constant 0 : index
    %5 = vector.load %arg4[%c0_5, %c0_6] : memref<8x256xf32, #tpu.memory_space<vmem>>, vector<8x256xf32>
    tpu.vector_store %arg4[%c0_5, %c0_6], %4 {strides = array<i32>} : memref<8x256xf32, #tpu.memory_space<vmem>>, vector<8x256xf32>,
    return
  }
  func.func @transform_0(%arg0: i32) -> (i32, i32) {
    %c0_i32 = arith.constant 0 : i32
    %c0_i32_0 = arith.constant 0 : i32
    return %c0_i32, %arg0 : i32, i32
  }
  func.func @transform_1(%arg0: i32) -> (i32, i32) {
    %c0_i32 = arith.constant 0 : i32
    %c0_i32_0 = arith.constant 0 : i32
    %c0_i32_1 = arith.constant 0 : i32
    return %c0_i32, %c0_i32_0 : i32, i32
  }
  func.func @transform_2(%arg0: i32) -> (i32, i32) {
    %c0_i32 = arith.constant 0 : i32
    %c0_i32_0 = arith.constant 0 : i32
    return %c0_i32, %arg0 : i32, i32
  }
  func.func @transform_3(%arg0: i32) -> (i32, i32) {
    %c0_i32 = arith.constant 0 : i32
    %c0_i32_0 = arith.constant 0 : i32
    return %c0_i32, %arg0 : i32, i32
  }
}

module attributes {stable_mosaic.version = 11 : i64} {
  func.func @_specmul_kernel(%arg0: memref<8x2x256xf32, #tpu.memory_space<vmem>>, %arg1: memref<8x2x256xf32, #tpu.memory_space<vmem>>, %arg2: memref<8x1x256xf32, #tpu.memory_space<vmem>>, %arg3: memref<8x1x256xf32, #tpu.memory_space<vmem>>, %arg4: memref<2x256xf32, #tpu.memory_space<vmem>>, %arg5: memref<2x256xf32, #tpu.memory_space<vmem>>) attributes {dimension_semantics = [], scalar_prefetch = 0 : i64, scratch_operands = 0 : i64, tpu.core_type = #tpu.core_type<tc>} {
    %cst = arith.constant 0.000000e+00 : f32
    %0 = vector.broadcast %cst : f32 to vector<2x256xf32>
    %cst_0 = arith.constant 0.000000e+00 : f32
    %1 = vector.broadcast %cst_0 : f32 to vector<2x256xf32>
    %c0 = arith.constant 0 : index
    %c0_1 = arith.constant 0 : index
    %c0_2 = arith.constant 0 : index
    %2 = vector.load %arg0[%c0, %c0_1, %c0_2] : memref<8x2x256xf32, #tpu.memory_space<vmem>>, vector<1x2x256xf32>
    %3 = vector.shape_cast %2 : vector<1x2x256xf32> to vector<2x256xf32>
    %c0_3 = arith.constant 0 : index
    %c0_4 = arith.constant 0 : index
    %c0_5 = arith.constant 0 : index
    %4 = vector.load %arg1[%c0_3, %c0_4, %c0_5] : memref<8x2x256xf32, #tpu.memory_space<vmem>>, vector<1x2x256xf32>
    %5 = vector.shape_cast %4 : vector<1x2x256xf32> to vector<2x256xf32>
    %c0_6 = arith.constant 0 : index
    %c0_7 = arith.constant 0 : index
    %c0_8 = arith.constant 0 : index
    %6 = vector.load %arg2[%c0_6, %c0_7, %c0_8] : memref<8x1x256xf32, #tpu.memory_space<vmem>>, vector<1x1x256xf32>
    %7 = vector.shape_cast %6 : vector<1x1x256xf32> to vector<1x256xf32>
    %c0_9 = arith.constant 0 : index
    %c0_10 = arith.constant 0 : index
    %c0_11 = arith.constant 0 : index
    %8 = vector.load %arg3[%c0_9, %c0_10, %c0_11] : memref<8x1x256xf32, #tpu.memory_space<vmem>>, vector<1x1x256xf32>
    %9 = vector.shape_cast %8 : vector<1x1x256xf32> to vector<1x256xf32>
    %10 = vector.broadcast %7 : vector<1x256xf32> to vector<2x256xf32>
    %11 = arith.mulf %3, %10 : vector<2x256xf32>
    %12 = arith.addf %0, %11 : vector<2x256xf32>
    %13 = vector.broadcast %9 : vector<1x256xf32> to vector<2x256xf32>
    %14 = arith.mulf %5, %13 : vector<2x256xf32>
    %15 = arith.subf %12, %14 : vector<2x256xf32>
    %16 = vector.broadcast %9 : vector<1x256xf32> to vector<2x256xf32>
    %17 = arith.mulf %3, %16 : vector<2x256xf32>
    %18 = arith.addf %1, %17 : vector<2x256xf32>
    %19 = vector.broadcast %7 : vector<1x256xf32> to vector<2x256xf32>
    %20 = arith.mulf %5, %19 : vector<2x256xf32>
    %21 = arith.addf %18, %20 : vector<2x256xf32>
    %c1 = arith.constant 1 : index
    %c0_12 = arith.constant 0 : index
    %c0_13 = arith.constant 0 : index
    %22 = vector.load %arg0[%c1, %c0_12, %c0_13] : memref<8x2x256xf32, #tpu.memory_space<vmem>>, vector<1x2x256xf32>
    %23 = vector.shape_cast %22 : vector<1x2x256xf32> to vector<2x256xf32>
    %c1_14 = arith.constant 1 : index
    %c0_15 = arith.constant 0 : index
    %c0_16 = arith.constant 0 : index
    %24 = vector.load %arg1[%c1_14, %c0_15, %c0_16] : memref<8x2x256xf32, #tpu.memory_space<vmem>>, vector<1x2x256xf32>
    %25 = vector.shape_cast %24 : vector<1x2x256xf32> to vector<2x256xf32>
    %c1_17 = arith.constant 1 : index
    %c0_18 = arith.constant 0 : index
    %c0_19 = arith.constant 0 : index
    %26 = vector.load %arg2[%c1_17, %c0_18, %c0_19] : memref<8x1x256xf32, #tpu.memory_space<vmem>>, vector<1x1x256xf32>
    %27 = vector.shape_cast %26 : vector<1x1x256xf32> to vector<1x256xf32>
    %c1_20 = arith.constant 1 : index
    %c0_21 = arith.constant 0 : index
    %c0_22 = arith.constant 0 : index
    %28 = vector.load %arg3[%c1_20, %c0_21, %c0_22] : memref<8x1x256xf32, #tpu.memory_space<vmem>>, vector<1x1x256xf32>
    %29 = vector.shape_cast %28 : vector<1x1x256xf32> to vector<1x256xf32>
    %30 = vector.broadcast %27 : vector<1x256xf32> to vector<2x256xf32>
    %31 = arith.mulf %23, %30 : vector<2x256xf32>
    %32 = arith.addf %15, %31 : vector<2x256xf32>
    %33 = vector.broadcast %29 : vector<1x256xf32> to vector<2x256xf32>
    %34 = arith.mulf %25, %33 : vector<2x256xf32>
    %35 = arith.subf %32, %34 : vector<2x256xf32>
    %36 = vector.broadcast %29 : vector<1x256xf32> to vector<2x256xf32>
    %37 = arith.mulf %23, %36 : vector<2x256xf32>
    %38 = arith.addf %21, %37 : vector<2x256xf32>
    %39 = vector.broadcast %27 : vector<1x256xf32> to vector<2x256xf32>
    %40 = arith.mulf %25, %39 : vector<2x256xf32>
    %41 = arith.addf %38, %40 : vector<2x256xf32>
    %c2 = arith.constant 2 : index
    %c0_23 = arith.constant 0 : index
    %c0_24 = arith.constant 0 : index
    %42 = vector.load %arg0[%c2, %c0_23, %c0_24] : memref<8x2x256xf32, #tpu.memory_space<vmem>>, vector<1x2x256xf32>
    %43 = vector.shape_cast %42 : vector<1x2x256xf32> to vector<2x256xf32>
    %c2_25 = arith.constant 2 : index
    %c0_26 = arith.constant 0 : index
    %c0_27 = arith.constant 0 : index
    %44 = vector.load %arg1[%c2_25, %c0_26, %c0_27] : memref<8x2x256xf32, #tpu.memory_space<vmem>>, vector<1x2x256xf32>
    %45 = vector.shape_cast %44 : vector<1x2x256xf32> to vector<2x256xf32>
    %c2_28 = arith.constant 2 : index
    %c0_29 = arith.constant 0 : index
    %c0_30 = arith.constant 0 : index
    %46 = vector.load %arg2[%c2_28, %c0_29, %c0_30] : memref<8x1x256xf32, #tpu.memory_space<vmem>>, vector<1x1x256xf32>
    %47 = vector.shape_cast %46 : vector<1x1x256xf32> to vector<1x256xf32>
    %c2_31 = arith.constant 2 : index
    %c0_32 = arith.constant 0 : index
    %c0_33 = arith.constant 0 : index
    %48 = vector.load %arg3[%c2_31, %c0_32, %c0_33] : memref<8x1x256xf32, #tpu.memory_space<vmem>>, vector<1x1x256xf32>
    %49 = vector.shape_cast %48 : vector<1x1x256xf32> to vector<1x256xf32>
    %50 = vector.broadcast %47 : vector<1x256xf32> to vector<2x256xf32>
    %51 = arith.mulf %43, %50 : vector<2x256xf32>
    %52 = arith.addf %35, %51 : vector<2x256xf32>
    %53 = vector.broadcast %49 : vector<1x256xf32> to vector<2x256xf32>
    %54 = arith.mulf %45, %53 : vector<2x256xf32>
    %55 = arith.subf %52, %54 : vector<2x256xf32>
    %56 = vector.broadcast %49 : vector<1x256xf32> to vector<2x256xf32>
    %57 = arith.mulf %43, %56 : vector<2x256xf32>
    %58 = arith.addf %41, %57 : vector<2x256xf32>
    %59 = vector.broadcast %47 : vector<1x256xf32> to vector<2x256xf32>
    %60 = arith.mulf %45, %59 : vector<2x256xf32>
    %61 = arith.addf %58, %60 : vector<2x256xf32>
    %c3 = arith.constant 3 : index
    %c0_34 = arith.constant 0 : index
    %c0_35 = arith.constant 0 : index
    %62 = vector.load %arg0[%c3, %c0_34, %c0_35] : memref<8x2x256xf32, #tpu.memory_space<vmem>>, vector<1x2x256xf32>
    %63 = vector.shape_cast %62 : vector<1x2x256xf32> to vector<2x256xf32>
    %c3_36 = arith.constant 3 : index
    %c0_37 = arith.constant 0 : index
    %c0_38 = arith.constant 0 : index
    %64 = vector.load %arg1[%c3_36, %c0_37, %c0_38] : memref<8x2x256xf32, #tpu.memory_space<vmem>>, vector<1x2x256xf32>
    %65 = vector.shape_cast %64 : vector<1x2x256xf32> to vector<2x256xf32>
    %c3_39 = arith.constant 3 : index
    %c0_40 = arith.constant 0 : index
    %c0_41 = arith.constant 0 : index
    %66 = vector.load %arg2[%c3_39, %c0_40, %c0_41] : memref<8x1x256xf32, #tpu.memory_space<vmem>>, vector<1x1x256xf32>
    %67 = vector.shape_cast %66 : vector<1x1x256xf32> to vector<1x256xf32>
    %c3_42 = arith.constant 3 : index
    %c0_43 = arith.constant 0 : index
    %c0_44 = arith.constant 0 : index
    %68 = vector.load %arg3[%c3_42, %c0_43, %c0_44] : memref<8x1x256xf32, #tpu.memory_space<vmem>>, vector<1x1x256xf32>
    %69 = vector.shape_cast %68 : vector<1x1x256xf32> to vector<1x256xf32>
    %70 = vector.broadcast %67 : vector<1x256xf32> to vector<2x256xf32>
    %71 = arith.mulf %63, %70 : vector<2x256xf32>
    %72 = arith.addf %55, %71 : vector<2x256xf32>
    %73 = vector.broadcast %69 : vector<1x256xf32> to vector<2x256xf32>
    %74 = arith.mulf %65, %73 : vector<2x256xf32>
    %75 = arith.subf %72, %74 : vector<2x256xf32>
    %76 = vector.broadcast %69 : vector<1x256xf32> to vector<2x256xf32>
    %77 = arith.mulf %63, %76 : vector<2x256xf32>
    %78 = arith.addf %61, %77 : vector<2x256xf32>
    %79 = vector.broadcast %67 : vector<1x256xf32> to vector<2x256xf32>
    %80 = arith.mulf %65, %79 : vector<2x256xf32>
    %81 = arith.addf %78, %80 : vector<2x256xf32>
    %c4 = arith.constant 4 : index
    %c0_45 = arith.constant 0 : index
    %c0_46 = arith.constant 0 : index
    %82 = vector.load %arg0[%c4, %c0_45, %c0_46] : memref<8x2x256xf32, #tpu.memory_space<vmem>>, vector<1x2x256xf32>
    %83 = vector.shape_cast %82 : vector<1x2x256xf32> to vector<2x256xf32>
    %c4_47 = arith.constant 4 : index
    %c0_48 = arith.constant 0 : index
    %c0_49 = arith.constant 0 : index
    %84 = vector.load %arg1[%c4_47, %c0_48, %c0_49] : memref<8x2x256xf32, #tpu.memory_space<vmem>>, vector<1x2x256xf32>
    %85 = vector.shape_cast %84 : vector<1x2x256xf32> to vector<2x256xf32>
    %c4_50 = arith.constant 4 : index
    %c0_51 = arith.constant 0 : index
    %c0_52 = arith.constant 0 : index
    %86 = vector.load %arg2[%c4_50, %c0_51, %c0_52] : memref<8x1x256xf32, #tpu.memory_space<vmem>>, vector<1x1x256xf32>
    %87 = vector.shape_cast %86 : vector<1x1x256xf32> to vector<1x256xf32>
    %c4_53 = arith.constant 4 : index
    %c0_54 = arith.constant 0 : index
    %c0_55 = arith.constant 0 : index
    %88 = vector.load %arg3[%c4_53, %c0_54, %c0_55] : memref<8x1x256xf32, #tpu.memory_space<vmem>>, vector<1x1x256xf32>
    %89 = vector.shape_cast %88 : vector<1x1x256xf32> to vector<1x256xf32>
    %90 = vector.broadcast %87 : vector<1x256xf32> to vector<2x256xf32>
    %91 = arith.mulf %83, %90 : vector<2x256xf32>
    %92 = arith.addf %75, %91 : vector<2x256xf32>
    %93 = vector.broadcast %89 : vector<1x256xf32> to vector<2x256xf32>
    %94 = arith.mulf %85, %93 : vector<2x256xf32>
    %95 = arith.subf %92, %94 : vector<2x256xf32>
    %96 = vector.broadcast %89 : vector<1x256xf32> to vector<2x256xf32>
    %97 = arith.mulf %83, %96 : vector<2x256xf32>
    %98 = arith.addf %81, %97 : vector<2x256xf32>
    %99 = vector.broadcast %87 : vector<1x256xf32> to vector<2x256xf32>
    %100 = arith.mulf %85, %99 : vector<2x256xf32>
    %101 = arith.addf %98, %100 : vector<2x256xf32>
    %c5 = arith.constant 5 : index
    %c0_56 = arith.constant 0 : index
    %c0_57 = arith.constant 0 : index
    %102 = vector.load %arg0[%c5, %c0_56, %c0_57] : memref<8x2x256xf32, #tpu.memory_space<vmem>>, vector<1x2x256xf32>
    %103 = vector.shape_cast %102 : vector<1x2x256xf32> to vector<2x256xf32>
    %c5_58 = arith.constant 5 : index
    %c0_59 = arith.constant 0 : index
    %c0_60 = arith.constant 0 : index
    %104 = vector.load %arg1[%c5_58, %c0_59, %c0_60] : memref<8x2x256xf32, #tpu.memory_space<vmem>>, vector<1x2x256xf32>
    %105 = vector.shape_cast %104 : vector<1x2x256xf32> to vector<2x256xf32>
    %c5_61 = arith.constant 5 : index
    %c0_62 = arith.constant 0 : index
    %c0_63 = arith.constant 0 : index
    %106 = vector.load %arg2[%c5_61, %c0_62, %c0_63] : memref<8x1x256xf32, #tpu.memory_space<vmem>>, vector<1x1x256xf32>
    %107 = vector.shape_cast %106 : vector<1x1x256xf32> to vector<1x256xf32>
    %c5_64 = arith.constant 5 : index
    %c0_65 = arith.constant 0 : index
    %c0_66 = arith.constant 0 : index
    %108 = vector.load %arg3[%c5_64, %c0_65, %c0_66] : memref<8x1x256xf32, #tpu.memory_space<vmem>>, vector<1x1x256xf32>
    %109 = vector.shape_cast %108 : vector<1x1x256xf32> to vector<1x256xf32>
    %110 = vector.broadcast %107 : vector<1x256xf32> to vector<2x256xf32>
    %111 = arith.mulf %103, %110 : vector<2x256xf32>
    %112 = arith.addf %95, %111 : vector<2x256xf32>
    %113 = vector.broadcast %109 : vector<1x256xf32> to vector<2x256xf32>
    %114 = arith.mulf %105, %113 : vector<2x256xf32>
    %115 = arith.subf %112, %114 : vector<2x256xf32>
    %116 = vector.broadcast %109 : vector<1x256xf32> to vector<2x256xf32>
    %117 = arith.mulf %103, %116 : vector<2x256xf32>
    %118 = arith.addf %101, %117 : vector<2x256xf32>
    %119 = vector.broadcast %107 : vector<1x256xf32> to vector<2x256xf32>
    %120 = arith.mulf %105, %119 : vector<2x256xf32>
    %121 = arith.addf %118, %120 : vector<2x256xf32>
    %c6 = arith.constant 6 : index
    %c0_67 = arith.constant 0 : index
    %c0_68 = arith.constant 0 : index
    %122 = vector.load %arg0[%c6, %c0_67, %c0_68] : memref<8x2x256xf32, #tpu.memory_space<vmem>>, vector<1x2x256xf32>
    %123 = vector.shape_cast %122 : vector<1x2x256xf32> to vector<2x256xf32>
    %c6_69 = arith.constant 6 : index
    %c0_70 = arith.constant 0 : index
    %c0_71 = arith.constant 0 : index
    %124 = vector.load %arg1[%c6_69, %c0_70, %c0_71] : memref<8x2x256xf32, #tpu.memory_space<vmem>>, vector<1x2x256xf32>
    %125 = vector.shape_cast %124 : vector<1x2x256xf32> to vector<2x256xf32>
    %c6_72 = arith.constant 6 : index
    %c0_73 = arith.constant 0 : index
    %c0_74 = arith.constant 0 : index
    %126 = vector.load %arg2[%c6_72, %c0_73, %c0_74] : memref<8x1x256xf32, #tpu.memory_space<vmem>>, vector<1x1x256xf32>
    %127 = vector.shape_cast %126 : vector<1x1x256xf32> to vector<1x256xf32>
    %c6_75 = arith.constant 6 : index
    %c0_76 = arith.constant 0 : index
    %c0_77 = arith.constant 0 : index
    %128 = vector.load %arg3[%c6_75, %c0_76, %c0_77] : memref<8x1x256xf32, #tpu.memory_space<vmem>>, vector<1x1x256xf32>
    %129 = vector.shape_cast %128 : vector<1x1x256xf32> to vector<1x256xf32>
    %130 = vector.broadcast %127 : vector<1x256xf32> to vector<2x256xf32>
    %131 = arith.mulf %123, %130 : vector<2x256xf32>
    %132 = arith.addf %115, %131 : vector<2x256xf32>
    %133 = vector.broadcast %129 : vector<1x256xf32> to vector<2x256xf32>
    %134 = arith.mulf %125, %133 : vector<2x256xf32>
    %135 = arith.subf %132, %134 : vector<2x256xf32>
    %136 = vector.broadcast %129 : vector<1x256xf32> to vector<2x256xf32>
    %137 = arith.mulf %123, %136 : vector<2x256xf32>
    %138 = arith.addf %121, %137 : vector<2x256xf32>
    %139 = vector.broadcast %127 : vector<1x256xf32> to vector<2x256xf32>
    %140 = arith.mulf %125, %139 : vector<2x256xf32>
    %141 = arith.addf %138, %140 : vector<2x256xf32>
    %c7 = arith.constant 7 : index
    %c0_78 = arith.constant 0 : index
    %c0_79 = arith.constant 0 : index
    %142 = vector.load %arg0[%c7, %c0_78, %c0_79] : memref<8x2x256xf32, #tpu.memory_space<vmem>>, vector<1x2x256xf32>
    %143 = vector.shape_cast %142 : vector<1x2x256xf32> to vector<2x256xf32>
    %c7_80 = arith.constant 7 : index
    %c0_81 = arith.constant 0 : index
    %c0_82 = arith.constant 0 : index
    %144 = vector.load %arg1[%c7_80, %c0_81, %c0_82] : memref<8x2x256xf32, #tpu.memory_space<vmem>>, vector<1x2x256xf32>
    %145 = vector.shape_cast %144 : vector<1x2x256xf32> to vector<2x256xf32>
    %c7_83 = arith.constant 7 : index
    %c0_84 = arith.constant 0 : index
    %c0_85 = arith.constant 0 : index
    %146 = vector.load %arg2[%c7_83, %c0_84, %c0_85] : memref<8x1x256xf32, #tpu.memory_space<vmem>>, vector<1x1x256xf32>
    %147 = vector.shape_cast %146 : vector<1x1x256xf32> to vector<1x256xf32>
    %c7_86 = arith.constant 7 : index
    %c0_87 = arith.constant 0 : index
    %c0_88 = arith.constant 0 : index
    %148 = vector.load %arg3[%c7_86, %c0_87, %c0_88] : memref<8x1x256xf32, #tpu.memory_space<vmem>>, vector<1x1x256xf32>
    %149 = vector.shape_cast %148 : vector<1x1x256xf32> to vector<1x256xf32>
    %150 = vector.broadcast %147 : vector<1x256xf32> to vector<2x256xf32>
    %151 = arith.mulf %143, %150 : vector<2x256xf32>
    %152 = arith.addf %135, %151 : vector<2x256xf32>
    %153 = vector.broadcast %149 : vector<1x256xf32> to vector<2x256xf32>
    %154 = arith.mulf %145, %153 : vector<2x256xf32>
    %155 = arith.subf %152, %154 : vector<2x256xf32>
    %156 = vector.broadcast %149 : vector<1x256xf32> to vector<2x256xf32>
    %157 = arith.mulf %143, %156 : vector<2x256xf32>
    %158 = arith.addf %141, %157 : vector<2x256xf32>
    %159 = vector.broadcast %147 : vector<1x256xf32> to vector<2x256xf32>
    %160 = arith.mulf %145, %159 : vector<2x256xf32>
    %161 = arith.addf %158, %160 : vector<2x256xf32>
    %c0_89 = arith.constant 0 : index
    %c0_90 = arith.constant 0 : index
    %162 = vector.load %arg4[%c0_89, %c0_90] : memref<2x256xf32, #tpu.memory_space<vmem>>, vector<2x256xf32>
    tpu.vector_store %arg4[%c0_89, %c0_90], %155 {strides = array<i32>} : memref<2x256xf32, #tpu.memory_space<vmem>>, vector<2x256xf32>,
    %c0_91 = arith.constant 0 : index
    %c0_92 = arith.constant 0 : index
    %163 = vector.load %arg5[%c0_91, %c0_92] : memref<2x256xf32, #tpu.memory_space<vmem>>, vector<2x256xf32>
    tpu.vector_store %arg5[%c0_91, %c0_92], %161 {strides = array<i32>} : memref<2x256xf32, #tpu.memory_space<vmem>>, vector<2x256xf32>,
    return
  }
}

</mosaic_0001>

<llo_original>
// kernel: fourier_down_block.6
$region0: #{fourier_down_block.6}
  #allocation0 [shape = 'u32[]', space=smem, size = 0x4, offset = 0x4, fixed_abs, tag = 'smem constant byte address 0x4 - core index']
  #allocation1 [shape = 'u32[72,128]{1,0:T(1,128)}', space=vmem, size = 0x9000, scoped, tag = 'internal scratch']
  %s0 = inlined_call_operand.vmem [shape: f32[8,256], index: 0, kind: input, shape index: {}]
  %s1 = inlined_call_operand.vmem [shape: f32[8,256], index: 1, kind: output, shape index: {}]
  %s2 = sld [smem:[#allocation0]]
  $region37: #{fourier_down_block.6} parent=0
    _
  %s4 = ssub.s32 1, %s2
  %s5 = scalar_select 0, %s4, %s2
  loop: start=0, step=1, limit=4
  $region2: #{fourier_down_block.6} parent=0 // loop_pre_header
    _
  $region3: #{fourier_down_block.6} parent=0 // loop_header
    %s7 = sphi 0, %s11
    %p8 = scmp.ge.s32.totalorder %s7, 4
    %s14 = sphi 0, %s26
    %s15 = sphi 0, %s22
    %s16 = sphi 0, %s14
    %s17 = sphi 0, %s15
    %s18 = sphi 0, %s16
    %s19 = sphi 0, %s17
    %s31 = sphi 0, %s33
    %s34 = sphi 0, %s31
    %s35 = sphi 0, %s34
    %s51 = sphi 0, %s35
    %s59 = sphi 0, %s61
    %s62 = sphi 0, %s59
    %s63 = sphi 0, %s62
    %s79 = sphi 0, %s63
  $region4: #{fourier_down_block.6} parent=0 // loop_header_branch
    %10 = sbr.rel (%p8) target = $region8
  $region5: #{fourier_down_block.6} parent=0 // loop_body
    %s12 = ssub.s32 %s7, 1
    %s13 = ssub.s32 %s7, 2
    %s20 = sadd.s32 1, %s15
    %p21 = scmp.ge.s32.totalorder %s20, 2
    %s22 = scalar_select %p21, 0, %s20
    %s23 = sadd.s32 1, %s14
    %s24 = scalar_select %p21, %s23, %s14
    %p25 = scmp.ge.s32.totalorder %s24, 1
    %s26 = scalar_select %p25, 0, %s24
    %s27 = ssub.s32 %s14, %s26
    %s28 = ssub.s32 %s15, %s22
    %s29 = sor.u32 %s27, %s28
    %p30 = scmp.eq.s32.totalorder %s29, 0
    %s32 = sadd.s32 %s31, 1
    %s33 = scalar_select %p30, %s31, %s32
    %p36 = pneg %p30
    %p37 = scmp.eq.s32.totalorder %s7, 1
    %p38 = por %p36, %p37
    %p39 = scmp.ne.s32.totalorder %s31, %s34
    %p40 = scmp.eq.s32.totalorder %s7, 0
    %p41 = por %p39, %p40
    %p42 = scmp.ne.s32.totalorder %s31, %s34
    %p43 = scmp.eq.s32.totalorder %s12, 1
    %p44 = por %p42, %p43
    %p45 = scmp.ne.s32.totalorder %s34, %s35
    %p46 = scmp.eq.s32.totalorder %s12, 0
    %p47 = por %p45, %p46
    %p48 = scmp.ne.s32.totalorder %s34, %s35
    %p49 = scmp.eq.s32.totalorder %s13, 1
    %p50 = por %p48, %p49
    %p52 = scmp.ne.s32.totalorder %s35, %s51
    %p53 = scmp.eq.s32.totalorder %s13, 0
    %p54 = por %p52, %p53
    %s55 = ssub.s32 %s14, %s26
    %s56 = ssub.s32 %s15, %s22
    %s57 = sor.u32 %s55, %s56
    %p58 = scmp.eq.s32.totalorder %s57, 0
    %s60 = sadd.s32 %s59, 1
    %s61 = scalar_select %p58, %s59, %s60
    %p64 = pneg %p58
    %p65 = scmp.eq.s32.totalorder %s7, 1
    %p66 = por %p64, %p65
    %p67 = scmp.ne.s32.totalorder %s59, %s62
    %p68 = scmp.eq.s32.totalorder %s7, 0
    %p69 = por %p67, %p68
    %p70 = scmp.ne.s32.totalorder %s59, %s62
    %p71 = scmp.eq.s32.totalorder %s12, 1
    %p72 = por %p70, %p71
    %p73 = scmp.ne.s32.totalorder %s62, %s63
    %p74 = scmp.eq.s32.totalorder %s12, 0
    %p75 = por %p73, %p74
    %p76 = scmp.ne.s32.totalorder %s62, %s63
    %p77 = scmp.eq.s32.totalorder %s13, 1
    %p78 = por %p76, %p77
    %p80 = scmp.ne.s32.totalorder %s63, %s79
    %p81 = scmp.eq.s32.totalorder %s13, 0
    %p82 = por %p80, %p81
    %p83 = scmp.le.s32.totalorder 1, %s7
    %p84 = scmp.lt.s32.totalorder %s7, 3
    %p85 = pnand %p83, %p84
    %p86 = pneg %p85
    // Predicated region
    $region9: #{fourier_down_block.6} parent=5 // pred_check
      _
    $region10: #{fourier_down_block.6} parent=5 // pred_check_branch
      %88 = sbr.rel (%p85) target = $region12
    $region11: #{fourier_down_block.6} parent=5 // pred_region
      %s89 = ssub.s32 %s7, 1
    $region12: #{fourier_down_block.6} parent=5 // pred_fallthru
      _
    %p90 = scmp.lt.s32.totalorder %s7, 2
    // Predicated region
    $region13: #{fourier_down_block.6} parent=5 // pred_check
      %p91 = pneg %p90
    $region14: #{fourier_down_block.6} parent=5 // pred_check_branch
      %93 = sbr.rel (%p91) target = $region16
    $region15: #{fourier_down_block.6} parent=5 // pred_region
      // Predicated region
      $region17: #{fourier_down_block.6} parent=15 // pred_check
        %p94 = pneg %p41
      $region18: #{fourier_down_block.6} parent=15 // pred_check_branch
        %96 = sbr.rel (%p94) target = $region20
      $region19: #{fourier_down_block.6} parent=15 // pred_region
        %p97 = scmp.lt.s32.totalorder %s14, 0
        %s98 = scalar_select %p97, %s14, 0
        %p99 = scmp.lt.s32.totalorder %s15, 1
        %s100 = scalar_select %p99, %s15, 1
        %s101 = smul.addr %s98, 2
        %s102 = sadd.s32 %s100, %s101
        %s103 = smul.addr %s102, 8
        %s104 = scalar_lea.vmem %s0, %s103
      $region20: #{fourier_down_block.6} parent=15 // pred_fallthru
        _
    $region16: #{fourier_down_block.6} parent=5 // pred_fallthru
      _
    %p105 = scmp.le.s32.totalorder 1, %s7
    %p106 = scmp.lt.s32.totalorder %s7, 3
    %p107 = pnand %p105, %p106
    %p108 = pneg %p107
    // Predicated region
    $region21: #{fourier_down_block.6} parent=5 // pred_check
      _
    $region22: #{fourier_down_block.6} parent=5 // pred_check_branch
      %110 = sbr.rel (%p107) target = $region24
    $region23: #{fourier_down_block.6} parent=5 // pred_region
      %s111 = ssub.s32 %s7, 1
      %p112 = scmp.lt.s32.totalorder %s16, 0
      %s113 = scalar_select %p112, %s16, 0
      %p114 = scmp.lt.s32.totalorder %s17, 1
      %s115 = scalar_select %p114, %s17, 1
      %s116 = smul.addr %s113, 2
      %s117 = sadd.s32 %s115, %s116
      %s118 = smul.addr %s117, 8
      %s119 = scalar_lea.vmem %s0, %s118
      %p120 = pneg %p47
      %p121 = pneg %p44
      %p122 = pneg %p75
      %p123 = pneg %p72
      %p124 = scmp.lt.s32.totalorder %s16, 0
      %s125 = scalar_select %p124, %s16, 0
      %p126 = scmp.lt.s32.totalorder %s17, 1
      %s127 = scalar_select %p126, %s17, 1
      %s128 = smul.addr %s125, 2
      %s129 = sadd.s32 %s127, %s128
      %s130 = smul.addr %s129, 8
      %s131 = scalar_lea.vmem %s1, %s130
      %p132 = scmp.lt.s32.totalorder %s16, 0
      %s133 = scalar_select %p132, %s16, 0
      %p134 = scmp.lt.s32.totalorder %s17, 1
      %s135 = scalar_select %p134, %s17, 1
      %s136 = smul.addr %s133, 2
      %s137 = sadd.s32 %s135, %s136
      %s138 = smul.addr %s137, 8
      %s139 = scalar_lea.vmem %s0, %s138
      %p140 = scmp.lt.s32.totalorder %s16, 0
      %s141 = scalar_select %p140, %s16, 0
      %p142 = scmp.lt.s32.totalorder %s17, 1
      %s143 = scalar_select %p142, %s17, 1
      %s144 = smul.addr %s141, 2
      %s145 = sadd.s32 %s143, %s144
      %s146 = smul.addr %s145, 8
      %s147 = scalar_lea.vmem %s1, %s146
      %v148 = vld [vmem:[%s139] sm:$0xff]
      %v149 = vmul.f32 %v148, 0.5
      %v150 = vmul.f32 %v148, 0.70710677
      %vm151 = vcmp.ge.f32.partialorder %v150, 0.0
      %v152 = vsel %vm151, 1.0, -1.0
      %v153 = vand.u32 2147483647, %v150
      %v154 = vmul.f32 %v153, 0.3275911
      %v155 = vadd.f32 %v154, 1.0
      %v156 = vrcp.pop %v155
      %v157 = vmul.f32 %v156, 1.0614054
      %v158 = vadd.f32 %v157, -1.4531521
      %v159 = vmul.f32 %v158, %v156
      %v160 = vadd.f32 %v159, 1.4214138
      %v161 = vmul.f32 %v160, %v156
      %v162 = vadd.f32 %v161, -0.28449672
      %v163 = vmul.f32 %v162, %v156
      %v164 = vadd.f32 %v163, 0.2548296
      %v165 = vmul.f32 %v164, %v156
      %v166 = vsub.f32 0.0, %v153
      %v167 = vmul.f32 %v166, %v153
      %v168 = vmul.f32 %v167, 1.442695
      %v169 = vpow.pop %v168
      %v170 = vmul.f32 %v165, %v169
      %v171 = vsub.f32 1.0, %v170
      %v172 = vmul.f32 %v152, %v171
      %v173 = vadd.f32 %v172, 1.0
      %v174 = vmul.f32 %v149, %v173
      %175 = vst [vmem:[%s147] sm:$0xff] %v174
      %p176 = scmp.lt.s32.totalorder %s16, 0
      %s177 = scalar_select %p176, %s16, 0
      %p178 = scmp.lt.s32.totalorder %s17, 1
      %s179 = scalar_select %p178, %s17, 1
      %s180 = smul.addr %s177, 2
      %s181 = sadd.s32 %s179, %s180
      %s182 = smul.addr %s181, 8
      %s183 = scalar_lea.vmem %s1, %s182
      // Predicated region
      $region25: #{fourier_down_block.6} parent=23 // pred_check
        %p184 = pneg %p72
      $region26: #{fourier_down_block.6} parent=23 // pred_check_branch
        %186 = sbr.rel (%p184) target = $region28
      $region27: #{fourier_down_block.6} parent=23 // pred_region
        _
      $region28: #{fourier_down_block.6} parent=23 // pred_fallthru
        _
    $region24: #{fourier_down_block.6} parent=5 // pred_fallthru
      _
    %p187 = scmp.le.s32.totalorder 2, %s7
    // Predicated region
    $region29: #{fourier_down_block.6} parent=5 // pred_check
      %p188 = pneg %p187
    $region30: #{fourier_down_block.6} parent=5 // pred_check_branch
      %190 = sbr.rel (%p188) target = $region32
    $region31: #{fourier_down_block.6} parent=5 // pred_region
      %s191 = ssub.s32 %s7, 2
      // Predicated region
      $region33: #{fourier_down_block.6} parent=31 // pred_check
        %p192 = pneg %p78
      $region34: #{fourier_down_block.6} parent=31 // pred_check_branch
        %194 = sbr.rel (%p192) target = $region36
      $region35: #{fourier_down_block.6} parent=31 // pred_region
        %p195 = scmp.lt.s32.totalorder %s18, 0
        %s196 = scalar_select %p195, %s18, 0
        %p197 = scmp.lt.s32.totalorder %s19, 1
        %s198 = scalar_select %p197, %s19, 1
        %s199 = smul.addr %s196, 2
        %s200 = sadd.s32 %s198, %s199
        %s201 = smul.addr %s200, 8
        %s202 = scalar_lea.vmem %s1, %s201
      $region36: #{fourier_down_block.6} parent=31 // pred_fallthru
        _
    $region32: #{fourier_down_block.6} parent=5 // pred_fallthru
      _
  $region6: #{fourier_down_block.6} parent=0 // loop_footer
    %s11 = sadd.s32 1, %s7
  $region7: #{fourier_down_block.6} parent=0 // loop_footer_branch
    %6 = sbr.rel target = $region3
  $region8: #{fourier_down_block.6} parent=0 // loop_exit
    _

// kernel: tile.24
$region0: #{tile.24}
  %s0 = inlined_call_operand.vmem [shape: f32[4,2,8,32], index: 0, kind: input, shape index: {}]
  %s1 = inlined_call_operand.vmem [shape: f32[4,2,256], index: 1, kind: output, shape index: {}]
  $region1: #{tile.24} parent=0
    #allocation0 [shape = 'u8[32768]{0}', space=vmem, size = 0x8000, scoped, tag = 'scoped mem for output reshape']
    %v2 = vld [vmem:[%s0] ss:$4 sm:$0xff]
    %vm3 = vcmask 261120
    %4 = vst.msk [vmem:[#allocation0] ss:$8 sm:$0x3] %vm3, %v2
    %s5 = scalar_lea.vmem [#allocation0], 4294967281
    %6 = vst.msk [vmem:[%s5] ss:$8 sm:$0xc] %vm3, %v2
    %s7 = scalar_lea.vmem [#allocation0], 4294967280
    %8 = vst.msk [vmem:[%s7] ss:$8 sm:$0x30] %vm3, %v2
    %s9 = scalar_lea.vmem [#allocation0], 4294967265
    %10 = vst.msk [vmem:[%s9] ss:$8 sm:$0xc0] %vm3, %v2
    %s11 = scalar_lea.vmem %s0, 32
    %v12 = vld [vmem:[%s11] ss:$4 sm:$0xff]
    %vm13 = vcmask 261120
    %s14 = scalar_lea.vmem [#allocation0], 32
    %15 = vst.msk [vmem:[%s14] ss:$8 sm:$0x3] %vm13, %v12
    %s16 = scalar_lea.vmem [#allocation0], 17
    %17 = vst.msk [vmem:[%s16] ss:$8 sm:$0xc] %vm13, %v12
    %s18 = scalar_lea.vmem [#allocation0], 16
    %19 = vst.msk [vmem:[%s18] ss:$8 sm:$0x30] %vm13, %v12
    %s20 = scalar_lea.vmem [#allocation0], 1
    %21 = vst.msk [vmem:[%s20] ss:$8 sm:$0xc0] %vm13, %v12
    %s22 = scalar_lea.vmem %s0, 3
    %v23 = vld.sshfl [vmem:[%s22] sm:$0xff pattern:$0xccccc480]
    %s24 = scalar_lea.vmem %s0, 19
    %v25 = vld.sshfl [vmem:[%s24] sm:$0xff pattern:$0xc4800000]
    %vm26 = vcmask 1047556
    %v27 = vsel %vm26, %v25, %v23
    %28 = vrot.lane.b32.xlu0 %v27, 96
    %v29 = vpop.permute.xlu0 %28
    %vm30 = vcmask 1048320
    %31 = vst.msk [vmem:[#allocation0] sm:$0x3] %vm30, %v29
    %s32 = scalar_lea.vmem [#allocation0], 6
    %33 = vst.msk [vmem:[%s32] sm:$0xc] %vm30, %v29
    %s34 = scalar_lea.vmem [#allocation0], 12
    %35 = vst.msk [vmem:[%s34] sm:$0x30] %vm30, %v29
    %s36 = scalar_lea.vmem [#allocation0], 18
    %37 = vst.msk [vmem:[%s36] sm:$0xc0] %vm30, %v29
    %s38 = scalar_lea.vmem %s0, 35
    %v39 = vld.sshfl [vmem:[%s38] sm:$0xff pattern:$0xccccc480]
    %s40 = scalar_lea.vmem %s0, 51
    %v41 = vld.sshfl [vmem:[%s40] sm:$0xff pattern:$0xc4800000]
    %vm42 = vcmask 1047556
    %v43 = vsel %vm42, %v41, %v39
    %44 = vrot.lane.b32.xlu0 %v43, 96
    %v45 = vpop.permute.xlu0 %44
    %vm46 = vcmask 1048320
    %s47 = scalar_lea.vmem [#allocation0], 32
    %48 = vst.msk [vmem:[%s47] sm:$0x3] %vm46, %v45
    %s49 = scalar_lea.vmem [#allocation0], 38
    %50 = vst.msk [vmem:[%s49] sm:$0xc] %vm46, %v45
    %s51 = scalar_lea.vmem [#allocation0], 44
    %52 = vst.msk [vmem:[%s51] sm:$0x30] %vm46, %v45
    %s53 = scalar_lea.vmem [#allocation0], 50
    %54 = vst.msk [vmem:[%s53] sm:$0xc0] %vm46, %v45
    %s55 = scalar_lea.vmem %s0, 2
    %v56 = vld.sshfl [vmem:[%s55] sm:$0xff pattern:$0xccccc480]
    %s57 = scalar_lea.vmem %s0, 18
    %v58 = vld.sshfl [vmem:[%s57] sm:$0xff pattern:$0xc4800000]
    %vm59 = vcmask 1047556
    %v60 = vsel %vm59, %v58, %v56
    %61 = vrot.lane.b32.xlu0 %v60, 64
    %v62 = vpop.permute.xlu0 %61
    %vm63 = vcmask 785920
    %64 = vst.msk [vmem:[#allocation0] sm:$0x3] %vm63, %v62
    %s65 = scalar_lea.vmem [#allocation0], 6
    %66 = vst.msk [vmem:[%s65] sm:$0xc] %vm63, %v62
    %s67 = scalar_lea.vmem [#allocation0], 12
    %68 = vst.msk [vmem:[%s67] sm:$0x30] %vm63, %v62
    %s69 = scalar_lea.vmem [#allocation0], 18
    %70 = vst.msk [vmem:[%s69] sm:$0xc0] %vm63, %v62
    %s71 = scalar_lea.vmem %s0, 34
    %v72 = vld.sshfl [vmem:[%s71] sm:$0xff pattern:$0xccccc480]
    %s73 = scalar_lea.vmem %s0, 50
    %v74 = vld.sshfl [vmem:[%s73] sm:$0xff pattern:$0xc4800000]
    %vm75 = vcmask 1047556
    %v76 = vsel %vm75, %v74, %v72
    %77 = vrot.lane.b32.xlu0 %v76, 64
    %v78 = vpop.permute.xlu0 %77
    %vm79 = vcmask 785920
    %s80 = scalar_lea.vmem [#allocation0], 32
    %81 = vst.msk [vmem:[%s80] sm:$0x3] %vm79, %v78
    %s82 = scalar_lea.vmem [#allocation0], 38
    %83 = vst.msk [vmem:[%s82] sm:$0xc] %vm79, %v78
    %s84 = scalar_lea.vmem [#allocation0], 44
    %85 = vst.msk [vmem:[%s84] sm:$0x30] %vm79, %v78
    %s86 = scalar_lea.vmem [#allocation0], 50
    %87 = vst.msk [vmem:[%s86] sm:$0xc0] %vm79, %v78
    %s88 = scalar_lea.vmem %s0, 1
    %v89 = vld.sshfl [vmem:[%s88] sm:$0xff pattern:$0xccccc480]
    %s90 = scalar_lea.vmem %s0, 17
    %v91 = vld.sshfl [vmem:[%s90] sm:$0xff pattern:$0xc4800000]
    %vm92 = vcmask 1047556
    %v93 = vsel %vm92, %v91, %v89
    %94 = vrot.lane.b32.xlu0 %v93, 32
    %v95 = vpop.permute.xlu0 %94
    %vm96 = vcmask 523520
    %97 = vst.msk [vmem:[#allocation0] sm:$0x3] %vm96, %v95
    %s98 = scalar_lea.vmem [#allocation0], 6
    %99 = vst.msk [vmem:[%s98] sm:$0xc] %vm96, %v95
    %s100 = scalar_lea.vmem [#allocation0], 12
    %101 = vst.msk [vmem:[%s100] sm:$0x30] %vm96, %v95
    %s102 = scalar_lea.vmem [#allocation0], 18
    %103 = vst.msk [vmem:[%s102] sm:$0xc0] %vm96, %v95
    %s104 = scalar_lea.vmem %s0, 33
    %v105 = vld.sshfl [vmem:[%s104] sm:$0xff pattern:$0xccccc480]
    %s106 = scalar_lea.vmem %s0, 49
    %v107 = vld.sshfl [vmem:[%s106] sm:$0xff pattern:$0xc4800000]
    %vm108 = vcmask 1047556
    %v109 = vsel %vm108, %v107, %v105
    %110 = vrot.lane.b32.xlu0 %v109, 32
    %v111 = vpop.permute.xlu0 %110
    %vm112 = vcmask 523520
    %s113 = scalar_lea.vmem [#allocation0], 32
    %114 = vst.msk [vmem:[%s113] sm:$0x3] %vm112, %v111
    %s115 = scalar_lea.vmem [#allocation0], 38
    %116 = vst.msk [vmem:[%s115] sm:$0xc] %vm112, %v111
    %s117 = scalar_lea.vmem [#allocation0], 44
    %118 = vst.msk [vmem:[%s117] sm:$0x30] %vm112, %v111
    %s119 = scalar_lea.vmem [#allocation0], 50
    %120 = vst.msk [vmem:[%s119] sm:$0xc0] %vm112, %v111
    %s122 = ssub.s32 4, 1
    %v123 = vld [vmem:[#allocation0] sm:%s122]
    %s125 = ssub.s32 4, 1
    %126 = vst [vmem:[%s1] sm:%s125] %v123
    %s127 = scalar_lea.vmem [#allocation0], 8
    %v128 = vld [vmem:[%s127] sm:%s122]
    %s130 = ssub.s32 4, 1
    %s131 = scalar_lea.vmem %s1, 2
    %132 = vst [vmem:[%s131] sm:%s130] %v128
    %s133 = scalar_lea.vmem [#allocation0], 16
    %v134 = vld [vmem:[%s133] sm:%s122]
    %s136 = ssub.s32 4, 1
    %s137 = scalar_lea.vmem %s1, 4
    %138 = vst [vmem:[%s137] sm:%s136] %v134
    %s139 = scalar_lea.vmem [#allocation0], 24
    %v140 = vld [vmem:[%s139] sm:%s122]
    %s142 = ssub.s32 4, 1
    %s143 = scalar_lea.vmem %s1, 6
    %144 = vst [vmem:[%s143] sm:%s142] %v140
    %s145 = scalar_lea.vmem [#allocation0], 32
    %v146 = vld [vmem:[%s145] sm:%s122]
    %s148 = ssub.s32 4, 1
    %s149 = scalar_lea.vmem %s1, 8
    %150 = vst [vmem:[%s149] sm:%s148] %v146
    %s151 = scalar_lea.vmem [#allocation0], 40
    %v152 = vld [vmem:[%s151] sm:%s122]
    %s154 = ssub.s32 4, 1
    %s155 = scalar_lea.vmem %s1, 10
    %156 = vst [vmem:[%s155] sm:%s154] %v152
    %s157 = scalar_lea.vmem [#allocation0], 48
    %v158 = vld [vmem:[%s157] sm:%s122]
    %s160 = ssub.s32 4, 1
    %s161 = scalar_lea.vmem %s1, 12
    %162 = vst [vmem:[%s161] sm:%s160] %v158
    %s163 = scalar_lea.vmem [#allocation0], 56
    %v164 = vld [vmem:[%s163] sm:%s122]
    %s166 = ssub.s32 4, 1
    %s167 = scalar_lea.vmem %s1, 14
    %168 = vst [vmem:[%s167] sm:%s166] %v164

// kernel: fourier_down_block.7
$region0: #{fourier_down_block.7}
  #allocation0 [shape = 'u32[]', space=smem, size = 0x4, offset = 0x4, fixed_abs, tag = 'smem constant byte address 0x4 - core index']
  #allocation1 [shape = 'u32[72,128]{1,0:T(1,128)}', space=vmem, size = 0x9000, scoped, tag = 'internal scratch']
  %s0 = inlined_call_operand.vmem [shape: f32[4,2,256], index: 0, kind: input, shape index: {}]
  %s1 = inlined_call_operand.vmem [shape: f32[4,2,256], index: 1, kind: input, shape index: {}]
  %s2 = inlined_call_operand.vmem [shape: f32[4,1,256], index: 2, kind: input, shape index: {}]
  %s3 = inlined_call_operand.vmem [shape: f32[4,1,256], index: 3, kind: input, shape index: {}]
  %s4 = inlined_call_operand.vmem [shape: f32[2,256], index: 4, kind: output, shape index: {0}]
  %s5 = inlined_call_operand.vmem [shape: f32[2,256], index: 5, kind: output, shape index: {1}]
  %6 = xla_tuple %s4, %s5
  %s7 = sld [smem:[#allocation0]]
  $region34: #{fourier_down_block.7} parent=0
    _
  %s9 = ssub.s32 1, %s7
  %s10 = scalar_select 0, %s9, %s7
  // Predicated region
  $region2: #{fourier_down_block.7} parent=0 // pred_check
    _
  $region3: #{fourier_down_block.7} parent=0 // pred_check_branch
    %12 = sbr.rel (0) target = $region5
  $region4: #{fourier_down_block.7} parent=0 // pred_region
    _
  $region5: #{fourier_down_block.7} parent=0 // pred_fallthru
    _
  // Predicated region
  $region6: #{fourier_down_block.7} parent=0 // pred_check
    _
  $region7: #{fourier_down_block.7} parent=0 // pred_check_branch
    %14 = sbr.rel (0) target = $region9
  $region8: #{fourier_down_block.7} parent=0 // pred_region
    _
  $region9: #{fourier_down_block.7} parent=0 // pred_fallthru
    _
  // Predicated region
  $region10: #{fourier_down_block.7} parent=0 // pred_check
    _
  $region11: #{fourier_down_block.7} parent=0 // pred_check_branch
    %16 = sbr.rel (0) target = $region13
  $region12: #{fourier_down_block.7} parent=0 // pred_region
    _
  $region13: #{fourier_down_block.7} parent=0 // pred_fallthru
    _
  // Predicated region
  $region14: #{fourier_down_block.7} parent=0 // pred_check
    _
  $region15: #{fourier_down_block.7} parent=0 // pred_check_branch
    %18 = sbr.rel (0) target = $region17
  $region16: #{fourier_down_block.7} parent=0 // pred_region
    _
  $region17: #{fourier_down_block.7} parent=0 // pred_fallthru
    _
  %v19 = vld [vmem:[%s0] sm:$0xf]
  %v20 = vld [vmem:[%s1] sm:$0xf]
  %v21 = vld [vmem:[%s2] sm:$0x3]
  %v22 = vld [vmem:[%s3] sm:$0x3]
  %v24 = vperm.slane %v21, 0
  %v25 = vperm.slane %v21, 1
  %v26 = vrot.slane %v25, 6
  %vm27 = vcmask 1041408
  %v28 = vsel %vm27, %v24, %v26
  %v30 = vmul.f32 %v19, %v28
  %v31 = vadd.f32 %v30, 0.0
  %v33 = vperm.slane %v22, 0
  %v34 = vperm.slane %v22, 1
  %v35 = vrot.slane %v34, 6
  %v36 = vsel %vm27, %v33, %v35
  %v38 = vmul.f32 %v20, %v36
  %v39 = vsub.f32 %v31, %v38
  %v40 = vmul.f32 %v19, %v36
  %v41 = vadd.f32 %v40, 0.0
  %v42 = vmul.f32 %v20, %v28
  %v43 = vadd.f32 %v41, %v42
  %s44 = scalar_lea.vmem %s0, 4
  %v45 = vld [vmem:[%s44] sm:$0xf]
  %s46 = scalar_lea.vmem %s1, 4
  %v47 = vld [vmem:[%s46] sm:$0xf]
  %s48 = scalar_lea.vmem %s2, 2
  %v49 = vld [vmem:[%s48] sm:$0x3]
  %s50 = scalar_lea.vmem %s3, 2
  %v51 = vld [vmem:[%s50] sm:$0x3]
  %v53 = vperm.slane %v49, 0
  %v54 = vperm.slane %v49, 1
  %v55 = vrot.slane %v54, 6
  %v56 = vsel %vm27, %v53, %v55
  %v58 = vmul.f32 %v45, %v56
  %v59 = vadd.f32 %v39, %v58
  %v61 = vperm.slane %v51, 0
  %v62 = vperm.slane %v51, 1
  %v63 = vrot.slane %v62, 6
  %v64 = vsel %vm27, %v61, %v63
  %v66 = vmul.f32 %v47, %v64
  %v67 = vsub.f32 %v59, %v66
  %v68 = vmul.f32 %v45, %v64
  %v69 = vadd.f32 %v43, %v68
  %v70 = vmul.f32 %v47, %v56
  %v71 = vadd.f32 %v69, %v70
  %s72 = scalar_lea.vmem %s0, 8
  %v73 = vld [vmem:[%s72] sm:$0xf]
  %s74 = scalar_lea.vmem %s1, 8
  %v75 = vld [vmem:[%s74] sm:$0xf]
  %s76 = scalar_lea.vmem %s2, 4
  %v77 = vld [vmem:[%s76] sm:$0x3]
  %s78 = scalar_lea.vmem %s3, 4
  %v79 = vld [vmem:[%s78] sm:$0x3]
  %v81 = vperm.slane %v77, 0
  %v82 = vperm.slane %v77, 1
  %v83 = vrot.slane %v82, 6
  %v84 = vsel %vm27, %v81, %v83
  %v86 = vmul.f32 %v73, %v84
  %v87 = vadd.f32 %v67, %v86
  %v89 = vperm.slane %v79, 0
  %v90 = vperm.slane %v79, 1
  %v91 = vrot.slane %v90, 6
  %v92 = vsel %vm27, %v89, %v91
  %v94 = vmul.f32 %v75, %v92
  %v95 = vsub.f32 %v87, %v94
  %v96 = vmul.f32 %v73, %v92
  %v97 = vadd.f32 %v71, %v96
  %v98 = vmul.f32 %v75, %v84
  %v99 = vadd.f32 %v97, %v98
  %s100 = scalar_lea.vmem %s0, 12
  %v101 = vld [vmem:[%s100] sm:$0xf]
  %s102 = scalar_lea.vmem %s1, 12
  %v103 = vld [vmem:[%s102] sm:$0xf]
  %s104 = scalar_lea.vmem %s2, 6
  %v105 = vld [vmem:[%s104] sm:$0x3]
  %s106 = scalar_lea.vmem %s3, 6
  %v107 = vld [vmem:[%s106] sm:$0x3]
  %v109 = vperm.slane %v105, 0
  %v110 = vperm.slane %v105, 1
  %v111 = vrot.slane %v110, 6
  %v112 = vsel %vm27, %v109, %v111
  %v114 = vmul.f32 %v101, %v112
  %v115 = vadd.f32 %v95, %v114
  %v117 = vperm.slane %v107, 0
  %v118 = vperm.slane %v107, 1
  %v119 = vrot.slane %v118, 6
  %v120 = vsel %vm27, %v117, %v119
  %v122 = vmul.f32 %v103, %v120
  %v123 = vsub.f32 %v115, %v122
  %v124 = vmul.f32 %v101, %v120
  %v125 = vadd.f32 %v99, %v124
  %v126 = vmul.f32 %v103, %v112
  %v127 = vadd.f32 %v125, %v126
  %128 = vst [vmem:[%s4] sm:$0xf] %v123
  %129 = vst [vmem:[%s5] sm:$0xf] %v127
  // Predicated region
  $region18: #{fourier_down_block.7} parent=0 // pred_check
    _
  $region19: #{fourier_down_block.7} parent=0 // pred_check_branch
    %131 = sbr.rel (0) target = $region21
  $region20: #{fourier_down_block.7} parent=0 // pred_region
    _
  $region21: #{fourier_down_block.7} parent=0 // pred_fallthru
    _
  // Predicated region
  $region22: #{fourier_down_block.7} parent=0 // pred_check
    _
  $region23: #{fourier_down_block.7} parent=0 // pred_check_branch
    %133 = sbr.rel (0) target = $region25
  $region24: #{fourier_down_block.7} parent=0 // pred_region
    _
  $region25: #{fourier_down_block.7} parent=0 // pred_fallthru
    _
  // Predicated region
  $region26: #{fourier_down_block.7} parent=0 // pred_check
    _
  $region27: #{fourier_down_block.7} parent=0 // pred_check_branch
    %135 = sbr.rel (0) target = $region29
  $region28: #{fourier_down_block.7} parent=0 // pred_region
    _
  $region29: #{fourier_down_block.7} parent=0 // pred_fallthru
    _
  // Predicated region
  $region30: #{fourier_down_block.7} parent=0 // pred_check
    _
  $region31: #{fourier_down_block.7} parent=0 // pred_check_branch
    %137 = sbr.rel (0) target = $region33
  $region32: #{fourier_down_block.7} parent=0 // pred_region
    _
  $region33: #{fourier_down_block.7} parent=0 // pred_fallthru
    _

// kernel: reverse.5
$region0: #{reverse.5}
  %s0 = inlined_call_operand.vmem [shape: f32[8,2,16,7], index: 0, kind: input, shape index: {}]
  %s1 = inlined_call_operand.vmem [shape: f32[8,2,16,7], index: 1, kind: output, shape index: {}]
  $region1: #{reverse.5} parent=0
    #allocation0 [shape = 'u8[131072]{0}', space=vmem, size = 0x20000, scoped, tag = 'operand span for operand 0']
    #allocation1 [shape = 'u8[65536]{0}', space=vmem, size = 0x10000, scoped, tag = 'operand span for operand 1']
    %s2 = scalar_lea.vmem [#allocation0], 8
    // Predicated region
    $region2: #{reverse.5} parent=1 // pred_check
      _
    $region3: #{reverse.5} parent=1 // pred_check_branch
      %4 = sbr.rel (0) target = $region5
    $region4: #{reverse.5} parent=1 // pred_region
      // Predicated region
      $region6: #{reverse.5} parent=4 // pred_check
        _
      $region7: #{reverse.5} parent=4 // pred_check_branch
        %6 = sbr.rel (0) target = $region9
      $region8: #{reverse.5} parent=4 // pred_region
        // Predicated region
        $region21: #{reverse.5} parent=8 // pred_check
          _
        $region22: #{reverse.5} parent=8 // pred_check_branch
          %52 = sbr.rel (0) target = $region24
        $region23: #{reverse.5} parent=8 // pred_region
          loop: start=0, step=1, limit=1
          $region25: #{reverse.5} parent=23 // loop_pre_header
            _
          $region26: #{reverse.5} parent=23 // loop_header
            %s54 = sphi 0, %s58
            %p55 = scmp.ge.s32.totalorder %s54, 1
            %s59 = sphi %s0, %s0
            %s60 = sphi %s2, %s2
          $region27: #{reverse.5} parent=23 // loop_header_branch
            %57 = sbr.rel (%p55) target = $region31
          $region28: #{reverse.5} parent=23 // loop_body
            %v61 = vld [vmem:[%s59] sm:$0xff]
            %62 = vst [vmem:[%s60] sm:$0xff] %v61
            %v63 = vld [vmem:[%s59 + $0x8] sm:$0xff]
            %64 = vst [vmem:[%s60 + $0x10] sm:$0xff] %v63
            %v65 = vld [vmem:[%s59 + $0x10] sm:$0xff]
            %66 = vst [vmem:[%s60 + $0x20] sm:$0xff] %v65
            %v67 = vld [vmem:[%s59 + $0x18] sm:$0xff]
            %68 = vst [vmem:[%s60 + $0x30] sm:$0xff] %v67
            %v69 = vld [vmem:[%s59 + $0x20] sm:$0xff]
            %70 = vst [vmem:[%s60 + $0x40] sm:$0xff] %v69
            %v71 = vld [vmem:[%s59 + $0x28] sm:$0xff]
            %72 = vst [vmem:[%s60 + $0x50] sm:$0xff] %v71
            %v73 = vld [vmem:[%s59 + $0x30] sm:$0xff]
            %74 = vst [vmem:[%s60 + $0x60] sm:$0xff] %v73
            %v75 = vld [vmem:[%s59 + $0x38] sm:$0xff]
            %76 = vst [vmem:[%s60 + $0x70] sm:$0xff] %v75
            %v77 = vld [vmem:[%s59 + $0x40] sm:$0xff]
            %78 = vst [vmem:[%s60 + $0x80] sm:$0xff] %v77
            %v79 = vld [vmem:[%s59 + $0x48] sm:$0xff]
            %80 = vst [vmem:[%s60 + $0x90] sm:$0xff] %v79
            %v81 = vld [vmem:[%s59 + $0x50] sm:$0xff]
            %82 = vst [vmem:[%s60 + $0xa0] sm:$0xff] %v81
            %v83 = vld [vmem:[%s59 + $0x58] sm:$0xff]
            %84 = vst [vmem:[%s60 + $0xb0] sm:$0xff] %v83
            %v85 = vld [vmem:[%s59 + $0x60] sm:$0xff]
            %86 = vst [vmem:[%s60 + $0xc0] sm:$0xff] %v85
            %v87 = vld [vmem:[%s59 + $0x68] sm:$0xff]
            %88 = vst [vmem:[%s60 + $0xd0] sm:$0xff] %v87
            %v89 = vld [vmem:[%s59 + $0x70] sm:$0xff]
            %90 = vst [vmem:[%s60 + $0xe0] sm:$0xff] %v89
            %v91 = vld [vmem:[%s59 + $0x78] sm:$0xff]
            %92 = vst [vmem:[%s60 + $0xf0] sm:$0xff] %v91
          $region29: #{reverse.5} parent=23 // loop_footer
            %s58 = sadd.s32 1, %s54
          $region30: #{reverse.5} parent=23 // loop_footer_branch
            %53 = sbr.rel target = $region26
          $region31: #{reverse.5} parent=23 // loop_exit
            _
        $region24: #{reverse.5} parent=8 // pred_fallthru
          _
        // Predicated region
        $region32: #{reverse.5} parent=8 // pred_check
          _
        $region33: #{reverse.5} parent=8 // pred_check_branch
          %94 = sbr.rel target = $region35
        $region34: #{reverse.5} parent=8 // pred_region
          _
        $region35: #{reverse.5} parent=8 // pred_fallthru
          _
      $region9: #{reverse.5} parent=4 // pred_fallthru
        _
      // Predicated region
      $region10: #{reverse.5} parent=4 // pred_check
        _
      $region11: #{reverse.5} parent=4 // pred_check_branch
        %8 = sbr.rel target = $region13
      $region12: #{reverse.5} parent=4 // pred_region
        %s10 = ssub.s32 256, 1
        loop: start=0, step=1, limit=1
        $region14: #{reverse.5} parent=12 // loop_pre_header
          _
        $region15: #{reverse.5} parent=12 // loop_header
          %s12 = sphi 0, %s16
          %p13 = scmp.ge.s32.totalorder %s12, 1
          %s17 = sphi %s0, %s0
          %s18 = sphi %s2, %s2
        $region16: #{reverse.5} parent=12 // loop_header_branch
          %15 = sbr.rel (%p13) target = $region20
        $region17: #{reverse.5} parent=12 // loop_body
          %v19 = vld [vmem:[%s17] sm:%s10]
          %20 = vst [vmem:[%s18] sm:%s10] %v19
          %v21 = vld [vmem:[%s17 + $0x8] sm:%s10]
          %22 = vst [vmem:[%s18 + $0x10] sm:%s10] %v21
          %v23 = vld [vmem:[%s17 + $0x10] sm:%s10]
          %24 = vst [vmem:[%s18 + $0x20] sm:%s10] %v23
          %v25 = vld [vmem:[%s17 + $0x18] sm:%s10]
          %26 = vst [vmem:[%s18 + $0x30] sm:%s10] %v25
          %v27 = vld [vmem:[%s17 + $0x20] sm:%s10]
          %28 = vst [vmem:[%s18 + $0x40] sm:%s10] %v27
          %v29 = vld [vmem:[%s17 + $0x28] sm:%s10]
          %30 = vst [vmem:[%s18 + $0x50] sm:%s10] %v29
          %v31 = vld [vmem:[%s17 + $0x30] sm:%s10]
          %32 = vst [vmem:[%s18 + $0x60] sm:%s10] %v31
          %v33 = vld [vmem:[%s17 + $0x38] sm:%s10]
          %34 = vst [vmem:[%s18 + $0x70] sm:%s10] %v33
          %v35 = vld [vmem:[%s17 + $0x40] sm:%s10]
          %36 = vst [vmem:[%s18 + $0x80] sm:%s10] %v35
          %v37 = vld [vmem:[%s17 + $0x48] sm:%s10]
          %38 = vst [vmem:[%s18 + $0x90] sm:%s10] %v37
          %v39 = vld [vmem:[%s17 + $0x50] sm:%s10]
          %40 = vst [vmem:[%s18 + $0xa0] sm:%s10] %v39
          %v41 = vld [vmem:[%s17 + $0x58] sm:%s10]
          %42 = vst [vmem:[%s18 + $0xb0] sm:%s10] %v41
          %v43 = vld [vmem:[%s17 + $0x60] sm:%s10]
          %44 = vst [vmem:[%s18 + $0xc0] sm:%s10] %v43
          %v45 = vld [vmem:[%s17 + $0x68] sm:%s10]
          %46 = vst [vmem:[%s18 + $0xd0] sm:%s10] %v45
          %v47 = vld [vmem:[%s17 + $0x70] sm:%s10]
          %48 = vst [vmem:[%s18 + $0xe0] sm:%s10] %v47
          %v49 = vld [vmem:[%s17 + $0x78] sm:%s10]
          %50 = vst [vmem:[%s18 + $0xf0] sm:%s10] %v49
        $region18: #{reverse.5} parent=12 // loop_footer
          %s16 = sadd.s32 1, %s12
        $region19: #{reverse.5} parent=12 // loop_footer_branch
          %11 = sbr.rel target = $region15
        $region20: #{reverse.5} parent=12 // loop_exit
          _
      $region13: #{reverse.5} parent=4 // pred_fallthru
        _
    $region5: #{reverse.5} parent=1 // pred_fallthru
      _
    %95 = vnop
    %s96 = scalar_lea.vmem [#allocation0], 7
    %v97 = vld [vmem:[%s96] ss:$-1 sm:$0xff]
    %v98 = vrot.slane %v97, 1
    %99 = vst [vmem:[#allocation1] sm:$0xff] %v98
    %s100 = scalar_lea.vmem [#allocation0], 8
    %s101 = scalar_lea.vmem %s100, 7 [#allocation0]
    %v102 = vld [vmem:[%s101] ss:$-1 sm:$0xff]
    %v103 = vrot.slane %v102, 1
    %v104 = vlaneseq
    %v105 = vshrl.u32 %v104, 7
    %vm106 = vcmp.lt.s32.totalorder %v105, 7
    %107 = vst.msk [vmem:[#allocation1] sm:$0xff] %vm106, %v103
    %s108 = scalar_lea.vmem [#allocation1], 8
    %s109 = scalar_lea.vmem [#allocation0], 16
    %s110 = scalar_lea.vmem %s109, 7 [#allocation0]
    %v111 = vld [vmem:[%s110] ss:$-1 sm:$0xff]
    %v112 = vrot.slane %v111, 1
    %113 = vst [vmem:[%s108] sm:$0xff] %v112
    %s114 = scalar_lea.vmem %s109, 8 [#allocation0]
    %s115 = scalar_lea.vmem %s114, 7 [#allocation0]
    %v116 = vld [vmem:[%s115] ss:$-1 sm:$0xff]
    %v117 = vrot.slane %v116, 1
    %v118 = vlaneseq
    %v119 = vshrl.u32 %v118, 7
    %vm120 = vcmp.lt.s32.totalorder %v119, 7
    %121 = vst.msk [vmem:[%s108] sm:$0xff] %vm120, %v117
    %s122 = scalar_lea.vmem [#allocation1], 16
    %s123 = scalar_lea.vmem [#allocation0], 32
    %s124 = scalar_lea.vmem %s123, 7 [#allocation0]
    %v125 = vld [vmem:[%s124] ss:$-1 sm:$0xff]
    %v126 = vrot.slane %v125, 1
    %127 = vst [vmem:[%s122] sm:$0xff] %v126
    %s128 = scalar_lea.vmem %s123, 8 [#allocation0]
    %s129 = scalar_lea.vmem %s128, 7 [#allocation0]
    %v130 = vld [vmem:[%s129] ss:$-1 sm:$0xff]
    %v131 = vrot.slane %v130, 1
    %v132 = vlaneseq
    %v133 = vshrl.u32 %v132, 7
    %vm134 = vcmp.lt.s32.totalorder %v133, 7
    %135 = vst.msk [vmem:[%s122] sm:$0xff] %vm134, %v131
    %s136 = scalar_lea.vmem [#allocation1], 24
    %s137 = scalar_lea.vmem [#allocation0], 48
    %s138 = scalar_lea.vmem %s137, 7 [#allocation0]
    %v139 = vld [vmem:[%s138] ss:$-1 sm:$0xff]
    %v140 = vrot.slane %v139, 1
    %141 = vst [vmem:[%s136] sm:$0xff] %v140
    %s142 = scalar_lea.vmem %s137, 8 [#allocation0]
    %s143 = scalar_lea.vmem %s142, 7 [#allocation0]
    %v144 = vld [vmem:[%s143] ss:$-1 sm:$0xff]
    %v145 = vrot.slane %v144, 1
    %v146 = vlaneseq
    %v147 = vshrl.u32 %v146, 7
    %vm148 = vcmp.lt.s32.totalorder %v147, 7
    %149 = vst.msk [vmem:[%s136] sm:$0xff] %vm148, %v145
    %s150 = scalar_lea.vmem [#allocation1], 32
    %s151 = scalar_lea.vmem [#allocation0], 64
    %s152 = scalar_lea.vmem %s151, 7 [#allocation0]
    %v153 = vld [vmem:[%s152] ss:$-1 sm:$0xff]
    %v154 = vrot.slane %v153, 1
    %155 = vst [vmem:[%s150] sm:$0xff] %v154
    %s156 = scalar_lea.vmem %s151, 8 [#allocation0]
    %s157 = scalar_lea.vmem %s156, 7 [#allocation0]
    %v158 = vld [vmem:[%s157] ss:$-1 sm:$0xff]
    %v159 = vrot.slane %v158, 1
    %v160 = vlaneseq
    %v161 = vshrl.u32 %v160, 7
    %vm162 = vcmp.lt.s32.totalorder %v161, 7
    %163 = vst.msk [vmem:[%s150] sm:$0xff] %vm162, %v159
    %s164 = scalar_lea.vmem [#allocation1], 40
    %s165 = scalar_lea.vmem [#allocation0], 80
    %s166 = scalar_lea.vmem %s165, 7 [#allocation0]
    %v167 = vld [vmem:[%s166] ss:$-1 sm:$0xff]
    %v168 = vrot.slane %v167, 1
    %169 = vst [vmem:[%s164] sm:$0xff] %v168
    %s170 = scalar_lea.vmem %s165, 8 [#allocation0]
    %s171 = scalar_lea.vmem %s170, 7 [#allocation0]
    %v172 = vld [vmem:[%s171] ss:$-1 sm:$0xff]
    %v173 = vrot.slane %v172, 1
    %v174 = vlaneseq
    %v175 = vshrl.u32 %v174, 7
    %vm176 = vcmp.lt.s32.totalorder %v175, 7
    %177 = vst.msk [vmem:[%s164] sm:$0xff] %vm176, %v173
    %s178 = scalar_lea.vmem [#allocation1], 48
    %s179 = scalar_lea.vmem [#allocation0], 96
    %s180 = scalar_lea.vmem %s179, 7 [#allocation0]
    %v181 = vld [vmem:[%s180] ss:$-1 sm:$0xff]
    %v182 = vrot.slane %v181, 1
    %183 = vst [vmem:[%s178] sm:$0xff] %v182
    %s184 = scalar_lea.vmem %s179, 8 [#allocation0]
    %s185 = scalar_lea.vmem %s184, 7 [#allocation0]
    %v186 = vld [vmem:[%s185] ss:$-1 sm:$0xff]
    %v187 = vrot.slane %v186, 1
    %v188 = vlaneseq
    %v189 = vshrl.u32 %v188, 7
    %vm190 = vcmp.lt.s32.totalorder %v189, 7
    %191 = vst.msk [vmem:[%s178] sm:$0xff] %vm190, %v187
    %s192 = scalar_lea.vmem [#allocation1], 56
    %s193 = scalar_lea.vmem [#allocation0], 112
    %s194 = scalar_lea.vmem %s193, 7 [#allocation0]
    %v195 = vld [vmem:[%s194] ss:$-1 sm:$0xff]
    %v196 = vrot.slane %v195, 1
    %197 = vst [vmem:[%s192] sm:$0xff] %v196
    %s198 = scalar_lea.vmem %s193, 8 [#allocation0]
    %s199 = scalar_lea.vmem %s198, 7 [#allocation0]
    %v200 = vld [vmem:[%s199] ss:$-1 sm:$0xff]
    %v201 = vrot.slane %v200, 1
    %v202 = vlaneseq
    %v203 = vshrl.u32 %v202, 7
    %vm204 = vcmp.lt.s32.totalorder %v203, 7
    %205 = vst.msk [vmem:[%s192] sm:$0xff] %vm204, %v201
    %s206 = scalar_lea.vmem [#allocation1], 64
    %s207 = scalar_lea.vmem [#allocation0], 128
    %s208 = scalar_lea.vmem %s207, 7 [#allocation0]
    %v209 = vld [vmem:[%s208] ss:$-1 sm:$0xff]
    %v210 = vrot.slane %v209, 1
    %211 = vst [vmem:[%s206] sm:$0xff] %v210
    %s212 = scalar_lea.vmem %s207, 8 [#allocation0]
    %s213 = scalar_lea.vmem %s212, 7 [#allocation0]
    %v214 = vld [vmem:[%s213] ss:$-1 sm:$0xff]
    %v215 = vrot.slane %v214, 1
    %v216 = vlaneseq
    %v217 = vshrl.u32 %v216, 7
    %vm218 = vcmp.lt.s32.totalorder %v217, 7
    %219 = vst.msk [vmem:[%s206] sm:$0xff] %vm218, %v215
    %s220 = scalar_lea.vmem [#allocation1], 72
    %s221 = scalar_lea.vmem [#allocation0], 144
    %s222 = scalar_lea.vmem %s221, 7 [#allocation0]
    %v223 = vld [vmem:[%s222] ss:$-1 sm:$0xff]
    %v224 = vrot.slane %v223, 1
    %225 = vst [vmem:[%s220] sm:$0xff] %v224
    %s226 = scalar_lea.vmem %s221, 8 [#allocation0]
    %s227 = scalar_lea.vmem %s226, 7 [#allocation0]
    %v228 = vld [vmem:[%s227] ss:$-1 sm:$0xff]
    %v229 = vrot.slane %v228, 1
    %v230 = vlaneseq
    %v231 = vshrl.u32 %v230, 7
    %vm232 = vcmp.lt.s32.totalorder %v231, 7
    %233 = vst.msk [vmem:[%s220] sm:$0xff] %vm232, %v229
    %s234 = scalar_lea.vmem [#allocation1], 80
    %s235 = scalar_lea.vmem [#allocation0], 160
    %s236 = scalar_lea.vmem %s235, 7 [#allocation0]
    %v237 = vld [vmem:[%s236] ss:$-1 sm:$0xff]
    %v238 = vrot.slane %v237, 1
    %239 = vst [vmem:[%s234] sm:$0xff] %v238
    %s240 = scalar_lea.vmem %s235, 8 [#allocation0]
    %s241 = scalar_lea.vmem %s240, 7 [#allocation0]
    %v242 = vld [vmem:[%s241] ss:$-1 sm:$0xff]
    %v243 = vrot.slane %v242, 1
    %v244 = vlaneseq
    %v245 = vshrl.u32 %v244, 7
    %vm246 = vcmp.lt.s32.totalorder %v245, 7
    %247 = vst.msk [vmem:[%s234] sm:$0xff] %vm246, %v243
    %s248 = scalar_lea.vmem [#allocation1], 88
    %s249 = scalar_lea.vmem [#allocation0], 176
    %s250 = scalar_lea.vmem %s249, 7 [#allocation0]
    %v251 = vld [vmem:[%s250] ss:$-1 sm:$0xff]
    %v252 = vrot.slane %v251, 1
    %253 = vst [vmem:[%s248] sm:$0xff] %v252
    %s254 = scalar_lea.vmem %s249, 8 [#allocation0]
    %s255 = scalar_lea.vmem %s254, 7 [#allocation0]
    %v256 = vld [vmem:[%s255] ss:$-1 sm:$0xff]
    %v257 = vrot.slane %v256, 1
    %v258 = vlaneseq
    %v259 = vshrl.u32 %v258, 7
    %vm260 = vcmp.lt.s32.totalorder %v259, 7
    %261 = vst.msk [vmem:[%s248] sm:$0xff] %vm260, %v257
    %s262 = scalar_lea.vmem [#allocation1], 96
    %s263 = scalar_lea.vmem [#allocation0], 192
    %s264 = scalar_lea.vmem %s263, 7 [#allocation0]
    %v265 = vld [vmem:[%s264] ss:$-1 sm:$0xff]
    %v266 = vrot.slane %v265, 1
    %267 = vst [vmem:[%s262] sm:$0xff] %v266
    %s268 = scalar_lea.vmem %s263, 8 [#allocation0]
    %s269 = scalar_lea.vmem %s268, 7 [#allocation0]
    %v270 = vld [vmem:[%s269] ss:$-1 sm:$0xff]
    %v271 = vrot.slane %v270, 1
    %v272 = vlaneseq
    %v273 = vshrl.u32 %v272, 7
    %vm274 = vcmp.lt.s32.totalorder %v273, 7
    %275 = vst.msk [vmem:[%s262] sm:$0xff] %vm274, %v271
    %s276 = scalar_lea.vmem [#allocation1], 104
    %s277 = scalar_lea.vmem [#allocation0], 208
    %s278 = scalar_lea.vmem %s277, 7 [#allocation0]
    %v279 = vld [vmem:[%s278] ss:$-1 sm:$0xff]
    %v280 = vrot.slane %v279, 1
    %281 = vst [vmem:[%s276] sm:$0xff] %v280
    %s282 = scalar_lea.vmem %s277, 8 [#allocation0]
    %s283 = scalar_lea.vmem %s282, 7 [#allocation0]
    %v284 = vld [vmem:[%s283] ss:$-1 sm:$0xff]
    %v285 = vrot.slane %v284, 1
    %v286 = vlaneseq
    %v287 = vshrl.u32 %v286, 7
    %vm288 = vcmp.lt.s32.totalorder %v287, 7
    %289 = vst.msk [vmem:[%s276] sm:$0xff] %vm288, %v285
    %s290 = scalar_lea.vmem [#allocation1], 112
    %s291 = scalar_lea.vmem [#allocation0], 224
    %s292 = scalar_lea.vmem %s291, 7 [#allocation0]
    %v293 = vld [vmem:[%s292] ss:$-1 sm:$0xff]
    %v294 = vrot.slane %v293, 1
    %295 = vst [vmem:[%s290] sm:$0xff] %v294
    %s296 = scalar_lea.vmem %s291, 8 [#allocation0]
    %s297 = scalar_lea.vmem %s296, 7 [#allocation0]
    %v298 = vld [vmem:[%s297] ss:$-1 sm:$0xff]
    %v299 = vrot.slane %v298, 1
    %v300 = vlaneseq
    %v301 = vshrl.u32 %v300, 7
    %vm302 = vcmp.lt.s32.totalorder %v301, 7
    %303 = vst.msk [vmem:[%s290] sm:$0xff] %vm302, %v299
    %s304 = scalar_lea.vmem [#allocation1], 120
    %s305 = scalar_lea.vmem [#allocation0], 240
    %s306 = scalar_lea.vmem %s305, 7 [#allocation0]
    %v307 = vld [vmem:[%s306] ss:$-1 sm:$0xff]
    %v308 = vrot.slane %v307, 1
    %309 = vst [vmem:[%s304] sm:$0xff] %v308
    %s310 = scalar_lea.vmem %s305, 8 [#allocation0]
    %s311 = scalar_lea.vmem %s310, 7 [#allocation0]
    %v312 = vld [vmem:[%s311] ss:$-1 sm:$0xff]
    %v313 = vrot.slane %v312, 1
    %v314 = vlaneseq
    %v315 = vshrl.u32 %v314, 7
    %vm316 = vcmp.lt.s32.totalorder %v315, 7
    %317 = vst.msk [vmem:[%s304] sm:$0xff] %vm316, %v313
    // Predicated region
    $region36: #{reverse.5} parent=1 // pred_check
      _
    $region37: #{reverse.5} parent=1 // pred_check_branch
      %319 = sbr.rel (0) target = $region39
    $region38: #{reverse.5} parent=1 // pred_region
      // Predicated region
      $region40: #{reverse.5} parent=38 // pred_check
        _
      $region41: #{reverse.5} parent=38 // pred_check_branch
        %321 = sbr.rel (0) target = $region43
      $region42: #{reverse.5} parent=38 // pred_region
        // Predicated region
        $region55: #{reverse.5} parent=42 // pred_check
          _
        $region56: #{reverse.5} parent=42 // pred_check_branch
          %367 = sbr.rel (0) target = $region58
        $region57: #{reverse.5} parent=42 // pred_region
          loop: start=0, step=1, limit=1
          $region59: #{reverse.5} parent=57 // loop_pre_header
            _
          $region60: #{reverse.5} parent=57 // loop_header
            %s369 = sphi 0, %s373
            %p370 = scmp.ge.s32.totalorder %s369, 1
            %s374 = sphi [#allocation1], [#allocation1]
            %s375 = sphi %s1, %s1
          $region61: #{reverse.5} parent=57 // loop_header_branch
            %372 = sbr.rel (%p370) target = $region65
          $region62: #{reverse.5} parent=57 // loop_body
            %v376 = vld [vmem:[%s374] sm:$0xff]
            %377 = vst [vmem:[%s375] sm:$0xff] %v376
            %v378 = vld [vmem:[%s374 + $0x8] sm:$0xff]
            %379 = vst [vmem:[%s375 + $0x8] sm:$0xff] %v378
            %v380 = vld [vmem:[%s374 + $0x10] sm:$0xff]
            %381 = vst [vmem:[%s375 + $0x10] sm:$0xff] %v380
            %v382 = vld [vmem:[%s374 + $0x18] sm:$0xff]
            %383 = vst [vmem:[%s375 + $0x18] sm:$0xff] %v382
            %v384 = vld [vmem:[%s374 + $0x20] sm:$0xff]
            %385 = vst [vmem:[%s375 + $0x20] sm:$0xff] %v384
            %v386 = vld [vmem:[%s374 + $0x28] sm:$0xff]
            %387 = vst [vmem:[%s375 + $0x28] sm:$0xff] %v386
            %v388 = vld [vmem:[%s374 + $0x30] sm:$0xff]
            %389 = vst [vmem:[%s375 + $0x30] sm:$0xff] %v388
            %v390 = vld [vmem:[%s374 + $0x38] sm:$0xff]
            %391 = vst [vmem:[%s375 + $0x38] sm:$0xff] %v390
            %v392 = vld [vmem:[%s374 + $0x40] sm:$0xff]
            %393 = vst [vmem:[%s375 + $0x40] sm:$0xff] %v392
            %v394 = vld [vmem:[%s374 + $0x48] sm:$0xff]
            %395 = vst [vmem:[%s375 + $0x48] sm:$0xff] %v394
            %v396 = vld [vmem:[%s374 + $0x50] sm:$0xff]
            %397 = vst [vmem:[%s375 + $0x50] sm:$0xff] %v396
            %v398 = vld [vmem:[%s374 + $0x58] sm:$0xff]
            %399 = vst [vmem:[%s375 + $0x58] sm:$0xff] %v398
            %v400 = vld [vmem:[%s374 + $0x60] sm:$0xff]
            %401 = vst [vmem:[%s375 + $0x60] sm:$0xff] %v400
            %v402 = vld [vmem:[%s374 + $0x68] sm:$0xff]
            %403 = vst [vmem:[%s375 + $0x68] sm:$0xff] %v402
            %v404 = vld [vmem:[%s374 + $0x70] sm:$0xff]
            %405 = vst [vmem:[%s375 + $0x70] sm:$0xff] %v404
            %v406 = vld [vmem:[%s374 + $0x78] sm:$0xff]
            %407 = vst [vmem:[%s375 + $0x78] sm:$0xff] %v406
          $region63: #{reverse.5} parent=57 // loop_footer
            %s373 = sadd.s32 1, %s369
          $region64: #{reverse.5} parent=57 // loop_footer_branch
            %368 = sbr.rel target = $region60
          $region65: #{reverse.5} parent=57 // loop_exit
            _
        $region58: #{reverse.5} parent=42 // pred_fallthru
          _
        // Predicated region
        $region66: #{reverse.5} parent=42 // pred_check
          _
        $region67: #{reverse.5} parent=42 // pred_check_branch
          %409 = sbr.rel target = $region69
        $region68: #{reverse.5} parent=42 // pred_region
          _
        $region69: #{reverse.5} parent=42 // pred_fallthru
          _
      $region43: #{reverse.5} parent=38 // pred_fallthru
        _
      // Predicated region
      $region44: #{reverse.5} parent=38 // pred_check
        _
      $region45: #{reverse.5} parent=38 // pred_check_branch
        %323 = sbr.rel target = $region47
      $region46: #{reverse.5} parent=38 // pred_region
        %s325 = ssub.s32 256, 1
        loop: start=0, step=1, limit=1
        $region48: #{reverse.5} parent=46 // loop_pre_header
          _
        $region49: #{reverse.5} parent=46 // loop_header
          %s327 = sphi 0, %s331
          %p328 = scmp.ge.s32.totalorder %s327, 1
          %s332 = sphi [#allocation1], [#allocation1]
          %s333 = sphi %s1, %s1
        $region50: #{reverse.5} parent=46 // loop_header_branch
          %330 = sbr.rel (%p328) target = $region54
        $region51: #{reverse.5} parent=46 // loop_body
          %v334 = vld [vmem:[%s332] sm:%s325]
          %335 = vst [vmem:[%s333] sm:%s325] %v334
          %v336 = vld [vmem:[%s332 + $0x8] sm:%s325]
          %337 = vst [vmem:[%s333 + $0x8] sm:%s325] %v336
          %v338 = vld [vmem:[%s332 + $0x10] sm:%s325]
          %339 = vst [vmem:[%s333 + $0x10] sm:%s325] %v338
          %v340 = vld [vmem:[%s332 + $0x18] sm:%s325]
          %341 = vst [vmem:[%s333 + $0x18] sm:%s325] %v340
          %v342 = vld [vmem:[%s332 + $0x20] sm:%s325]
          %343 = vst [vmem:[%s333 + $0x20] sm:%s325] %v342
          %v344 = vld [vmem:[%s332 + $0x28] sm:%s325]
          %345 = vst [vmem:[%s333 + $0x28] sm:%s325] %v344
          %v346 = vld [vmem:[%s332 + $0x30] sm:%s325]
          %347 = vst [vmem:[%s333 + $0x30] sm:%s325] %v346
          %v348 = vld [vmem:[%s332 + $0x38] sm:%s325]
          %349 = vst [vmem:[%s333 + $0x38] sm:%s325] %v348
          %v350 = vld [vmem:[%s332 + $0x40] sm:%s325]
          %351 = vst [vmem:[%s333 + $0x40] sm:%s325] %v350
          %v352 = vld [vmem:[%s332 + $0x48] sm:%s325]
          %353 = vst [vmem:[%s333 + $0x48] sm:%s325] %v352
          %v354 = vld [vmem:[%s332 + $0x50] sm:%s325]
          %355 = vst [vmem:[%s333 + $0x50] sm:%s325] %v354
          %v356 = vld [vmem:[%s332 + $0x58] sm:%s325]
          %357 = vst [vmem:[%s333 + $0x58] sm:%s325] %v356
          %v358 = vld [vmem:[%s332 + $0x60] sm:%s325]
          %359 = vst [vmem:[%s333 + $0x60] sm:%s325] %v358
          %v360 = vld [vmem:[%s332 + $0x68] sm:%s325]
          %361 = vst [vmem:[%s333 + $0x68] sm:%s325] %v360
          %v362 = vld [vmem:[%s332 + $0x70] sm:%s325]
          %363 = vst [vmem:[%s333 + $0x70] sm:%s325] %v362
          %v364 = vld [vmem:[%s332 + $0x78] sm:%s325]
          %365 = vst [vmem:[%s333 + $0x78] sm:%s325] %v364
        $region52: #{reverse.5} parent=46 // loop_footer
          %s331 = sadd.s32 1, %s327
        $region53: #{reverse.5} parent=46 // loop_footer_branch
          %326 = sbr.rel target = $region49
        $region54: #{reverse.5} parent=46 // loop_exit
          _
      $region47: #{reverse.5} parent=38 // pred_fallthru
        _
    $region39: #{reverse.5} parent=1 // pred_fallthru
      _
    %410 = vnop

// kernel: fourier_down_block.8
$region0: #{fourier_down_block.8}
  #allocation0 [shape = 'u32[]', space=smem, size = 0x4, offset = 0x4, fixed_abs, tag = 'smem constant byte address 0x4 - core index']
  #allocation1 [shape = 'u32[72,128]{1,0:T(1,128)}', space=vmem, size = 0x9000, scoped, tag = 'internal scratch']
  %s0 = inlined_call_operand.vmem [shape: f32[4,512], index: 0, kind: input, shape index: {}]
  %s1 = inlined_call_operand.vmem [shape: f32[8,4], index: 1, kind: input, shape index: {}]
  %s2 = inlined_call_operand.vmem [shape: f32[8,512], index: 2, kind: input, shape index: {}]
  %s3 = inlined_call_operand.vmem [shape: f32[8,512], index: 3, kind: output, shape index: {}]
  %s4 = sld [smem:[#allocation0]]
  $region45: #{fourier_down_block.8} parent=0
    _
  %s6 = ssub.s32 1, %s4
  %s7 = scalar_select 0, %s6, %s4
  loop: start=0, step=1, limit=4
  $region2: #{fourier_down_block.8} parent=0 // loop_pre_header
    _
  $region3: #{fourier_down_block.8} parent=0 // loop_header
    %s9 = sphi 0, %s13
    %p10 = scmp.ge.s32.totalorder %s9, 4
    %s19 = sphi 0, %s21
    %s22 = sphi 0, %s19
    %s23 = sphi 0, %s22
    %s39 = sphi 0, %s23
    %s43 = sphi 0, %s43
    %s45 = sphi 0, %s43
    %s46 = sphi 0, %s45
    %s60 = sphi 0, %s46
    %s66 = sphi 0, %s68
    %s69 = sphi 0, %s66
    %s70 = sphi 0, %s69
    %s86 = sphi 0, %s70
    %s92 = sphi 0, %s94
    %s95 = sphi 0, %s92
    %s96 = sphi 0, %s95
    %s112 = sphi 0, %s96
  $region4: #{fourier_down_block.8} parent=0 // loop_header_branch
    %12 = sbr.rel (%p10) target = $region8
  $region5: #{fourier_down_block.8} parent=0 // loop_body
    %s14 = ssub.s32 %s9, 1
    %s15 = ssub.s32 %s9, 2
    %s16 = sadd.s32 %s9, 1
    %s17 = ssub.s32 %s9, %s16
    %p18 = scmp.eq.s32.totalorder %s17, 0
    %s20 = sadd.s32 %s19, 1
    %s21 = scalar_select %p18, %s19, %s20
    %p24 = pneg %p18
    %p25 = scmp.eq.s32.totalorder %s9, 1
    %p26 = por %p24, %p25
    %p27 = scmp.ne.s32.totalorder %s19, %s22
    %p28 = scmp.eq.s32.totalorder %s9, 0
    %p29 = por %p27, %p28
    %p30 = scmp.ne.s32.totalorder %s19, %s22
    %p31 = scmp.eq.s32.totalorder %s14, 1
    %p32 = por %p30, %p31
    %p33 = scmp.ne.s32.totalorder %s22, %s23
    %p34 = scmp.eq.s32.totalorder %s14, 0
    %p35 = por %p33, %p34
    %p36 = scmp.ne.s32.totalorder %s22, %s23
    %p37 = scmp.eq.s32.totalorder %s15, 1
    %p38 = por %p36, %p37
    %p40 = scmp.ne.s32.totalorder %s23, %s39
    %p41 = scmp.eq.s32.totalorder %s15, 0
    %p42 = por %p40, %p41
    %s44 = sadd.s32 %s43, 1
    %p47 = scmp.eq.s32.totalorder %s9, 1
    %p48 = scmp.ne.s32.totalorder %s43, %s45
    %p49 = scmp.eq.s32.totalorder %s9, 0
    %p50 = por %p48, %p49
    %p51 = scmp.ne.s32.totalorder %s43, %s45
    %p52 = scmp.eq.s32.totalorder %s14, 1
    %p53 = por %p51, %p52
    %p54 = scmp.ne.s32.totalorder %s45, %s46
    %p55 = scmp.eq.s32.totalorder %s14, 0
    %p56 = por %p54, %p55
    %p57 = scmp.ne.s32.totalorder %s45, %s46
    %p58 = scmp.eq.s32.totalorder %s15, 1
    %p59 = por %p57, %p58
    %p61 = scmp.ne.s32.totalorder %s46, %s60
    %p62 = scmp.eq.s32.totalorder %s15, 0
    %p63 = por %p61, %p62
    %s64 = ssub.s32 %s9, %s16
    %p65 = scmp.eq.s32.totalorder %s64, 0
    %s67 = sadd.s32 %s66, 1
    %s68 = scalar_select %p65, %s66, %s67
    %p71 = pneg %p65
    %p72 = scmp.eq.s32.totalorder %s9, 1
    %p73 = por %p71, %p72
    %p74 = scmp.ne.s32.totalorder %s66, %s69
    %p75 = scmp.eq.s32.totalorder %s9, 0
    %p76 = por %p74, %p75
    %p77 = scmp.ne.s32.totalorder %s66, %s69
    %p78 = scmp.eq.s32.totalorder %s14, 1
    %p79 = por %p77, %p78
    %p80 = scmp.ne.s32.totalorder %s69, %s70
    %p81 = scmp.eq.s32.totalorder %s14, 0
    %p82 = por %p80, %p81
    %p83 = scmp.ne.s32.totalorder %s69, %s70
    %p84 = scmp.eq.s32.totalorder %s15, 1
    %p85 = por %p83, %p84
    %p87 = scmp.ne.s32.totalorder %s70, %s86
    %p88 = scmp.eq.s32.totalorder %s15, 0
    %p89 = por %p87, %p88
    %s90 = ssub.s32 %s9, %s16
    %p91 = scmp.eq.s32.totalorder %s90, 0
    %s93 = sadd.s32 %s92, 1
    %s94 = scalar_select %p91, %s92, %s93
    %p97 = pneg %p91
    %p98 = scmp.eq.s32.totalorder %s9, 1
    %p99 = por %p97, %p98
    %p100 = scmp.ne.s32.totalorder %s92, %s95
    %p101 = scmp.eq.s32.totalorder %s9, 0
    %p102 = por %p100, %p101
    %p103 = scmp.ne.s32.totalorder %s92, %s95
    %p104 = scmp.eq.s32.totalorder %s14, 1
    %p105 = por %p103, %p104
    %p106 = scmp.ne.s32.totalorder %s95, %s96
    %p107 = scmp.eq.s32.totalorder %s14, 0
    %p108 = por %p106, %p107
    %p109 = scmp.ne.s32.totalorder %s95, %s96
    %p110 = scmp.eq.s32.totalorder %s15, 1
    %p111 = por %p109, %p110
    %p113 = scmp.ne.s32.totalorder %s96, %s112
    %p114 = scmp.eq.s32.totalorder %s15, 0
    %p115 = por %p113, %p114
    %p116 = scmp.le.s32.totalorder 1, %s9
    %p117 = scmp.lt.s32.totalorder %s9, 3
    %p118 = pnand %p116, %p117
    %p119 = pneg %p118
    // Predicated region
    $region9: #{fourier_down_block.8} parent=5 // pred_check
      _
    $region10: #{fourier_down_block.8} parent=5 // pred_check_branch
      %121 = sbr.rel (%p118) target = $region12
    $region11: #{fourier_down_block.8} parent=5 // pred_region
      %s122 = ssub.s32 %s9, 1
      // Predicated region
      $region13: #{fourier_down_block.8} parent=11 // pred_check
        %p123 = pneg %p56
      $region14: #{fourier_down_block.8} parent=11 // pred_check_branch
        %125 = sbr.rel (%p123) target = $region16
      $region15: #{fourier_down_block.8} parent=11 // pred_region
        _
      $region16: #{fourier_down_block.8} parent=11 // pred_fallthru
        _
    $region12: #{fourier_down_block.8} parent=5 // pred_fallthru
      _
    %p126 = scmp.lt.s32.totalorder %s9, 2
    // Predicated region
    $region17: #{fourier_down_block.8} parent=5 // pred_check
      %p127 = pneg %p126
    $region18: #{fourier_down_block.8} parent=5 // pred_check_branch
      %129 = sbr.rel (%p127) target = $region20
    $region19: #{fourier_down_block.8} parent=5 // pred_region
      // Predicated region
      $region21: #{fourier_down_block.8} parent=19 // pred_check
        %p130 = pneg %p29
      $region22: #{fourier_down_block.8} parent=19 // pred_check_branch
        %132 = sbr.rel (%p130) target = $region24
      $region23: #{fourier_down_block.8} parent=19 // pred_region
        %s133 = smul.u32 2, %s9
        %p134 = scmp.lt.s32.totalorder %s133, 3
        %s135 = scalar_select %p134, %s133, 3
        %s136 = smul.addr %s135, 4
        %s137 = scalar_lea.vmem %s0, %s136
        %s138 = smul.u32 2, %s9
      $region24: #{fourier_down_block.8} parent=19 // pred_fallthru
        _
      // Predicated region
      $region25: #{fourier_down_block.8} parent=19 // pred_check
        %p139 = pneg %p76
      $region26: #{fourier_down_block.8} parent=19 // pred_check_branch
        %141 = sbr.rel (%p139) target = $region28
      $region27: #{fourier_down_block.8} parent=19 // pred_region
        %s142 = smul.u32 2, %s9
        %p143 = scmp.lt.s32.totalorder %s142, 3
        %s144 = scalar_select %p143, %s142, 3
        %s145 = smul.addr %s144, 8
        %s146 = scalar_lea.vmem %s2, %s145
        %s147 = smul.u32 2, %s9
      $region28: #{fourier_down_block.8} parent=19 // pred_fallthru
        _
    $region20: #{fourier_down_block.8} parent=5 // pred_fallthru
      _
    %p148 = scmp.le.s32.totalorder 1, %s9
    %p149 = scmp.lt.s32.totalorder %s9, 3
    %p150 = pnand %p148, %p149
    %p151 = pneg %p150
    // Predicated region
    $region29: #{fourier_down_block.8} parent=5 // pred_check
      _
    $region30: #{fourier_down_block.8} parent=5 // pred_check_branch
      %153 = sbr.rel (%p150) target = $region32
    $region31: #{fourier_down_block.8} parent=5 // pred_region
      %s154 = ssub.s32 %s9, 1
      %s155 = smul.u32 2, %s14
      %p156 = scmp.lt.s32.totalorder %s155, 3
      %s157 = scalar_select %p156, %s155, 3
      %s158 = smul.addr %s157, 4
      %s159 = scalar_lea.vmem %s0, %s158
      %p160 = pneg %p35
      %p161 = pneg %p32
      %p162 = pneg %p56
      %p163 = pneg %p53
      %s164 = smul.u32 2, %s14
      %p165 = scmp.lt.s32.totalorder %s164, 3
      %s166 = scalar_select %p165, %s164, 3
      %s167 = smul.addr %s166, 8
      %s168 = scalar_lea.vmem %s2, %s167
      %p169 = pneg %p82
      %p170 = pneg %p79
      %p171 = pneg %p108
      %p172 = pneg %p105
      %s173 = smul.u32 2, %s14
      %p174 = scmp.lt.s32.totalorder %s173, 3
      %s175 = scalar_select %p174, %s173, 3
      %s176 = smul.addr %s175, 8
      %s177 = scalar_lea.vmem %s3, %s176
      %s178 = smul.u32 2, %s14
      %p179 = scmp.lt.s32.totalorder %s178, 3
      %s180 = scalar_select %p179, %s178, 3
      %s181 = smul.addr %s180, 4
      %s182 = scalar_lea.vmem %s0, %s181
      %s183 = smul.u32 2, %s14
      %s184 = smul.u32 2, %s14
      %p185 = scmp.lt.s32.totalorder %s184, 3
      %s186 = scalar_select %p185, %s184, 3
      %s187 = smul.addr %s186, 8
      %s188 = scalar_lea.vmem %s2, %s187
      %s189 = smul.u32 2, %s14
      %s190 = smul.u32 2, %s14
      %p191 = scmp.lt.s32.totalorder %s190, 3
      %s192 = scalar_select %p191, %s190, 3
      %s193 = smul.addr %s192, 8
      %s194 = scalar_lea.vmem %s3, %s193
      %s195 = smul.u32 2, %s14
      %v196 = vld [vmem:[%s1] sm:$0xff]
      %v197 = vld [vmem:[%s182] sm:$0xff]
      %v198 = vld [vmem:[%s188] sm:$0xff]
      %v199 = vld [vmem:[%s188 + $0x8] sm:$0xff]
      %201 = vst [vmem:[#allocation1] ss:$2 sm:$0xff] %v197
      %v202 = vld.sshfl [vmem:[#allocation1] sm:$0xff pattern:$0x75316420]
      %v203 = vld.sshfl [vmem:[#allocation1 + $0x8] sm:$0xff pattern:$0x75316420]
      %vm204 = vcmask 31744
      %v206 = vsel %vm204, %v196, 0
      %vm208 = vcmask 1043456
      %v209 = vsel %vm208, %v202, 0
      %v211 = vsel %vm208, %v203, 0
      %213 = vmatpush.msra.mxu0 0.0
      %214 = vmatpush.msra.mxu0 0.0
      %215 = vmatpush.msra.mxu0 0.0
      %216 = vmatpush.msra.mxu0 0.0
      %217 = vmatpush.msra.mxu0 0.0
      %218 = vmatpush.msra.mxu0 0.0
      %219 = vmatpush.msra.mxu0 0.0
      %220 = vmatpush.msra.mxu0 0.0
      %221 = vmatpush.msra.mxu0 0.0
      %222 = vmatpush.msra.mxu0 0.0
      %223 = vmatpush.msra.mxu0 0.0
      %224 = vmatpush.msra.mxu0 0.0
      %225 = vmatpush.msra.mxu0 0.0
      %226 = vmatpush.msra.mxu0 0.0
      %227 = vmatpush.msra.mxu0 0.0
      %228 = vmatpush.msra.mxu0 %v209
      %229 = vmatmul.f32.gmra.mxu0 %v206
      %v230 = vpop.f32.mrf.mxu0
      %v231 = vadd.f32 %v198, %v230
      %232 = vdwg.mxu0
      %233 = vmatpush.msra.mxu0 0.0
      %234 = vmatpush.msra.mxu0 0.0
      %235 = vmatpush.msra.mxu0 0.0
      %236 = vmatpush.msra.mxu0 0.0
      %237 = vmatpush.msra.mxu0 0.0
      %238 = vmatpush.msra.mxu0 0.0
      %239 = vmatpush.msra.mxu0 0.0
      %240 = vmatpush.msra.mxu0 0.0
      %241 = vmatpush.msra.mxu0 0.0
      %242 = vmatpush.msra.mxu0 0.0
      %243 = vmatpush.msra.mxu0 0.0
      %244 = vmatpush.msra.mxu0 0.0
      %245 = vmatpush.msra.mxu0 0.0
      %246 = vmatpush.msra.mxu0 0.0
      %247 = vmatpush.msra.mxu0 0.0
      %248 = vmatpush.msra.mxu0 %v211
      %249 = vmatmul.f32.gmra.mxu0 %v206
      %v250 = vpop.f32.mrf.mxu0
      %v251 = vadd.f32 %v199, %v250
      %252 = vdwg.mxu0
      %253 = vst [vmem:[%s194] sm:$0xff] %v231
      %254 = vst [vmem:[%s194 + $0x8] sm:$0xff] %v251
      %s255 = smul.u32 2, %s14
      %p256 = scmp.lt.s32.totalorder %s255, 3
      %s257 = scalar_select %p256, %s255, 3
      %s258 = smul.addr %s257, 8
      %s259 = scalar_lea.vmem %s3, %s258
      // Predicated region
      $region33: #{fourier_down_block.8} parent=31 // pred_check
        %p260 = pneg %p105
      $region34: #{fourier_down_block.8} parent=31 // pred_check_branch
        %262 = sbr.rel (%p260) target = $region36
      $region35: #{fourier_down_block.8} parent=31 // pred_region
        %s263 = smul.u32 2, %s14
      $region36: #{fourier_down_block.8} parent=31 // pred_fallthru
        _
    $region32: #{fourier_down_block.8} parent=5 // pred_fallthru
      _
    %p264 = scmp.le.s32.totalorder 2, %s9
    // Predicated region
    $region37: #{fourier_down_block.8} parent=5 // pred_check
      %p265 = pneg %p264
    $region38: #{fourier_down_block.8} parent=5 // pred_check_branch
      %267 = sbr.rel (%p265) target = $region40
    $region39: #{fourier_down_block.8} parent=5 // pred_region
      %s268 = ssub.s32 %s9, 2
      // Predicated region
      $region41: #{fourier_down_block.8} parent=39 // pred_check
        %p269 = pneg %p111
      $region42: #{fourier_down_block.8} parent=39 // pred_check_branch
        %271 = sbr.rel (%p269) target = $region44
      $region43: #{fourier_down_block.8} parent=39 // pred_region
        %s272 = smul.u32 2, %s15
        %p273 = scmp.lt.s32.totalorder %s272, 3
        %s274 = scalar_select %p273, %s272, 3
        %s275 = smul.addr %s274, 8
        %s276 = scalar_lea.vmem %s3, %s275
      $region44: #{fourier_down_block.8} parent=39 // pred_fallthru
        _
    $region40: #{fourier_down_block.8} parent=5 // pred_fallthru
      _
  $region6: #{fourier_down_block.8} parent=0 // loop_footer
    %s13 = sadd.s32 1, %s9
  $region7: #{fourier_down_block.8} parent=0 // loop_footer_branch
    %8 = sbr.rel target = $region3
  $region8: #{fourier_down_block.8} parent=0 // loop_exit
    _

// kernel: fourier_down_block.9
$region0: #{fourier_down_block.9}
  #allocation0 [shape = 'u32[]', space=smem, size = 0x4, offset = 0x4, fixed_abs, tag = 'smem constant byte address 0x4 - core index']
  #allocation1 [shape = 'u32[72,128]{1,0:T(1,128)}', space=vmem, size = 0x9000, scoped, tag = 'internal scratch']
  %s0 = inlined_call_operand.vmem [shape: f32[16,256], index: 0, kind: input, shape index: {}]
  %s1 = inlined_call_operand.vmem [shape: f32[16,256], index: 1, kind: output, shape index: {}]
  %s2 = sld [smem:[#allocation0]]
  $region109: #{fourier_down_block.9} parent=0
    _
  %s4 = ssub.s32 1, %s2
  %s5 = scalar_select 0, %s4, %s2
  $region1: #{fourier_down_block.9} parent=0
    #allocation2 [shape = 'u8[16384]{0}', space=vmem, size = 0x4000, scoped, tag = 'input window, operand 0']
    #allocation3 [shape = 'u8[16384]{0}', space=vmem, size = 0x4000, scoped, tag = 'output window, operand 0']
    loop: start=0, step=1, limit=4
    $region2: #{fourier_down_block.9} parent=1 // loop_pre_header
      _
    $region3: #{fourier_down_block.9} parent=1 // loop_header
      %s7 = sphi 0, %s11
      %p8 = scmp.ge.s32.totalorder %s7, 4
      %s14 = sphi 0, %s26
      %s15 = sphi 0, %s22
      %s16 = sphi 0, %s14
      %s17 = sphi 0, %s15
      %s18 = sphi 0, %s16
      %s19 = sphi 0, %s17
      %s31 = sphi 0, %s33
      %s34 = sphi 0, %s31
      %s35 = sphi 0, %s34
      %s51 = sphi 0, %s35
      %s59 = sphi 0, %s61
      %s62 = sphi 0, %s59
      %s63 = sphi 0, %s62
      %s79 = sphi 0, %s63
    $region4: #{fourier_down_block.9} parent=1 // loop_header_branch
      %10 = sbr.rel (%p8) target = $region8
    $region5: #{fourier_down_block.9} parent=1 // loop_body
      %s12 = ssub.s32 %s7, 1
      %s13 = ssub.s32 %s7, 2
      %s20 = sadd.s32 1, %s15
      %p21 = scmp.ge.s32.totalorder %s20, 2
      %s22 = scalar_select %p21, 0, %s20
      %s23 = sadd.s32 1, %s14
      %s24 = scalar_select %p21, %s23, %s14
      %p25 = scmp.ge.s32.totalorder %s24, 1
      %s26 = scalar_select %p25, 0, %s24
      %s27 = ssub.s32 %s14, %s26
      %s28 = ssub.s32 %s15, %s22
      %s29 = sor.u32 %s27, %s28
      %p30 = scmp.eq.s32.totalorder %s29, 0
      %s32 = sadd.s32 %s31, 1
      %s33 = scalar_select %p30, %s31, %s32
      %p36 = pneg %p30
      %p37 = scmp.eq.s32.totalorder %s7, 1
      %p38 = por %p36, %p37
      %p39 = scmp.ne.s32.totalorder %s31, %s34
      %p40 = scmp.eq.s32.totalorder %s7, 0
      %p41 = por %p39, %p40
      %p42 = scmp.ne.s32.totalorder %s31, %s34
      %p43 = scmp.eq.s32.totalorder %s12, 1
      %p44 = por %p42, %p43
      %p45 = scmp.ne.s32.totalorder %s34, %s35
      %p46 = scmp.eq.s32.totalorder %s12, 0
      %p47 = por %p45, %p46
      %p48 = scmp.ne.s32.totalorder %s34, %s35
      %p49 = scmp.eq.s32.totalorder %s13, 1
      %p50 = por %p48, %p49
      %p52 = scmp.ne.s32.totalorder %s35, %s51
      %p53 = scmp.eq.s32.totalorder %s13, 0
      %p54 = por %p52, %p53
      %s55 = ssub.s32 %s14, %s26
      %s56 = ssub.s32 %s15, %s22
      %s57 = sor.u32 %s55, %s56
      %p58 = scmp.eq.s32.totalorder %s57, 0
      %s60 = sadd.s32 %s59, 1
      %s61 = scalar_select %p58, %s59, %s60
      %p64 = pneg %p58
      %p65 = scmp.eq.s32.totalorder %s7, 1
      %p66 = por %p64, %p65
      %p67 = scmp.ne.s32.totalorder %s59, %s62
      %p68 = scmp.eq.s32.totalorder %s7, 0
      %p69 = por %p67, %p68
      %p70 = scmp.ne.s32.totalorder %s59, %s62
      %p71 = scmp.eq.s32.totalorder %s12, 1
      %p72 = por %p70, %p71
      %p73 = scmp.ne.s32.totalorder %s62, %s63
      %p74 = scmp.eq.s32.totalorder %s12, 0
      %p75 = por %p73, %p74
      %p76 = scmp.ne.s32.totalorder %s62, %s63
      %p77 = scmp.eq.s32.totalorder %s13, 1
      %p78 = por %p76, %p77
      %p80 = scmp.ne.s32.totalorder %s63, %s79
      %p81 = scmp.eq.s32.totalorder %s13, 0
      %p82 = por %p80, %p81
      %p83 = scmp.le.s32.totalorder 1, %s7
      %p84 = scmp.lt.s32.totalorder %s7, 3
      %p85 = pnand %p83, %p84
      %p86 = pneg %p85
      // Predicated region
      $region9: #{fourier_down_block.9} parent=5 // pred_check
        _
      $region10: #{fourier_down_block.9} parent=5 // pred_check_branch
        %88 = sbr.rel (%p85) target = $region12
      $region11: #{fourier_down_block.9} parent=5 // pred_region
        %s89 = ssub.s32 %s7, 1
      $region12: #{fourier_down_block.9} parent=5 // pred_fallthru
        _
      %p90 = scmp.lt.s32.totalorder %s7, 2
      // Predicated region
      $region13: #{fourier_down_block.9} parent=5 // pred_check
        %p91 = pneg %p90
      $region14: #{fourier_down_block.9} parent=5 // pred_check_branch
        %93 = sbr.rel (%p91) target = $region16
      $region15: #{fourier_down_block.9} parent=5 // pred_region
        // Predicated region
        $region17: #{fourier_down_block.9} parent=15 // pred_check
          %p94 = pneg %p41
        $region18: #{fourier_down_block.9} parent=15 // pred_check_branch
          %96 = sbr.rel (%p94) target = $region20
        $region19: #{fourier_down_block.9} parent=15 // pred_region
          %s97 = sand.u32 %s31, 1
          %s98 = sand.u32 %s31, 1
          %s99 = smul.addr %s98, 16
          %s100 = scalar_lea.vmem [#allocation2], %s99
          %s101 = smul.u32 2, %s14
          %s102 = smul.addr %s101, 2
          %s103 = sadd.s32 %s15, %s102
          %s104 = smul.addr %s103, 8
          %s105 = scalar_lea.vmem %s0, %s104
          // Predicated region
          $region21: #{fourier_down_block.9} parent=19 // pred_check
            _
          $region22: #{fourier_down_block.9} parent=19 // pred_check_branch
            %107 = sbr.rel (0) target = $region24
          $region23: #{fourier_down_block.9} parent=19 // pred_region
            // Predicated region
            $region25: #{fourier_down_block.9} parent=23 // pred_check
              _
            $region26: #{fourier_down_block.9} parent=23 // pred_check_branch
              %109 = sbr.rel (0) target = $region28
            $region27: #{fourier_down_block.9} parent=23 // pred_region
              // Predicated region
              $region40: #{fourier_down_block.9} parent=27 // pred_check
                _
              $region41: #{fourier_down_block.9} parent=27 // pred_check_branch
                %127 = sbr.rel (0) target = $region43
              $region42: #{fourier_down_block.9} parent=27 // pred_region
                loop: start=0, step=1, limit=1
                $region44: #{fourier_down_block.9} parent=42 // loop_pre_header
                  _
                $region45: #{fourier_down_block.9} parent=42 // loop_header
                  %s129 = sphi 0, %s133
                  %p130 = scmp.ge.s32.totalorder %s129, 1
                  %s134 = sphi %s105, %s105
                  %s135 = sphi %s100, %s100
                $region46: #{fourier_down_block.9} parent=42 // loop_header_branch
                  %132 = sbr.rel (%p130) target = $region50
                $region47: #{fourier_down_block.9} parent=42 // loop_body
                  %v136 = vld [vmem:[%s134] sm:$0xff]
                  %137 = vst [vmem:[%s135] sm:$0xff] %v136
                  %v138 = vld [vmem:[%s134 + $0x10] sm:$0xff]
                  %139 = vst [vmem:[%s135 + $0x8] sm:$0xff] %v138
                $region48: #{fourier_down_block.9} parent=42 // loop_footer
                  %s133 = sadd.s32 1, %s129
                $region49: #{fourier_down_block.9} parent=42 // loop_footer_branch
                  %128 = sbr.rel target = $region45
                $region50: #{fourier_down_block.9} parent=42 // loop_exit
                  _
              $region43: #{fourier_down_block.9} parent=27 // pred_fallthru
                _
              // Predicated region
              $region51: #{fourier_down_block.9} parent=27 // pred_check
                _
              $region52: #{fourier_down_block.9} parent=27 // pred_check_branch
                %141 = sbr.rel target = $region54
              $region53: #{fourier_down_block.9} parent=27 // pred_region
                _
              $region54: #{fourier_down_block.9} parent=27 // pred_fallthru
                _
            $region28: #{fourier_down_block.9} parent=23 // pred_fallthru
              _
            // Predicated region
            $region29: #{fourier_down_block.9} parent=23 // pred_check
              _
            $region30: #{fourier_down_block.9} parent=23 // pred_check_branch
              %111 = sbr.rel target = $region32
            $region31: #{fourier_down_block.9} parent=23 // pred_region
              %s113 = ssub.s32 256, 1
              loop: start=0, step=1, limit=1
              $region33: #{fourier_down_block.9} parent=31 // loop_pre_header
                _
              $region34: #{fourier_down_block.9} parent=31 // loop_header
                %s115 = sphi 0, %s119
                %p116 = scmp.ge.s32.totalorder %s115, 1
                %s120 = sphi %s105, %s105
                %s121 = sphi %s100, %s100
              $region35: #{fourier_down_block.9} parent=31 // loop_header_branch
                %118 = sbr.rel (%p116) target = $region39
              $region36: #{fourier_down_block.9} parent=31 // loop_body
                %v122 = vld [vmem:[%s120] sm:%s113]
                %123 = vst [vmem:[%s121] sm:%s113] %v122
                %v124 = vld [vmem:[%s120 + $0x10] sm:%s113]
                %125 = vst [vmem:[%s121 + $0x8] sm:%s113] %v124
              $region37: #{fourier_down_block.9} parent=31 // loop_footer
                %s119 = sadd.s32 1, %s115
              $region38: #{fourier_down_block.9} parent=31 // loop_footer_branch
                %114 = sbr.rel target = $region34
              $region39: #{fourier_down_block.9} parent=31 // loop_exit
                _
            $region32: #{fourier_down_block.9} parent=23 // pred_fallthru
              _
          $region24: #{fourier_down_block.9} parent=19 // pred_fallthru
            _
          %142 = vnop
        $region20: #{fourier_down_block.9} parent=15 // pred_fallthru
          _
      $region16: #{fourier_down_block.9} parent=5 // pred_fallthru
        _
      %p143 = scmp.le.s32.totalorder 1, %s7
      %p144 = scmp.lt.s32.totalorder %s7, 3
      %p145 = pnand %p143, %p144
      %p146 = pneg %p145
      // Predicated region
      $region55: #{fourier_down_block.9} parent=5 // pred_check
        _
      $region56: #{fourier_down_block.9} parent=5 // pred_check_branch
        %148 = sbr.rel (%p145) target = $region58
      $region57: #{fourier_down_block.9} parent=5 // pred_region
        %s149 = ssub.s32 %s7, 1
        %s150 = sand.u32 %s34, 1
        %s151 = sand.u32 %s34, 1
        %s152 = smul.addr %s151, 16
        %s153 = scalar_lea.vmem [#allocation2], %s152
        // Predicated region
        $region59: #{fourier_down_block.9} parent=57 // pred_check
          %p154 = pneg %p47
        $region60: #{fourier_down_block.9} parent=57 // pred_check_branch
          %156 = sbr.rel (%p154) target = $region62
        $region61: #{fourier_down_block.9} parent=57 // pred_region
          _
        $region62: #{fourier_down_block.9} parent=57 // pred_fallthru
          _
        %s157 = sand.u32 %s34, 1
        %s158 = sand.u32 %s34, 1
        %s159 = smul.addr %s158, 16
        %s160 = scalar_lea.vmem [#allocation2], %s159
        %p161 = pneg %p47
        %p162 = pneg %p44
        %p163 = pneg %p75
        %p164 = pneg %p72
        %s165 = sand.u32 %s62, 1
        %s166 = sand.u32 %s62, 1
        %s167 = smul.addr %s166, 16
        %s168 = scalar_lea.vmem [#allocation3], %s167
        %s169 = smul.u32 2, %s16
        %s170 = smul.u32 2, %s16
        %v171 = vld [vmem:[%s153] sm:$0xff]
        %v172 = vld [vmem:[%s153 + $0x8] sm:$0xff]
        %v173 = vmul.f32 %v171, 0.5
        %v174 = vmul.f32 %v172, 0.5
        %v175 = vmul.f32 %v171, 0.70710677
        %v176 = vmul.f32 %v172, 0.70710677
        %vm177 = vcmp.ge.f32.partialorder %v175, 0.0
        %vm178 = vcmp.ge.f32.partialorder %v176, 0.0
        %v179 = vsel %vm177, 1.0, -1.0
        %v180 = vsel %vm178, 1.0, -1.0
        %v181 = vand.u32 2147483647, %v175
        %v182 = vand.u32 2147483647, %v176
        %v183 = vmul.f32 %v181, 0.3275911
        %v184 = vmul.f32 %v182, 0.3275911
        %v185 = vadd.f32 %v183, 1.0
        %v186 = vadd.f32 %v184, 1.0
        %v187 = vrcp.pop %v185
        %v188 = vrcp.pop %v186
        %v189 = vmul.f32 %v187, 1.0614054
        %v190 = vmul.f32 %v188, 1.0614054
        %v191 = vadd.f32 %v189, -1.4531521
        %v192 = vadd.f32 %v190, -1.4531521
        %v193 = vmul.f32 %v191, %v187
        %v194 = vmul.f32 %v192, %v188
        %v195 = vadd.f32 %v193, 1.4214138
        %v196 = vadd.f32 %v194, 1.4214138
        %v197 = vmul.f32 %v195, %v187
        %v198 = vmul.f32 %v196, %v188
        %v199 = vadd.f32 %v197, -0.28449672
        %v200 = vadd.f32 %v198, -0.28449672
        %v201 = vmul.f32 %v199, %v187
        %v202 = vmul.f32 %v200, %v188
        %v203 = vadd.f32 %v201, 0.2548296
        %v204 = vadd.f32 %v202, 0.2548296
        %v205 = vmul.f32 %v203, %v187
        %v206 = vmul.f32 %v204, %v188
        %v207 = vsub.f32 0.0, %v181
        %v208 = vsub.f32 0.0, %v182
        %v209 = vmul.f32 %v207, %v181
        %v210 = vmul.f32 %v208, %v182
        %v211 = vmul.f32 %v209, 1.442695
        %v212 = vpow.pop %v211
        %v213 = vmul.f32 %v210, 1.442695
        %v214 = vpow.pop %v213
        %v215 = vmul.f32 %v205, %v212
        %v216 = vmul.f32 %v206, %v214
        %v217 = vsub.f32 1.0, %v215
        %v218 = vsub.f32 1.0, %v216
        %v219 = vmul.f32 %v179, %v217
        %v220 = vmul.f32 %v180, %v218
        %v221 = vadd.f32 %v219, 1.0
        %v222 = vadd.f32 %v220, 1.0
        %v223 = vmul.f32 %v173, %v221
        %v224 = vmul.f32 %v174, %v222
        %225 = vst [vmem:[%s168] sm:$0xff] %v223
        %226 = vst [vmem:[%s168 + $0x8] sm:$0xff] %v224
        %s227 = sand.u32 %s62, 1
        %s228 = sand.u32 %s62, 1
        %s229 = smul.addr %s228, 16
        %s230 = scalar_lea.vmem [#allocation3], %s229
        // Predicated region
        $region63: #{fourier_down_block.9} parent=57 // pred_check
          %p231 = pneg %p72
        $region64: #{fourier_down_block.9} parent=57 // pred_check_branch
          %233 = sbr.rel (%p231) target = $region66
        $region65: #{fourier_down_block.9} parent=57 // pred_region
          %s234 = smul.u32 2, %s16
          %s235 = smul.addr %s234, 2
          %s236 = sadd.s32 %s17, %s235
          %s237 = smul.addr %s236, 8
          %s238 = scalar_lea.vmem %s1, %s237
          // Predicated region
          $region67: #{fourier_down_block.9} parent=65 // pred_check
            _
          $region68: #{fourier_down_block.9} parent=65 // pred_check_branch
            %240 = sbr.rel (0) target = $region70
          $region69: #{fourier_down_block.9} parent=65 // pred_region
            // Predicated region
            $region71: #{fourier_down_block.9} parent=69 // pred_check
              _
            $region72: #{fourier_down_block.9} parent=69 // pred_check_branch
              %242 = sbr.rel (0) target = $region74
            $region73: #{fourier_down_block.9} parent=69 // pred_region
              // Predicated region
              $region86: #{fourier_down_block.9} parent=73 // pred_check
                _
              $region87: #{fourier_down_block.9} parent=73 // pred_check_branch
                %260 = sbr.rel (0) target = $region89
              $region88: #{fourier_down_block.9} parent=73 // pred_region
                loop: start=0, step=1, limit=1
                $region90: #{fourier_down_block.9} parent=88 // loop_pre_header
                  _
                $region91: #{fourier_down_block.9} parent=88 // loop_header
                  %s262 = sphi 0, %s266
                  %p263 = scmp.ge.s32.totalorder %s262, 1
                  %s267 = sphi %s230, %s230
                  %s268 = sphi %s238, %s238
                $region92: #{fourier_down_block.9} parent=88 // loop_header_branch
                  %265 = sbr.rel (%p263) target = $region96
                $region93: #{fourier_down_block.9} parent=88 // loop_body
                  %v269 = vld [vmem:[%s267] sm:$0xff]
                  %270 = vst [vmem:[%s268] sm:$0xff] %v269
                  %v271 = vld [vmem:[%s267 + $0x8] sm:$0xff]
                  %272 = vst [vmem:[%s268 + $0x10] sm:$0xff] %v271
                $region94: #{fourier_down_block.9} parent=88 // loop_footer
                  %s266 = sadd.s32 1, %s262
                $region95: #{fourier_down_block.9} parent=88 // loop_footer_branch
                  %261 = sbr.rel target = $region91
                $region96: #{fourier_down_block.9} parent=88 // loop_exit
                  _
              $region89: #{fourier_down_block.9} parent=73 // pred_fallthru
                _
              // Predicated region
              $region97: #{fourier_down_block.9} parent=73 // pred_check
                _
              $region98: #{fourier_down_block.9} parent=73 // pred_check_branch
                %274 = sbr.rel target = $region100
              $region99: #{fourier_down_block.9} parent=73 // pred_region
                _
              $region100: #{fourier_down_block.9} parent=73 // pred_fallthru
                _
            $region74: #{fourier_down_block.9} parent=69 // pred_fallthru
              _
            // Predicated region
            $region75: #{fourier_down_block.9} parent=69 // pred_check
              _
            $region76: #{fourier_down_block.9} parent=69 // pred_check_branch
              %244 = sbr.rel target = $region78
            $region77: #{fourier_down_block.9} parent=69 // pred_region
              %s246 = ssub.s32 256, 1
              loop: start=0, step=1, limit=1
              $region79: #{fourier_down_block.9} parent=77 // loop_pre_header
                _
              $region80: #{fourier_down_block.9} parent=77 // loop_header
                %s248 = sphi 0, %s252
                %p249 = scmp.ge.s32.totalorder %s248, 1
                %s253 = sphi %s230, %s230
                %s254 = sphi %s238, %s238
              $region81: #{fourier_down_block.9} parent=77 // loop_header_branch
                %251 = sbr.rel (%p249) target = $region85
              $region82: #{fourier_down_block.9} parent=77 // loop_body
                %v255 = vld [vmem:[%s253] sm:%s246]
                %256 = vst [vmem:[%s254] sm:%s246] %v255
                %v257 = vld [vmem:[%s253 + $0x8] sm:%s246]
                %258 = vst [vmem:[%s254 + $0x10] sm:%s246] %v257
              $region83: #{fourier_down_block.9} parent=77 // loop_footer
                %s252 = sadd.s32 1, %s248
              $region84: #{fourier_down_block.9} parent=77 // loop_footer_branch
                %247 = sbr.rel target = $region80
              $region85: #{fourier_down_block.9} parent=77 // loop_exit
                _
            $region78: #{fourier_down_block.9} parent=69 // pred_fallthru
              _
          $region70: #{fourier_down_block.9} parent=65 // pred_fallthru
            _
          %275 = vnop
        $region66: #{fourier_down_block.9} parent=57 // pred_fallthru
          _
      $region58: #{fourier_down_block.9} parent=5 // pred_fallthru
        _
      %p276 = scmp.le.s32.totalorder 2, %s7
      // Predicated region
      $region101: #{fourier_down_block.9} parent=5 // pred_check
        %p277 = pneg %p276
      $region102: #{fourier_down_block.9} parent=5 // pred_check_branch
        %279 = sbr.rel (%p277) target = $region104
      $region103: #{fourier_down_block.9} parent=5 // pred_region
        %s280 = ssub.s32 %s7, 2
        // Predicated region
        $region105: #{fourier_down_block.9} parent=103 // pred_check
          %p281 = pneg %p78
        $region106: #{fourier_down_block.9} parent=103 // pred_check_branch
          %283 = sbr.rel (%p281) target = $region108
        $region107: #{fourier_down_block.9} parent=103 // pred_region
          %s284 = sand.u32 %s63, 1
          %s285 = sand.u32 %s63, 1
          %s286 = smul.addr %s285, 16
          %s287 = scalar_lea.vmem [#allocation3], %s286
        $region108: #{fourier_down_block.9} parent=103 // pred_fallthru
          _
      $region104: #{fourier_down_block.9} parent=5 // pred_fallthru
        _
    $region6: #{fourier_down_block.9} parent=1 // loop_footer
      %s11 = sadd.s32 1, %s7
    $region7: #{fourier_down_block.9} parent=1 // loop_footer_branch
      %6 = sbr.rel target = $region3
    $region8: #{fourier_down_block.9} parent=1 // loop_exit
      _

// kernel: tile.34
$region0: #{tile.34}
  %s0 = inlined_call_operand.vmem [shape: f32[8,2,8,32], index: 0, kind: input, shape index: {}]
  %s1 = inlined_call_operand.vmem [shape: f32[8,2,256], index: 1, kind: output, shape index: {}]
  $region1: #{tile.34} parent=0
    #allocation0 [shape = 'u8[65536]{0}', space=vmem, size = 0x10000, scoped, tag = 'scoped mem for output reshape']
    %v2 = vld [vmem:[%s0] ss:$4 sm:$0xff]
    %vm3 = vcmask 261120
    %4 = vst.msk [vmem:[#allocation0] ss:$8 sm:$0x3] %vm3, %v2
    %s5 = scalar_lea.vmem [#allocation0], 4294967281
    %6 = vst.msk [vmem:[%s5] ss:$8 sm:$0xc] %vm3, %v2
    %s7 = scalar_lea.vmem [#allocation0], 4294967280
    %8 = vst.msk [vmem:[%s7] ss:$8 sm:$0x30] %vm3, %v2
    %s9 = scalar_lea.vmem [#allocation0], 4294967265
    %10 = vst.msk [vmem:[%s9] ss:$8 sm:$0xc0] %vm3, %v2
    %s11 = scalar_lea.vmem %s0, 32
    %v12 = vld [vmem:[%s11] ss:$4 sm:$0xff]
    %vm13 = vcmask 261120
    %s14 = scalar_lea.vmem [#allocation0], 32
    %15 = vst.msk [vmem:[%s14] ss:$8 sm:$0x3] %vm13, %v12
    %s16 = scalar_lea.vmem [#allocation0], 17
    %17 = vst.msk [vmem:[%s16] ss:$8 sm:$0xc] %vm13, %v12
    %s18 = scalar_lea.vmem [#allocation0], 16
    %19 = vst.msk [vmem:[%s18] ss:$8 sm:$0x30] %vm13, %v12
    %s20 = scalar_lea.vmem [#allocation0], 1
    %21 = vst.msk [vmem:[%s20] ss:$8 sm:$0xc0] %vm13, %v12
    %s22 = scalar_lea.vmem %s0, 64
    %v23 = vld [vmem:[%s22] ss:$4 sm:$0xff]
    %vm24 = vcmask 261120
    %s25 = scalar_lea.vmem [#allocation0], 64
    %26 = vst.msk [vmem:[%s25] ss:$8 sm:$0x3] %vm24, %v23
    %s27 = scalar_lea.vmem [#allocation0], 49
    %28 = vst.msk [vmem:[%s27] ss:$8 sm:$0xc] %vm24, %v23
    %s29 = scalar_lea.vmem [#allocation0], 48
    %30 = vst.msk [vmem:[%s29] ss:$8 sm:$0x30] %vm24, %v23
    %s31 = scalar_lea.vmem [#allocation0], 33
    %32 = vst.msk [vmem:[%s31] ss:$8 sm:$0xc0] %vm24, %v23
    %s33 = scalar_lea.vmem %s0, 96
    %v34 = vld [vmem:[%s33] ss:$4 sm:$0xff]
    %vm35 = vcmask 261120
    %s36 = scalar_lea.vmem [#allocation0], 96
    %37 = vst.msk [vmem:[%s36] ss:$8 sm:$0x3] %vm35, %v34
    %s38 = scalar_lea.vmem [#allocation0], 81
    %39 = vst.msk [vmem:[%s38] ss:$8 sm:$0xc] %vm35, %v34
    %s40 = scalar_lea.vmem [#allocation0], 80
    %41 = vst.msk [vmem:[%s40] ss:$8 sm:$0x30] %vm35, %v34
    %s42 = scalar_lea.vmem [#allocation0], 65
    %43 = vst.msk [vmem:[%s42] ss:$8 sm:$0xc0] %vm35, %v34
    %s44 = scalar_lea.vmem %s0, 3
    %v45 = vld.sshfl [vmem:[%s44] sm:$0xff pattern:$0xccccc480]
    %s46 = scalar_lea.vmem %s0, 19
    %v47 = vld.sshfl [vmem:[%s46] sm:$0xff pattern:$0xc4800000]
    %vm48 = vcmask 1047556
    %v49 = vsel %vm48, %v47, %v45
    %50 = vrot.lane.b32.xlu0 %v49, 96
    %v51 = vpop.permute.xlu0 %50
    %vm52 = vcmask 1048320
    %53 = vst.msk [vmem:[#allocation0] sm:$0x3] %vm52, %v51
    %s54 = scalar_lea.vmem [#allocation0], 6
    %55 = vst.msk [vmem:[%s54] sm:$0xc] %vm52, %v51
    %s56 = scalar_lea.vmem [#allocation0], 12
    %57 = vst.msk [vmem:[%s56] sm:$0x30] %vm52, %v51
    %s58 = scalar_lea.vmem [#allocation0], 18
    %59 = vst.msk [vmem:[%s58] sm:$0xc0] %vm52, %v51
    %s60 = scalar_lea.vmem %s0, 35
    %v61 = vld.sshfl [vmem:[%s60] sm:$0xff pattern:$0xccccc480]
    %s62 = scalar_lea.vmem %s0, 51
    %v63 = vld.sshfl [vmem:[%s62] sm:$0xff pattern:$0xc4800000]
    %vm64 = vcmask 1047556
    %v65 = vsel %vm64, %v63, %v61
    %66 = vrot.lane.b32.xlu0 %v65, 96
    %v67 = vpop.permute.xlu0 %66
    %vm68 = vcmask 1048320
    %s69 = scalar_lea.vmem [#allocation0], 32
    %70 = vst.msk [vmem:[%s69] sm:$0x3] %vm68, %v67
    %s71 = scalar_lea.vmem [#allocation0], 38
    %72 = vst.msk [vmem:[%s71] sm:$0xc] %vm68, %v67
    %s73 = scalar_lea.vmem [#allocation0], 44
    %74 = vst.msk [vmem:[%s73] sm:$0x30] %vm68, %v67
    %s75 = scalar_lea.vmem [#allocation0], 50
    %76 = vst.msk [vmem:[%s75] sm:$0xc0] %vm68, %v67
    %s77 = scalar_lea.vmem %s0, 67
    %v78 = vld.sshfl [vmem:[%s77] sm:$0xff pattern:$0xccccc480]
    %s79 = scalar_lea.vmem %s0, 83
    %v80 = vld.sshfl [vmem:[%s79] sm:$0xff pattern:$0xc4800000]
    %vm81 = vcmask 1047556
    %v82 = vsel %vm81, %v80, %v78
    %83 = vrot.lane.b32.xlu0 %v82, 96
    %v84 = vpop.permute.xlu0 %83
    %vm85 = vcmask 1048320
    %s86 = scalar_lea.vmem [#allocation0], 64
    %87 = vst.msk [vmem:[%s86] sm:$0x3] %vm85, %v84
    %s88 = scalar_lea.vmem [#allocation0], 70
    %89 = vst.msk [vmem:[%s88] sm:$0xc] %vm85, %v84
    %s90 = scalar_lea.vmem [#allocation0], 76
    %91 = vst.msk [vmem:[%s90] sm:$0x30] %vm85, %v84
    %s92 = scalar_lea.vmem [#allocation0], 82
    %93 = vst.msk [vmem:[%s92] sm:$0xc0] %vm85, %v84
    %s94 = scalar_lea.vmem %s0, 99
    %v95 = vld.sshfl [vmem:[%s94] sm:$0xff pattern:$0xccccc480]
    %s96 = scalar_lea.vmem %s0, 115
    %v97 = vld.sshfl [vmem:[%s96] sm:$0xff pattern:$0xc4800000]
    %vm98 = vcmask 1047556
    %v99 = vsel %vm98, %v97, %v95
    %100 = vrot.lane.b32.xlu0 %v99, 96
    %v101 = vpop.permute.xlu0 %100
    %vm102 = vcmask 1048320
    %s103 = scalar_lea.vmem [#allocation0], 96
    %104 = vst.msk [vmem:[%s103] sm:$0x3] %vm102, %v101
    %s105 = scalar_lea.vmem [#allocation0], 102
    %106 = vst.msk [vmem:[%s105] sm:$0xc] %vm102, %v101
    %s107 = scalar_lea.vmem [#allocation0], 108
    %108 = vst.msk [vmem:[%s107] sm:$0x30] %vm102, %v101
    %s109 = scalar_lea.vmem [#allocation0], 114
    %110 = vst.msk [vmem:[%s109] sm:$0xc0] %vm102, %v101
    %s111 = scalar_lea.vmem %s0, 2
    %v112 = vld.sshfl [vmem:[%s111] sm:$0xff pattern:$0xccccc480]
    %s113 = scalar_lea.vmem %s0, 18
    %v114 = vld.sshfl [vmem:[%s113] sm:$0xff pattern:$0xc4800000]
    %vm115 = vcmask 1047556
    %v116 = vsel %vm115, %v114, %v112
    %117 = vrot.lane.b32.xlu0 %v116, 64
    %v118 = vpop.permute.xlu0 %117
    %vm119 = vcmask 785920
    %120 = vst.msk [vmem:[#allocation0] sm:$0x3] %vm119, %v118
    %s121 = scalar_lea.vmem [#allocation0], 6
    %122 = vst.msk [vmem:[%s121] sm:$0xc] %vm119, %v118
    %s123 = scalar_lea.vmem [#allocation0], 12
    %124 = vst.msk [vmem:[%s123] sm:$0x30] %vm119, %v118
    %s125 = scalar_lea.vmem [#allocation0], 18
    %126 = vst.msk [vmem:[%s125] sm:$0xc0] %vm119, %v118
    %s127 = scalar_lea.vmem %s0, 34
    %v128 = vld.sshfl [vmem:[%s127] sm:$0xff pattern:$0xccccc480]
    %s129 = scalar_lea.vmem %s0, 50
    %v130 = vld.sshfl [vmem:[%s129] sm:$0xff pattern:$0xc4800000]
    %vm131 = vcmask 1047556
    %v132 = vsel %vm131, %v130, %v128
    %133 = vrot.lane.b32.xlu0 %v132, 64
    %v134 = vpop.permute.xlu0 %133
    %vm135 = vcmask 785920
    %s136 = scalar_lea.vmem [#allocation0], 32
    %137 = vst.msk [vmem:[%s136] sm:$0x3] %vm135, %v134
    %s138 = scalar_lea.vmem [#allocation0], 38
    %139 = vst.msk [vmem:[%s138] sm:$0xc] %vm135, %v134
    %s140 = scalar_lea.vmem [#allocation0], 44
    %141 = vst.msk [vmem:[%s140] sm:$0x30] %vm135, %v134
    %s142 = scalar_lea.vmem [#allocation0], 50
    %143 = vst.msk [vmem:[%s142] sm:$0xc0] %vm135, %v134
    %s144 = scalar_lea.vmem %s0, 66
    %v145 = vld.sshfl [vmem:[%s144] sm:$0xff pattern:$0xccccc480]
    %s146 = scalar_lea.vmem %s0, 82
    %v147 = vld.sshfl [vmem:[%s146] sm:$0xff pattern:$0xc4800000]
    %vm148 = vcmask 1047556
    %v149 = vsel %vm148, %v147, %v145
    %150 = vrot.lane.b32.xlu0 %v149, 64
    %v151 = vpop.permute.xlu0 %150
    %vm152 = vcmask 785920
    %s153 = scalar_lea.vmem [#allocation0], 64
    %154 = vst.msk [vmem:[%s153] sm:$0x3] %vm152, %v151
    %s155 = scalar_lea.vmem [#allocation0], 70
    %156 = vst.msk [vmem:[%s155] sm:$0xc] %vm152, %v151
    %s157 = scalar_lea.vmem [#allocation0], 76
    %158 = vst.msk [vmem:[%s157] sm:$0x30] %vm152, %v151
    %s159 = scalar_lea.vmem [#allocation0], 82
    %160 = vst.msk [vmem:[%s159] sm:$0xc0] %vm152, %v151
    %s161 = scalar_lea.vmem %s0, 98
    %v162 = vld.sshfl [vmem:[%s161] sm:$0xff pattern:$0xccccc480]
    %s163 = scalar_lea.vmem %s0, 114
    %v164 = vld.sshfl [vmem:[%s163] sm:$0xff pattern:$0xc4800000]
    %vm165 = vcmask 1047556
    %v166 = vsel %vm165, %v164, %v162
    %167 = vrot.lane.b32.xlu0 %v166, 64
    %v168 = vpop.permute.xlu0 %167
    %vm169 = vcmask 785920
    %s170 = scalar_lea.vmem [#allocation0], 96
    %171 = vst.msk [vmem:[%s170] sm:$0x3] %vm169, %v168
    %s172 = scalar_lea.vmem [#allocation0], 102
    %173 = vst.msk [vmem:[%s172] sm:$0xc] %vm169, %v168
    %s174 = scalar_lea.vmem [#allocation0], 108
    %175 = vst.msk [vmem:[%s174] sm:$0x30] %vm169, %v168
    %s176 = scalar_lea.vmem [#allocation0], 114
    %177 = vst.msk [vmem:[%s176] sm:$0xc0] %vm169, %v168
    %s178 = scalar_lea.vmem %s0, 1
    %v179 = vld.sshfl [vmem:[%s178] sm:$0xff pattern:$0xccccc480]
    %s180 = scalar_lea.vmem %s0, 17
    %v181 = vld.sshfl [vmem:[%s180] sm:$0xff pattern:$0xc4800000]
    %vm182 = vcmask 1047556
    %v183 = vsel %vm182, %v181, %v179
    %184 = vrot.lane.b32.xlu0 %v183, 32
    %v185 = vpop.permute.xlu0 %184
    %vm186 = vcmask 523520
    %187 = vst.msk [vmem:[#allocation0] sm:$0x3] %vm186, %v185
    %s188 = scalar_lea.vmem [#allocation0], 6
    %189 = vst.msk [vmem:[%s188] sm:$0xc] %vm186, %v185
    %s190 = scalar_lea.vmem [#allocation0], 12
    %191 = vst.msk [vmem:[%s190] sm:$0x30] %vm186, %v185
    %s192 = scalar_lea.vmem [#allocation0], 18
    %193 = vst.msk [vmem:[%s192] sm:$0xc0] %vm186, %v185
    %s194 = scalar_lea.vmem %s0, 33
    %v195 = vld.sshfl [vmem:[%s194] sm:$0xff pattern:$0xccccc480]
    %s196 = scalar_lea.vmem %s0, 49
    %v197 = vld.sshfl [vmem:[%s196] sm:$0xff pattern:$0xc4800000]
    %vm198 = vcmask 1047556
    %v199 = vsel %vm198, %v197, %v195
    %200 = vrot.lane.b32.xlu0 %v199, 32
    %v201 = vpop.permute.xlu0 %200
    %vm202 = vcmask 523520
    %s203 = scalar_lea.vmem [#allocation0], 32
    %204 = vst.msk [vmem:[%s203] sm:$0x3] %vm202, %v201
    %s205 = scalar_lea.vmem [#allocation0], 38
    %206 = vst.msk [vmem:[%s205] sm:$0xc] %vm202, %v201
    %s207 = scalar_lea.vmem [#allocation0], 44
    %208 = vst.msk [vmem:[%s207] sm:$0x30] %vm202, %v201
    %s209 = scalar_lea.vmem [#allocation0], 50
    %210 = vst.msk [vmem:[%s209] sm:$0xc0] %vm202, %v201
    %s211 = scalar_lea.vmem %s0, 65
    %v212 = vld.sshfl [vmem:[%s211] sm:$0xff pattern:$0xccccc480]
    %s213 = scalar_lea.vmem %s0, 81
    %v214 = vld.sshfl [vmem:[%s213] sm:$0xff pattern:$0xc4800000]
    %vm215 = vcmask 1047556
    %v216 = vsel %vm215, %v214, %v212
    %217 = vrot.lane.b32.xlu0 %v216, 32
    %v218 = vpop.permute.xlu0 %217
    %vm219 = vcmask 523520
    %s220 = scalar_lea.vmem [#allocation0], 64
    %221 = vst.msk [vmem:[%s220] sm:$0x3] %vm219, %v218
    %s222 = scalar_lea.vmem [#allocation0], 70
    %223 = vst.msk [vmem:[%s222] sm:$0xc] %vm219, %v218
    %s224 = scalar_lea.vmem [#allocation0], 76
    %225 = vst.msk [vmem:[%s224] sm:$0x30] %vm219, %v218
    %s226 = scalar_lea.vmem [#allocation0], 82
    %227 = vst.msk [vmem:[%s226] sm:$0xc0] %vm219, %v218
    %s228 = scalar_lea.vmem %s0, 97
    %v229 = vld.sshfl [vmem:[%s228] sm:$0xff pattern:$0xccccc480]
    %s230 = scalar_lea.vmem %s0, 113
    %v231 = vld.sshfl [vmem:[%s230] sm:$0xff pattern:$0xc4800000]
    %vm232 = vcmask 1047556
    %v233 = vsel %vm232, %v231, %v229
    %234 = vrot.lane.b32.xlu0 %v233, 32
    %v235 = vpop.permute.xlu0 %234
    %vm236 = vcmask 523520
    %s237 = scalar_lea.vmem [#allocation0], 96
    %238 = vst.msk [vmem:[%s237] sm:$0x3] %vm236, %v235
    %s239 = scalar_lea.vmem [#allocation0], 102
    %240 = vst.msk [vmem:[%s239] sm:$0xc] %vm236, %v235
    %s241 = scalar_lea.vmem [#allocation0], 108
    %242 = vst.msk [vmem:[%s241] sm:$0x30] %vm236, %v235
    %s243 = scalar_lea.vmem [#allocation0], 114
    %244 = vst.msk [vmem:[%s243] sm:$0xc0] %vm236, %v235
    %s246 = ssub.s32 4, 1
    %v247 = vld [vmem:[#allocation0] sm:%s246]
    %s249 = ssub.s32 4, 1
    %250 = vst [vmem:[%s1] sm:%s249] %v247
    %s251 = scalar_lea.vmem [#allocation0], 8
    %v252 = vld [vmem:[%s251] sm:%s246]
    %s254 = ssub.s32 4, 1
    %s255 = scalar_lea.vmem %s1, 2
    %256 = vst [vmem:[%s255] sm:%s254] %v252
    %s257 = scalar_lea.vmem [#allocation0], 16
    %v258 = vld [vmem:[%s257] sm:%s246]
    %s260 = ssub.s32 4, 1
    %s261 = scalar_lea.vmem %s1, 4
    %262 = vst [vmem:[%s261] sm:%s260] %v258
    %s263 = scalar_lea.vmem [#allocation0], 24
    %v264 = vld [vmem:[%s263] sm:%s246]
    %s266 = ssub.s32 4, 1
    %s267 = scalar_lea.vmem %s1, 6
    %268 = vst [vmem:[%s267] sm:%s266] %v264
    %s269 = scalar_lea.vmem [#allocation0], 32
    %v270 = vld [vmem:[%s269] sm:%s246]
    %s272 = ssub.s32 4, 1
    %s273 = scalar_lea.vmem %s1, 8
    %274 = vst [vmem:[%s273] sm:%s272] %v270
    %s275 = scalar_lea.vmem [#allocation0], 40
    %v276 = vld [vmem:[%s275] sm:%s246]
    %s278 = ssub.s32 4, 1
    %s279 = scalar_lea.vmem %s1, 10
    %280 = vst [vmem:[%s279] sm:%s278] %v276
    %s281 = scalar_lea.vmem [#allocation0], 48
    %v282 = vld [vmem:[%s281] sm:%s246]
    %s284 = ssub.s32 4, 1
    %s285 = scalar_lea.vmem %s1, 12
    %286 = vst [vmem:[%s285] sm:%s284] %v282
    %s287 = scalar_lea.vmem [#allocation0], 56
    %v288 = vld [vmem:[%s287] sm:%s246]
    %s290 = ssub.s32 4, 1
    %s291 = scalar_lea.vmem %s1, 14
    %292 = vst [vmem:[%s291] sm:%s290] %v288
    %s293 = scalar_lea.vmem [#allocation0], 64
    %v294 = vld [vmem:[%s293] sm:%s246]
    %s296 = ssub.s32 4, 1
    %s297 = scalar_lea.vmem %s1, 16
    %298 = vst [vmem:[%s297] sm:%s296] %v294
    %s299 = scalar_lea.vmem [#allocation0], 72
    %v300 = vld [vmem:[%s299] sm:%s246]
    %s302 = ssub.s32 4, 1
    %s303 = scalar_lea.vmem %s1, 18
    %304 = vst [vmem:[%s303] sm:%s302] %v300
    %s305 = scalar_lea.vmem [#allocation0], 80
    %v306 = vld [vmem:[%s305] sm:%s246]
    %s308 = ssub.s32 4, 1
    %s309 = scalar_lea.vmem %s1, 20
    %310 = vst [vmem:[%s309] sm:%s308] %v306
    %s311 = scalar_lea.vmem [#allocation0], 88
    %v312 = vld [vmem:[%s311] sm:%s246]
    %s314 = ssub.s32 4, 1
    %s315 = scalar_lea.vmem %s1, 22
    %316 = vst [vmem:[%s315] sm:%s314] %v312
    %s317 = scalar_lea.vmem [#allocation0], 96
    %v318 = vld [vmem:[%s317] sm:%s246]
    %s320 = ssub.s32 4, 1
    %s321 = scalar_lea.vmem %s1, 24
    %322 = vst [vmem:[%s321] sm:%s320] %v318
    %s323 = scalar_lea.vmem [#allocation0], 104
    %v324 = vld [vmem:[%s323] sm:%s246]
    %s326 = ssub.s32 4, 1
    %s327 = scalar_lea.vmem %s1, 26
    %328 = vst [vmem:[%s327] sm:%s326] %v324
    %s329 = scalar_lea.vmem [#allocation0], 112
    %v330 = vld [vmem:[%s329] sm:%s246]
    %s332 = ssub.s32 4, 1
    %s333 = scalar_lea.vmem %s1, 28
    %334 = vst [vmem:[%s333] sm:%s332] %v330
    %s335 = scalar_lea.vmem [#allocation0], 120
    %v336 = vld [vmem:[%s335] sm:%s246]
    %s338 = ssub.s32 4, 1
    %s339 = scalar_lea.vmem %s1, 30
    %340 = vst [vmem:[%s339] sm:%s338] %v336

// kernel: fourier_down_block.11
$region0: #{fourier_down_block.11}
  #allocation0 [shape = 'u32[]', space=smem, size = 0x4, offset = 0x4, fixed_abs, tag = 'smem constant byte address 0x4 - core index']
  #allocation1 [shape = 'u32[72,128]{1,0:T(1,128)}', space=vmem, size = 0x9000, scoped, tag = 'internal scratch']
  %s0 = inlined_call_operand.vmem [shape: f32[12,512], index: 0, kind: input, shape index: {}]
  %s1 = inlined_call_operand.vmem [shape: f32[8,12], index: 1, kind: input, shape index: {}]
  %s2 = inlined_call_operand.vmem [shape: f32[8,512], index: 2, kind: input, shape index: {}]
  %s3 = inlined_call_operand.vmem [shape: f32[8,512], index: 3, kind: output, shape index: {}]
  %s4 = sld [smem:[#allocation0]]
  $region68: #{fourier_down_block.11} parent=0
    _
  %s6 = ssub.s32 1, %s4
  %s7 = scalar_select 0, %s6, %s4
  $region1: #{fourier_down_block.11} parent=0
    #allocation2 [shape = 'u8[32768]{0}', space=vmem, size = 0x8000, scoped, tag = 'input window, operand 0']
    loop: start=0, step=1, limit=4
    $region2: #{fourier_down_block.11} parent=1 // loop_pre_header
      _
    $region3: #{fourier_down_block.11} parent=1 // loop_header
      %s9 = sphi 0, %s13
      %p10 = scmp.ge.s32.totalorder %s9, 4
      %s19 = sphi 0, %s21
      %s22 = sphi 0, %s19
      %s23 = sphi 0, %s22
      %s39 = sphi 0, %s23
      %s43 = sphi 0, %s43
      %s45 = sphi 0, %s43
      %s46 = sphi 0, %s45
      %s60 = sphi 0, %s46
      %s66 = sphi 0, %s68
      %s69 = sphi 0, %s66
      %s70 = sphi 0, %s69
      %s86 = sphi 0, %s70
      %s92 = sphi 0, %s94
      %s95 = sphi 0, %s92
      %s96 = sphi 0, %s95
      %s112 = sphi 0, %s96
    $region4: #{fourier_down_block.11} parent=1 // loop_header_branch
      %12 = sbr.rel (%p10) target = $region8
    $region5: #{fourier_down_block.11} parent=1 // loop_body
      %s14 = ssub.s32 %s9, 1
      %s15 = ssub.s32 %s9, 2
      %s16 = sadd.s32 %s9, 1
      %s17 = ssub.s32 %s9, %s16
      %p18 = scmp.eq.s32.totalorder %s17, 0
      %s20 = sadd.s32 %s19, 1
      %s21 = scalar_select %p18, %s19, %s20
      %p24 = pneg %p18
      %p25 = scmp.eq.s32.totalorder %s9, 1
      %p26 = por %p24, %p25
      %p27 = scmp.ne.s32.totalorder %s19, %s22
      %p28 = scmp.eq.s32.totalorder %s9, 0
      %p29 = por %p27, %p28
      %p30 = scmp.ne.s32.totalorder %s19, %s22
      %p31 = scmp.eq.s32.totalorder %s14, 1
      %p32 = por %p30, %p31
      %p33 = scmp.ne.s32.totalorder %s22, %s23
      %p34 = scmp.eq.s32.totalorder %s14, 0
      %p35 = por %p33, %p34
      %p36 = scmp.ne.s32.totalorder %s22, %s23
      %p37 = scmp.eq.s32.totalorder %s15, 1
      %p38 = por %p36, %p37
      %p40 = scmp.ne.s32.totalorder %s23, %s39
      %p41 = scmp.eq.s32.totalorder %s15, 0
      %p42 = por %p40, %p41
      %s44 = sadd.s32 %s43, 1
      %p47 = scmp.eq.s32.totalorder %s9, 1
      %p48 = scmp.ne.s32.totalorder %s43, %s45
      %p49 = scmp.eq.s32.totalorder %s9, 0
      %p50 = por %p48, %p49
      %p51 = scmp.ne.s32.totalorder %s43, %s45
      %p52 = scmp.eq.s32.totalorder %s14, 1
      %p53 = por %p51, %p52
      %p54 = scmp.ne.s32.totalorder %s45, %s46
      %p55 = scmp.eq.s32.totalorder %s14, 0
      %p56 = por %p54, %p55
      %p57 = scmp.ne.s32.totalorder %s45, %s46
      %p58 = scmp.eq.s32.totalorder %s15, 1
      %p59 = por %p57, %p58
      %p61 = scmp.ne.s32.totalorder %s46, %s60
      %p62 = scmp.eq.s32.totalorder %s15, 0
      %p63 = por %p61, %p62
      %s64 = ssub.s32 %s9, %s16
      %p65 = scmp.eq.s32.totalorder %s64, 0
      %s67 = sadd.s32 %s66, 1
      %s68 = scalar_select %p65, %s66, %s67
      %p71 = pneg %p65
      %p72 = scmp.eq.s32.totalorder %s9, 1
      %p73 = por %p71, %p72
      %p74 = scmp.ne.s32.totalorder %s66, %s69
      %p75 = scmp.eq.s32.totalorder %s9, 0
      %p76 = por %p74, %p75
      %p77 = scmp.ne.s32.totalorder %s66, %s69
      %p78 = scmp.eq.s32.totalorder %s14, 1
      %p79 = por %p77, %p78
      %p80 = scmp.ne.s32.totalorder %s69, %s70
      %p81 = scmp.eq.s32.totalorder %s14, 0
      %p82 = por %p80, %p81
      %p83 = scmp.ne.s32.totalorder %s69, %s70
      %p84 = scmp.eq.s32.totalorder %s15, 1
      %p85 = por %p83, %p84
      %p87 = scmp.ne.s32.totalorder %s70, %s86
      %p88 = scmp.eq.s32.totalorder %s15, 0
      %p89 = por %p87, %p88
      %s90 = ssub.s32 %s9, %s16
      %p91 = scmp.eq.s32.totalorder %s90, 0
      %s93 = sadd.s32 %s92, 1
      %s94 = scalar_select %p91, %s92, %s93
      %p97 = pneg %p91
      %p98 = scmp.eq.s32.totalorder %s9, 1
      %p99 = por %p97, %p98
      %p100 = scmp.ne.s32.totalorder %s92, %s95
      %p101 = scmp.eq.s32.totalorder %s9, 0
      %p102 = por %p100, %p101
      %p103 = scmp.ne.s32.totalorder %s92, %s95
      %p104 = scmp.eq.s32.totalorder %s14, 1
      %p105 = por %p103, %p104
      %p106 = scmp.ne.s32.totalorder %s95, %s96
      %p107 = scmp.eq.s32.totalorder %s14, 0
      %p108 = por %p106, %p107
      %p109 = scmp.ne.s32.totalorder %s95, %s96
      %p110 = scmp.eq.s32.totalorder %s15, 1
      %p111 = por %p109, %p110
      %p113 = scmp.ne.s32.totalorder %s96, %s112
      %p114 = scmp.eq.s32.totalorder %s15, 0
      %p115 = por %p113, %p114
      %p116 = scmp.le.s32.totalorder 1, %s9
      %p117 = scmp.lt.s32.totalorder %s9, 3
      %p118 = pnand %p116, %p117
      %p119 = pneg %p118
      // Predicated region
      $region9: #{fourier_down_block.11} parent=5 // pred_check
        _
      $region10: #{fourier_down_block.11} parent=5 // pred_check_branch
        %121 = sbr.rel (%p118) target = $region12
      $region11: #{fourier_down_block.11} parent=5 // pred_region
        %s122 = ssub.s32 %s9, 1
        // Predicated region
        $region13: #{fourier_down_block.11} parent=11 // pred_check
          %p123 = pneg %p56
        $region14: #{fourier_down_block.11} parent=11 // pred_check_branch
          %125 = sbr.rel (%p123) target = $region16
        $region15: #{fourier_down_block.11} parent=11 // pred_region
          _
        $region16: #{fourier_down_block.11} parent=11 // pred_fallthru
          _
      $region12: #{fourier_down_block.11} parent=5 // pred_fallthru
        _
      %p126 = scmp.lt.s32.totalorder %s9, 2
      // Predicated region
      $region17: #{fourier_down_block.11} parent=5 // pred_check
        %p127 = pneg %p126
      $region18: #{fourier_down_block.11} parent=5 // pred_check_branch
        %129 = sbr.rel (%p127) target = $region20
      $region19: #{fourier_down_block.11} parent=5 // pred_region
        // Predicated region
        $region21: #{fourier_down_block.11} parent=19 // pred_check
          %p130 = pneg %p29
        $region22: #{fourier_down_block.11} parent=19 // pred_check_branch
          %132 = sbr.rel (%p130) target = $region24
        $region23: #{fourier_down_block.11} parent=19 // pred_region
          %s133 = sand.u32 %s19, 1
          %s134 = sand.u32 %s19, 1
          %s135 = smul.addr %s134, 32
          %s136 = scalar_lea.vmem [#allocation2], %s135
          %s137 = smul.u32 2, %s9
          %s138 = smul.addr %s137, 8
          %s139 = scalar_lea.vmem %s0, %s138
          // Predicated region
          $region25: #{fourier_down_block.11} parent=23 // pred_check
            _
          $region26: #{fourier_down_block.11} parent=23 // pred_check_branch
            %141 = sbr.rel (0) target = $region28
          $region27: #{fourier_down_block.11} parent=23 // pred_region
            // Predicated region
            $region29: #{fourier_down_block.11} parent=27 // pred_check
              _
            $region30: #{fourier_down_block.11} parent=27 // pred_check_branch
              %143 = sbr.rel (0) target = $region32
            $region31: #{fourier_down_block.11} parent=27 // pred_region
              loop: start=0, step=1, limit=1
              $region33: #{fourier_down_block.11} parent=31 // loop_pre_header
                _
              $region34: #{fourier_down_block.11} parent=31 // loop_header
                %s145 = sphi 0, %s149
                %p146 = scmp.ge.s32.totalorder %s145, 1
                %s150 = sphi %s139, %s139
                %s151 = sphi %s136, %s136
              $region35: #{fourier_down_block.11} parent=31 // loop_header_branch
                %148 = sbr.rel (%p146) target = $region39
              $region36: #{fourier_down_block.11} parent=31 // loop_body
                %v152 = vld [vmem:[%s150] sm:$0xff]
                %153 = vst [vmem:[%s151] sm:$0xff] %v152
                %v154 = vld [vmem:[%s150 + $0x8] sm:$0xff]
                %155 = vst [vmem:[%s151 + $0x8] sm:$0xff] %v154
                %v156 = vld [vmem:[%s150 + $0x20] sm:$0xff]
                %157 = vst [vmem:[%s151 + $0x10] sm:$0xff] %v156
                %v158 = vld [vmem:[%s150 + $0x28] sm:$0xff]
                %159 = vst [vmem:[%s151 + $0x18] sm:$0xff] %v158
              $region37: #{fourier_down_block.11} parent=31 // loop_footer
                %s149 = sadd.s32 1, %s145
              $region38: #{fourier_down_block.11} parent=31 // loop_footer_branch
                %144 = sbr.rel target = $region34
              $region39: #{fourier_down_block.11} parent=31 // loop_exit
                _
            $region32: #{fourier_down_block.11} parent=27 // pred_fallthru
              _
            // Predicated region
            $region40: #{fourier_down_block.11} parent=27 // pred_check
              _
            $region41: #{fourier_down_block.11} parent=27 // pred_check_branch
              %161 = sbr.rel target = $region43
            $region42: #{fourier_down_block.11} parent=27 // pred_region
              _
            $region43: #{fourier_down_block.11} parent=27 // pred_fallthru
              _
          $region28: #{fourier_down_block.11} parent=23 // pred_fallthru
            _
          %162 = vnop
        $region24: #{fourier_down_block.11} parent=19 // pred_fallthru
          _
        // Predicated region
        $region44: #{fourier_down_block.11} parent=19 // pred_check
          %p163 = pneg %p76
        $region45: #{fourier_down_block.11} parent=19 // pred_check_branch
          %165 = sbr.rel (%p163) target = $region47
        $region46: #{fourier_down_block.11} parent=19 // pred_region
          %s166 = smul.u32 2, %s9
          %p167 = scmp.lt.s32.totalorder %s166, 3
          %s168 = scalar_select %p167, %s166, 3
          %s169 = smul.addr %s168, 8
          %s170 = scalar_lea.vmem %s2, %s169
          %s171 = smul.u32 2, %s9
        $region47: #{fourier_down_block.11} parent=19 // pred_fallthru
          _
      $region20: #{fourier_down_block.11} parent=5 // pred_fallthru
        _
      %p172 = scmp.le.s32.totalorder 1, %s9
      %p173 = scmp.lt.s32.totalorder %s9, 3
      %p174 = pnand %p172, %p173
      %p175 = pneg %p174
      // Predicated region
      $region48: #{fourier_down_block.11} parent=5 // pred_check
        _
      $region49: #{fourier_down_block.11} parent=5 // pred_check_branch
        %177 = sbr.rel (%p174) target = $region51
      $region50: #{fourier_down_block.11} parent=5 // pred_region
        %s178 = ssub.s32 %s9, 1
        %s179 = sand.u32 %s22, 1
        %s180 = sand.u32 %s22, 1
        %s181 = smul.addr %s180, 32
        %s182 = scalar_lea.vmem [#allocation2], %s181
        // Predicated region
        $region52: #{fourier_down_block.11} parent=50 // pred_check
          %p183 = pneg %p35
        $region53: #{fourier_down_block.11} parent=50 // pred_check_branch
          %185 = sbr.rel (%p183) target = $region55
        $region54: #{fourier_down_block.11} parent=50 // pred_region
          _
        $region55: #{fourier_down_block.11} parent=50 // pred_fallthru
          _
        %s186 = sand.u32 %s22, 1
        %s187 = sand.u32 %s22, 1
        %s188 = smul.addr %s187, 32
        %s189 = scalar_lea.vmem [#allocation2], %s188
        %p190 = pneg %p35
        %p191 = pneg %p32
        %p192 = pneg %p56
        %p193 = pneg %p53
        %s194 = smul.u32 2, %s14
        %p195 = scmp.lt.s32.totalorder %s194, 3
        %s196 = scalar_select %p195, %s194, 3
        %s197 = smul.addr %s196, 8
        %s198 = scalar_lea.vmem %s2, %s197
        %p199 = pneg %p82
        %p200 = pneg %p79
        %p201 = pneg %p108
        %p202 = pneg %p105
        %s203 = smul.u32 2, %s14
        %p204 = scmp.lt.s32.totalorder %s203, 3
        %s205 = scalar_select %p204, %s203, 3
        %s206 = smul.addr %s205, 8
        %s207 = scalar_lea.vmem %s3, %s206
        %s208 = smul.u32 2, %s14
        %s209 = smul.u32 2, %s14
        %p210 = scmp.lt.s32.totalorder %s209, 3
        %s211 = scalar_select %p210, %s209, 3
        %s212 = smul.addr %s211, 8
        %s213 = scalar_lea.vmem %s2, %s212
        %s214 = smul.u32 2, %s14
        %s215 = smul.u32 2, %s14
        %p216 = scmp.lt.s32.totalorder %s215, 3
        %s217 = scalar_select %p216, %s215, 3
        %s218 = smul.addr %s217, 8
        %s219 = scalar_lea.vmem %s3, %s218
        %s220 = smul.u32 2, %s14
        %v221 = vld [vmem:[%s1] sm:$0xff]
        %v222 = vld [vmem:[%s182] sm:$0xff]
        %v223 = vld [vmem:[%s182 + $0x8] sm:$0xff]
        %v224 = vld [vmem:[%s182 + $0x10] sm:$0xf]
        %v225 = vld [vmem:[%s182 + $0x18] sm:$0xf]
        %v226 = vld [vmem:[%s213] sm:$0xff]
        %v227 = vld [vmem:[%s213 + $0x8] sm:$0xff]
        %vm228 = vcmask 97280
        %v230 = vsel %vm228, %v221, 0
        %vm232 = vcmask 1043456
        %v234 = vsel %vm232, %v224, 0
        %v237 = vsel %vm232, %v225, 0
        %239 = vmatpush.msra.mxu0 0.0
        %240 = vmatpush.msra.mxu0 0.0
        %241 = vmatpush.msra.mxu0 0.0
        %242 = vmatpush.msra.mxu0 0.0
        %243 = vmatpush.msra.mxu0 0.0
        %244 = vmatpush.msra.mxu0 0.0
        %245 = vmatpush.msra.mxu0 0.0
        %246 = vmatpush.msra.mxu0 0.0
        %247 = vmatpush.msra.mxu0 0.0
        %248 = vmatpush.msra.mxu0 0.0
        %249 = vmatpush.msra.mxu0 0.0
        %250 = vmatpush.msra.mxu0 0.0
        %251 = vmatpush.msra.mxu0 0.0
        %252 = vmatpush.msra.mxu0 0.0
        %253 = vmatpush.msra.mxu0 %v234
        %254 = vmatpush.msra.mxu0 %v222
        %255 = vmatmul.f32.gmra.mxu0 %v230
        %v256 = vpop.f32.mrf.mxu0
        %v257 = vadd.f32 %v226, %v256
        %258 = vdwg.mxu0
        %259 = vmatpush.msra.mxu0 0.0
        %260 = vmatpush.msra.mxu0 0.0
        %261 = vmatpush.msra.mxu0 0.0
        %262 = vmatpush.msra.mxu0 0.0
        %263 = vmatpush.msra.mxu0 0.0
        %264 = vmatpush.msra.mxu0 0.0
        %265 = vmatpush.msra.mxu0 0.0
        %266 = vmatpush.msra.mxu0 0.0
        %267 = vmatpush.msra.mxu0 0.0
        %268 = vmatpush.msra.mxu0 0.0
        %269 = vmatpush.msra.mxu0 0.0
        %270 = vmatpush.msra.mxu0 0.0
        %271 = vmatpush.msra.mxu0 0.0
        %272 = vmatpush.msra.mxu0 0.0
        %273 = vmatpush.msra.mxu0 %v237
        %274 = vmatpush.msra.mxu0 %v223
        %275 = vmatmul.f32.gmra.mxu0 %v230
        %v276 = vpop.f32.mrf.mxu0
        %v277 = vadd.f32 %v227, %v276
        %278 = vdwg.mxu0
        %279 = vst [vmem:[%s219] sm:$0xff] %v257
        %280 = vst [vmem:[%s219 + $0x8] sm:$0xff] %v277
        %s281 = smul.u32 2, %s14
        %p282 = scmp.lt.s32.totalorder %s281, 3
        %s283 = scalar_select %p282, %s281, 3
        %s284 = smul.addr %s283, 8
        %s285 = scalar_lea.vmem %s3, %s284
        // Predicated region
        $region56: #{fourier_down_block.11} parent=50 // pred_check
          %p286 = pneg %p105
        $region57: #{fourier_down_block.11} parent=50 // pred_check_branch
          %288 = sbr.rel (%p286) target = $region59
        $region58: #{fourier_down_block.11} parent=50 // pred_region
          %s289 = smul.u32 2, %s14
        $region59: #{fourier_down_block.11} parent=50 // pred_fallthru
          _
      $region51: #{fourier_down_block.11} parent=5 // pred_fallthru
        _
      %p290 = scmp.le.s32.totalorder 2, %s9
      // Predicated region
      $region60: #{fourier_down_block.11} parent=5 // pred_check
        %p291 = pneg %p290
      $region61: #{fourier_down_block.11} parent=5 // pred_check_branch
        %293 = sbr.rel (%p291) target = $region63
      $region62: #{fourier_down_block.11} parent=5 // pred_region
        %s294 = ssub.s32 %s9, 2
        // Predicated region
        $region64: #{fourier_down_block.11} parent=62 // pred_check
          %p295 = pneg %p111
        $region65: #{fourier_down_block.11} parent=62 // pred_check_branch
          %297 = sbr.rel (%p295) target = $region67
        $region66: #{fourier_down_block.11} parent=62 // pred_region
          %s298 = smul.u32 2, %s15
          %p299 = scmp.lt.s32.totalorder %s298, 3
          %s300 = scalar_select %p299, %s298, 3
          %s301 = smul.addr %s300, 8
          %s302 = scalar_lea.vmem %s3, %s301
        $region67: #{fourier_down_block.11} parent=62 // pred_fallthru
          _
      $region63: #{fourier_down_block.11} parent=5 // pred_fallthru
        _
    $region6: #{fourier_down_block.11} parent=1 // loop_footer
      %s13 = sadd.s32 1, %s9
    $region7: #{fourier_down_block.11} parent=1 // loop_footer_branch
      %8 = sbr.rel target = $region3
    $region8: #{fourier_down_block.11} parent=1 // loop_exit
      _

// kernel: fourier_down_block.10
$region0: #{fourier_down_block.10}
  #allocation0 [shape = 'u32[]', space=smem, size = 0x4, offset = 0x4, fixed_abs, tag = 'smem constant byte address 0x4 - core index']
  #allocation1 [shape = 'u32[72,128]{1,0:T(1,128)}', space=vmem, size = 0x9000, scoped, tag = 'internal scratch']
  %s0 = inlined_call_operand.vmem [shape: f32[8,2,256], index: 0, kind: input, shape index: {}]
  %s1 = inlined_call_operand.vmem [shape: f32[8,2,256], index: 1, kind: input, shape index: {}]
  %s2 = inlined_call_operand.vmem [shape: f32[8,1,256], index: 2, kind: input, shape index: {}]
  %s3 = inlined_call_operand.vmem [shape: f32[8,1,256], index: 3, kind: input, shape index: {}]
  %s4 = inlined_call_operand.vmem [shape: f32[2,256], index: 4, kind: output, shape index: {0}]
  %s5 = inlined_call_operand.vmem [shape: f32[2,256], index: 5, kind: output, shape index: {1}]
  %6 = xla_tuple %s4, %s5
  %s7 = sld [smem:[#allocation0]]
  $region34: #{fourier_down_block.10} parent=0
    _
  %s9 = ssub.s32 1, %s7
  %s10 = scalar_select 0, %s9, %s7
  // Predicated region
  $region2: #{fourier_down_block.10} parent=0 // pred_check
    _
  $region3: #{fourier_down_block.10} parent=0 // pred_check_branch
    %12 = sbr.rel (0) target = $region5
  $region4: #{fourier_down_block.10} parent=0 // pred_region
    _
  $region5: #{fourier_down_block.10} parent=0 // pred_fallthru
    _
  // Predicated region
  $region6: #{fourier_down_block.10} parent=0 // pred_check
    _
  $region7: #{fourier_down_block.10} parent=0 // pred_check_branch
    %14 = sbr.rel (0) target = $region9
  $region8: #{fourier_down_block.10} parent=0 // pred_region
    _
  $region9: #{fourier_down_block.10} parent=0 // pred_fallthru
    _
  // Predicated region
  $region10: #{fourier_down_block.10} parent=0 // pred_check
    _
  $region11: #{fourier_down_block.10} parent=0 // pred_check_branch
    %16 = sbr.rel (0) target = $region13
  $region12: #{fourier_down_block.10} parent=0 // pred_region
    _
  $region13: #{fourier_down_block.10} parent=0 // pred_fallthru
    _
  // Predicated region
  $region14: #{fourier_down_block.10} parent=0 // pred_check
    _
  $region15: #{fourier_down_block.10} parent=0 // pred_check_branch
    %18 = sbr.rel (0) target = $region17
  $region16: #{fourier_down_block.10} parent=0 // pred_region
    _
  $region17: #{fourier_down_block.10} parent=0 // pred_fallthru
    _
  %v19 = vld [vmem:[%s0] sm:$0xf]
  %v20 = vld [vmem:[%s1] sm:$0xf]
  %v21 = vld [vmem:[%s2] sm:$0x3]
  %v22 = vld [vmem:[%s3] sm:$0x3]
  %v24 = vperm.slane %v21, 0
  %v25 = vperm.slane %v21, 1
  %v26 = vrot.slane %v25, 6
  %vm27 = vcmask 1041408
  %v28 = vsel %vm27, %v24, %v26
  %v30 = vmul.f32 %v19, %v28
  %v31 = vadd.f32 %v30, 0.0
  %v33 = vperm.slane %v22, 0
  %v34 = vperm.slane %v22, 1
  %v35 = vrot.slane %v34, 6
  %v36 = vsel %vm27, %v33, %v35
  %v38 = vmul.f32 %v20, %v36
  %v39 = vsub.f32 %v31, %v38
  %v40 = vmul.f32 %v19, %v36
  %v41 = vadd.f32 %v40, 0.0
  %v42 = vmul.f32 %v20, %v28
  %v43 = vadd.f32 %v41, %v42
  %s44 = scalar_lea.vmem %s0, 4
  %v45 = vld [vmem:[%s44] sm:$0xf]
  %s46 = scalar_lea.vmem %s1, 4
  %v47 = vld [vmem:[%s46] sm:$0xf]
  %s48 = scalar_lea.vmem %s2, 2
  %v49 = vld [vmem:[%s48] sm:$0x3]
  %s50 = scalar_lea.vmem %s3, 2
  %v51 = vld [vmem:[%s50] sm:$0x3]
  %v53 = vperm.slane %v49, 0
  %v54 = vperm.slane %v49, 1
  %v55 = vrot.slane %v54, 6
  %v56 = vsel %vm27, %v53, %v55
  %v58 = vmul.f32 %v45, %v56
  %v59 = vadd.f32 %v39, %v58
  %v61 = vperm.slane %v51, 0
  %v62 = vperm.slane %v51, 1
  %v63 = vrot.slane %v62, 6
  %v64 = vsel %vm27, %v61, %v63
  %v66 = vmul.f32 %v47, %v64
  %v67 = vsub.f32 %v59, %v66
  %v68 = vmul.f32 %v45, %v64
  %v69 = vadd.f32 %v43, %v68
  %v70 = vmul.f32 %v47, %v56
  %v71 = vadd.f32 %v69, %v70
  %s72 = scalar_lea.vmem %s0, 8
  %v73 = vld [vmem:[%s72] sm:$0xf]
  %s74 = scalar_lea.vmem %s1, 8
  %v75 = vld [vmem:[%s74] sm:$0xf]
  %s76 = scalar_lea.vmem %s2, 4
  %v77 = vld [vmem:[%s76] sm:$0x3]
  %s78 = scalar_lea.vmem %s3, 4
  %v79 = vld [vmem:[%s78] sm:$0x3]
  %v81 = vperm.slane %v77, 0
  %v82 = vperm.slane %v77, 1
  %v83 = vrot.slane %v82, 6
  %v84 = vsel %vm27, %v81, %v83
  %v86 = vmul.f32 %v73, %v84
  %v87 = vadd.f32 %v67, %v86
  %v89 = vperm.slane %v79, 0
  %v90 = vperm.slane %v79, 1
  %v91 = vrot.slane %v90, 6
  %v92 = vsel %vm27, %v89, %v91
  %v94 = vmul.f32 %v75, %v92
  %v95 = vsub.f32 %v87, %v94
  %v96 = vmul.f32 %v73, %v92
  %v97 = vadd.f32 %v71, %v96
  %v98 = vmul.f32 %v75, %v84
  %v99 = vadd.f32 %v97, %v98
  %s100 = scalar_lea.vmem %s0, 12
  %v101 = vld [vmem:[%s100] sm:$0xf]
  %s102 = scalar_lea.vmem %s1, 12
  %v103 = vld [vmem:[%s102] sm:$0xf]
  %s104 = scalar_lea.vmem %s2, 6
  %v105 = vld [vmem:[%s104] sm:$0x3]
  %s106 = scalar_lea.vmem %s3, 6
  %v107 = vld [vmem:[%s106] sm:$0x3]
  %v109 = vperm.slane %v105, 0
  %v110 = vperm.slane %v105, 1
  %v111 = vrot.slane %v110, 6
  %v112 = vsel %vm27, %v109, %v111
  %v114 = vmul.f32 %v101, %v112
  %v115 = vadd.f32 %v95, %v114
  %v117 = vperm.slane %v107, 0
  %v118 = vperm.slane %v107, 1
  %v119 = vrot.slane %v118, 6
  %v120 = vsel %vm27, %v117, %v119
  %v122 = vmul.f32 %v103, %v120
  %v123 = vsub.f32 %v115, %v122
  %v124 = vmul.f32 %v101, %v120
  %v125 = vadd.f32 %v99, %v124
  %v126 = vmul.f32 %v103, %v112
  %v127 = vadd.f32 %v125, %v126
  %s128 = scalar_lea.vmem %s0, 16
  %v129 = vld [vmem:[%s128] sm:$0xf]
  %s130 = scalar_lea.vmem %s1, 16
  %v131 = vld [vmem:[%s130] sm:$0xf]
  %s132 = scalar_lea.vmem %s2, 8
  %v133 = vld [vmem:[%s132] sm:$0x3]
  %s134 = scalar_lea.vmem %s3, 8
  %v135 = vld [vmem:[%s134] sm:$0x3]
  %v137 = vperm.slane %v133, 0
  %v138 = vperm.slane %v133, 1
  %v139 = vrot.slane %v138, 6
  %v140 = vsel %vm27, %v137, %v139
  %v142 = vmul.f32 %v129, %v140
  %v143 = vadd.f32 %v123, %v142
  %v145 = vperm.slane %v135, 0
  %v146 = vperm.slane %v135, 1
  %v147 = vrot.slane %v146, 6
  %v148 = vsel %vm27, %v145, %v147
  %v150 = vmul.f32 %v131, %v148
  %v151 = vsub.f32 %v143, %v150
  %v152 = vmul.f32 %v129, %v148
  %v153 = vadd.f32 %v127, %v152
  %v154 = vmul.f32 %v131, %v140
  %v155 = vadd.f32 %v153, %v154
  %s156 = scalar_lea.vmem %s0, 20
  %v157 = vld [vmem:[%s156] sm:$0xf]
  %s158 = scalar_lea.vmem %s1, 20
  %v159 = vld [vmem:[%s158] sm:$0xf]
  %s160 = scalar_lea.vmem %s2, 10
  %v161 = vld [vmem:[%s160] sm:$0x3]
  %s162 = scalar_lea.vmem %s3, 10
  %v163 = vld [vmem:[%s162] sm:$0x3]
  %v165 = vperm.slane %v161, 0
  %v166 = vperm.slane %v161, 1
  %v167 = vrot.slane %v166, 6
  %v168 = vsel %vm27, %v165, %v167
  %v170 = vmul.f32 %v157, %v168
  %v171 = vadd.f32 %v151, %v170
  %v173 = vperm.slane %v163, 0
  %v174 = vperm.slane %v163, 1
  %v175 = vrot.slane %v174, 6
  %v176 = vsel %vm27, %v173, %v175
  %v178 = vmul.f32 %v159, %v176
  %v179 = vsub.f32 %v171, %v178
  %v180 = vmul.f32 %v157, %v176
  %v181 = vadd.f32 %v155, %v180
  %v182 = vmul.f32 %v159, %v168
  %v183 = vadd.f32 %v181, %v182
  %s184 = scalar_lea.vmem %s0, 24
  %v185 = vld [vmem:[%s184] sm:$0xf]
  %s186 = scalar_lea.vmem %s1, 24
  %v187 = vld [vmem:[%s186] sm:$0xf]
  %s188 = scalar_lea.vmem %s2, 12
  %v189 = vld [vmem:[%s188] sm:$0x3]
  %s190 = scalar_lea.vmem %s3, 12
  %v191 = vld [vmem:[%s190] sm:$0x3]
  %v193 = vperm.slane %v189, 0
  %v194 = vperm.slane %v189, 1
  %v195 = vrot.slane %v194, 6
  %v196 = vsel %vm27, %v193, %v195
  %v198 = vmul.f32 %v185, %v196
  %v199 = vadd.f32 %v179, %v198
  %v201 = vperm.slane %v191, 0
  %v202 = vperm.slane %v191, 1
  %v203 = vrot.slane %v202, 6
  %v204 = vsel %vm27, %v201, %v203
  %v206 = vmul.f32 %v187, %v204
  %v207 = vsub.f32 %v199, %v206
  %v208 = vmul.f32 %v185, %v204
  %v209 = vadd.f32 %v183, %v208
  %v210 = vmul.f32 %v187, %v196
  %v211 = vadd.f32 %v209, %v210
  %s212 = scalar_lea.vmem %s0, 28
  %v213 = vld [vmem:[%s212] sm:$0xf]
  %s214 = scalar_lea.vmem %s1, 28
  %v215 = vld [vmem:[%s214] sm:$0xf]
  %s216 = scalar_lea.vmem %s2, 14
  %v217 = vld [vmem:[%s216] sm:$0x3]
  %s218 = scalar_lea.vmem %s3, 14
  %v219 = vld [vmem:[%s218] sm:$0x3]
  %v221 = vperm.slane %v217, 0
  %v222 = vperm.slane %v217, 1
  %v223 = vrot.slane %v222, 6
  %v224 = vsel %vm27, %v221, %v223
  %v226 = vmul.f32 %v213, %v224
  %v227 = vadd.f32 %v207, %v226
  %v229 = vperm.slane %v219, 0
  %v230 = vperm.slane %v219, 1
  %v231 = vrot.slane %v230, 6
  %v232 = vsel %vm27, %v229, %v231
  %v234 = vmul.f32 %v215, %v232
  %v235 = vsub.f32 %v227, %v234
  %v236 = vmul.f32 %v213, %v232
  %v237 = vadd.f32 %v211, %v236
  %v238 = vmul.f32 %v215, %v224
  %v239 = vadd.f32 %v237, %v238
  %240 = vst [vmem:[%s4] sm:$0xf] %v235
  %241 = vst [vmem:[%s5] sm:$0xf] %v239
  // Predicated region
  $region18: #{fourier_down_block.10} parent=0 // pred_check
    _
  $region19: #{fourier_down_block.10} parent=0 // pred_check_branch
    %243 = sbr.rel (0) target = $region21
  $region20: #{fourier_down_block.10} parent=0 // pred_region
    _
  $region21: #{fourier_down_block.10} parent=0 // pred_fallthru
    _
  // Predicated region
  $region22: #{fourier_down_block.10} parent=0 // pred_check
    _
  $region23: #{fourier_down_block.10} parent=0 // pred_check_branch
    %245 = sbr.rel (0) target = $region25
  $region24: #{fourier_down_block.10} parent=0 // pred_region
    _
  $region25: #{fourier_down_block.10} parent=0 // pred_fallthru
    _
  // Predicated region
  $region26: #{fourier_down_block.10} parent=0 // pred_check
    _
  $region27: #{fourier_down_block.10} parent=0 // pred_check_branch
    %247 = sbr.rel (0) target = $region29
  $region28: #{fourier_down_block.10} parent=0 // pred_region
    _
  $region29: #{fourier_down_block.10} parent=0 // pred_fallthru
    _
  // Predicated region
  $region30: #{fourier_down_block.10} parent=0 // pred_check
    _
  $region31: #{fourier_down_block.10} parent=0 // pred_check_branch
    %249 = sbr.rel (0) target = $region33
  $region32: #{fourier_down_block.10} parent=0 // pred_region
    _
  $region33: #{fourier_down_block.10} parent=0 // pred_fallthru
    _

</llo_original>
